<compile_context>
chip_gen: v7x
topology: tpu7x:2x2x1
jax: 0.10.0
libtpu: 0.0.40
codegen_flags: <defaults>
</compile_context>

<pallas_src>
import functools

import jax
import jax.numpy as jnp
from jax.experimental import pallas as pl
from jax.experimental.pallas import tpu as pltpu

F_IN = 80 * 60   # 4800 flattened features (C*H*W)
H_REAL = 100     # hidden units
O_REAL = 2       # real output features
OP = 128         # padded output lanes (lane-dense, unmasked stores)
BT_MAX = 128     # max batch tile; weights stay VMEM-resident across tiles


def _round_up(n, m):
    return ((n + m - 1) // m) * m


def osu_mlp_kernel(x_ref, w1_ref, b1_ref, w2_ref, b2_ref, o_ref):
    # x:(BT, F_IN) f32   w1:(F_IN, 100) bf16   b1:(1, 100) f32
    # w2:(100, OP) f32   b2:(1, OP) f32        o:(BT, OP) f32
    x_bf = x_ref[...].astype(jnp.bfloat16)                     # in-kernel cast (free vs DMA)
    h = jnp.dot(x_bf, w1_ref[...], preferred_element_type=jnp.float32)
    h = jnp.maximum(h + b1_ref[...], 0.0)                      # bias + ReLU in f32
    y = jnp.dot(h, w2_ref[...], preferred_element_type=jnp.float32)
    o_ref[...] = y + b2_ref[...]                               # dropout: identity (eval mode)


def prepare_params(w1, b1, w2, b2):
    """One-time param prep (NOT in the per-call path):
       w1 -> bf16 (4800,100) unpadded; b1 -> (1,100) f32;
       w2/b2 -> output dim zero-padded 2 -> 128 (mathematically inert)."""
    w1_bf = w1.astype(jnp.bfloat16)                               # (4800, 100)
    b1_2d = b1.reshape(1, H_REAL).astype(jnp.float32)             # (1, 100)
    w2_p = jnp.zeros((H_REAL, OP), jnp.float32).at[:, :O_REAL].set(w2)
    b2_p = jnp.zeros((1, OP), jnp.float32).at[0, :O_REAL].set(b2)
    return w1_bf, b1_2d, w2_p, b2_p


@functools.partial(jax.jit, static_argnames=("single_buffer_weights",))
def osu_model_forward(x, w1_bf, b1_2d, w2_p, b2_p, single_buffer_weights=True):
    """x: (B, C, H, W) with C*H*W == 4800. Returns (B, 2) float32."""
    B = x.shape[0]
    x_flat = x.reshape(B, -1).astype(jnp.float32)
    assert x_flat.shape[1] == F_IN, f"expected {F_IN} features, got {x_flat.shape[1]}"

    # Batch tiling: one grid step per BT-row tile; weights are fetched once and stay
    # resident in VMEM because their block index is constant across grid steps.
    BT = min(BT_MAX, _round_up(B, 8))
    BPAD = _round_up(B, BT)
    if BPAD != B:                                   # static under jit; no pad when divisible
        x_flat = jnp.pad(x_flat, ((0, BPAD - B), (0, 0)))
    grid = (BPAD // BT,)

    # Weights/biases never change block index -> single buffer is enough.
    wkw = dict(pipeline_mode=pl.Buffered(1)) if single_buffer_weights else {}

    grid_spec = pltpu.PrefetchScalarGridSpec(
        num_scalar_prefetch=0,
        grid=grid,
        in_specs=[
            pl.BlockSpec((BT, F_IN),     lambda i: (i, 0)),          # x tile (per grid step)
            pl.BlockSpec((F_IN, H_REAL), lambda i: (0, 0), **wkw),   # w1 (VMEM-resident)
            pl.BlockSpec((1, H_REAL),    lambda i: (0, 0), **wkw),   # b1 (VMEM-resident)
            pl.BlockSpec((H_REAL, OP),   lambda i: (0, 0), **wkw),   # w2 (VMEM-resident)
            pl.BlockSpec((1, OP),        lambda i: (0, 0), **wkw),   # b2 (VMEM-resident)
        ],
        out_specs=pl.BlockSpec((BT, OP), lambda i: (i, 0)),
    )

    out_p = pl.pallas_call(
        osu_mlp_kernel,
        out_shape=jax.ShapeDtypeStruct((BPAD, OP), jnp.float32),
        grid_spec=grid_spec,
        compiler_params=pltpu.CompilerParams(
            dimension_semantics=("parallel",)),   # batch tiles split across TCs on v7x
    )(x_flat, w1_bf, b1_2d, w2_p, b2_p)

    return out_p[:B, :O_REAL]


def init_params(key):
    """Deterministic init mimicking nn.Linear's uniform(-1/sqrt(fan_in), 1/sqrt(fan_in))."""
    k1, k2, k3, k4 = jax.random.split(key, 4)
    bound1 = 1.0 / jnp.sqrt(F_IN)
    w1 = jax.random.uniform(k1, (F_IN, H_REAL), jnp.float32, -bound1, bound1)
    b1 = jax.random.uniform(k2, (H_REAL,),      jnp.float32, -bound1, bound1)
    bound2 = 1.0 / jnp.sqrt(H_REAL)
    w2 = jax.random.uniform(k3, (H_REAL, O_REAL), jnp.float32, -bound2, bound2)
    b2 = jax.random.uniform(k4, (O_REAL,),        jnp.float32, -bound2, bound2)
    return w1, b1, w2, b2


def _reference(x, w1, b1, w2, b2, bf16_matched):
    """Pure-JAX reference.  bf16_matched=True mimics the kernel's bf16 quantization of x/w1."""
    x_flat = x.reshape(x.shape[0], -1).astype(jnp.float32)
    w1_f = w1
    if bf16_matched:
        x_flat = x_flat.astype(jnp.bfloat16).astype(jnp.float32)
        w1_f = w1.astype(jnp.bfloat16).astype(jnp.float32)
    h = jnp.maximum(jnp.dot(x_flat, w1_f, precision="highest") + b1, 0.0)
    return jnp.dot(h, w2, precision="highest") + b2


if __name__ == "__main__":
    key = jax.random.PRNGKey(0)
    k_x, k_x2, k_p = jax.random.split(key, 3)

    w1, b1, w2, b2 = init_params(k_p)
    params = prepare_params(w1, b1, w2, b2)          # one-time prep, outside the hot path

    def run(x):
        try:
            return jax.block_until_ready(
                osu_model_forward(x, *params, single_buffer_weights=True))
        except Exception:
            # Fallback for jax builds without pipeline_mode support on BlockSpec.
            return jax.block_until_ready(
                osu_model_forward(x, *params, single_buffer_weights=False))

    # 1) Small spec-consistent batch (B=2 -> one padded 8-row tile).
    x = jax.random.normal(k_x, (2, 1, 80, 60), jnp.float32)
    out = run(x)
    assert out.shape == (2, O_REAL), out.shape
    assert jnp.allclose(out, _reference(x, w1, b1, w2, b2, True),  atol=1e-3, rtol=1e-3), \
        "mismatch vs bf16-matched reference (B=2)"
    assert jnp.allclose(out, _reference(x, w1, b1, w2, b2, False), atol=3e-2, rtol=3e-2), \
        "mismatch vs f32 reference (B=2)"

    # 2) Stacked batch (B=160 -> 2 grid steps of 128, partial last tile): exercises the
    #    amortized multi-tile path where w1 stays VMEM-resident across grid steps.
    x_big = jax.random.normal(k_x2, (160, 1, 80, 60), jnp.float32)
    out_big = run(x_big)
    assert out_big.shape == (160, O_REAL), out_big.shape
    assert jnp.allclose(out_big, _reference(x_big, w1, b1, w2, b2, True),  atol=2e-3, rtol=2e-3), \
        "mismatch vs bf16-matched reference (B=160)"
    assert jnp.allclose(out_big, _reference(x_big, w1, b1, w2, b2, False), atol=3e-2, rtol=3e-2), \
        "mismatch vs f32 reference (B=160)"

    print("KERNEL_OK")
</pallas_src>

<mosaic_0001>
module attributes {stable_mosaic.version = 11 : i64} {
  func.func @osu_mlp_kernel(%arg0: i32, %arg1: memref<8x4800xf32, #tpu.memory_space<vmem>>, %arg2: memref<4800x100xbf16, #tpu.memory_space<vmem>>, %arg3: memref<1x100xf32, #tpu.memory_space<vmem>>, %arg4: memref<100x128xf32, #tpu.memory_space<vmem>>, %arg5: memref<1x128xf32, #tpu.memory_space<vmem>>, %arg6: memref<8x128xf32, #tpu.memory_space<vmem>>) attributes {dimension_semantics = [#tpu.dimension_semantics<parallel>], iteration_bounds = array<i64: 1>, scalar_prefetch = 0 : i64, scratch_operands = 0 : i64, tpu.core_type = #tpu.core_type<tc>, window_params = [{transform_indices = @transform_0, window_bounds = array<i64: 8, 4800>}, {pipeline_mode = #tpu.pipeline_mode<synchronous>, transform_indices = @transform_1, window_bounds = array<i64: 4800, 100>}, {pipeline_mode = #tpu.pipeline_mode<synchronous>, transform_indices = @transform_2, window_bounds = array<i64: 1, 100>}, {pipeline_mode = #tpu.pipeline_mode<synchronous>, transform_indices = @transform_3, window_bounds = array<i64: 100, 128>}, {pipeline_mode = #tpu.pipeline_mode<synchronous>, transform_indices = @transform_4, window_bounds = array<i64: 1, 128>}, {transform_indices = @transform_5, window_bounds = array<i64: 8, 128>}]} {
    %c0 = arith.constant 0 : index
    %c0_0 = arith.constant 0 : index
    %0 = vector.load %arg1[%c0, %c0_0] : memref<8x4800xf32, #tpu.memory_space<vmem>>, vector<8x4800xf32>
    %1 = arith.truncf %0 : vector<8x4800xf32> to vector<8x4800xbf16>
    %c0_1 = arith.constant 0 : index
    %c0_2 = arith.constant 0 : index
    %2 = vector.load %arg2[%c0_1, %c0_2] : memref<4800x100xbf16, #tpu.memory_space<vmem>>, vector<4800x100xbf16>
    %cst = arith.constant dense<0.000000e+00> : vector<8x100xf32>
    %3 = tpu.matmul %1, %2, %cst {dimension_numbers = #tpu.dot_dimension_numbers<[1], [0], [0], [1], [0, 0, 1, 1], [], []>} : vector<8x4800xbf16>, vector<4800x100xbf16>, vector<8x100xf32> -> vector<8x100xf32>
    %c0_3 = arith.constant 0 : index
    %c0_4 = arith.constant 0 : index
    %4 = vector.load %arg3[%c0_3, %c0_4] : memref<1x100xf32, #tpu.memory_space<vmem>>, vector<1x100xf32>
    %5 = vector.broadcast %4 : vector<1x100xf32> to vector<8x100xf32>
    %6 = arith.addf %3, %5 : vector<8x100xf32>
    %cst_5 = arith.constant 0.000000e+00 : f32
    %7 = vector.broadcast %cst_5 : f32 to vector<8x100xf32>
    %8 = arith.maximumf %6, %7 : vector<8x100xf32>
    %c0_6 = arith.constant 0 : index
    %c0_7 = arith.constant 0 : index
    %9 = vector.load %arg4[%c0_6, %c0_7] : memref<100x128xf32, #tpu.memory_space<vmem>>, vector<100x128xf32>
    %cst_8 = arith.constant dense<0.000000e+00> : vector<8x128xf32>
    %10 = tpu.matmul %8, %9, %cst_8 {dimension_numbers = #tpu.dot_dimension_numbers<[1], [0], [0], [1], [0, 0, 1, 1], [], []>} : vector<8x100xf32>, vector<100x128xf32>, vector<8x128xf32> -> vector<8x128xf32>
    %c0_9 = arith.constant 0 : index
    %c0_10 = arith.constant 0 : index
    %11 = vector.load %arg5[%c0_9, %c0_10] : memref<1x128xf32, #tpu.memory_space<vmem>>, vector<1x128xf32>
    %12 = vector.broadcast %11 : vector<1x128xf32> to vector<8x128xf32>
    %13 = arith.addf %10, %12 : vector<8x128xf32>
    %c0_11 = arith.constant 0 : index
    %c0_12 = arith.constant 0 : index
    %14 = vector.load %arg6[%c0_11, %c0_12] : memref<8x128xf32, #tpu.memory_space<vmem>>, vector<8x128xf32>
    tpu.vector_store %arg6[%c0_11, %c0_12], %13 {strides = array<i32>} : memref<8x128xf32, #tpu.memory_space<vmem>>, vector<8x128xf32>,
    return
  }
  func.func @transform_0(%arg0: i32) -> (i32, i32) {
    %c0_i32 = arith.constant 0 : i32
    %c0_i32_0 = arith.constant 0 : i32
    return %arg0, %c0_i32 : i32, i32
  }
  func.func @transform_1(%arg0: i32) -> (i32, i32) {
    %c0_i32 = arith.constant 0 : i32
    %c0_i32_0 = arith.constant 0 : i32
    %c0_i32_1 = arith.constant 0 : i32
    return %c0_i32, %c0_i32_0 : i32, i32
  }
  func.func @transform_2(%arg0: i32) -> (i32, i32) {
    %c0_i32 = arith.constant 0 : i32
    %c0_i32_0 = arith.constant 0 : i32
    %c0_i32_1 = arith.constant 0 : i32
    return %c0_i32, %c0_i32_0 : i32, i32
  }
  func.func @transform_3(%arg0: i32) -> (i32, i32) {
    %c0_i32 = arith.constant 0 : i32
    %c0_i32_0 = arith.constant 0 : i32
    %c0_i32_1 = arith.constant 0 : i32
    return %c0_i32, %c0_i32_0 : i32, i32
  }
  func.func @transform_4(%arg0: i32) -> (i32, i32) {
    %c0_i32 = arith.constant 0 : i32
    %c0_i32_0 = arith.constant 0 : i32
    %c0_i32_1 = arith.constant 0 : i32
    return %c0_i32, %c0_i32_0 : i32, i32
  }
  func.func @transform_5(%arg0: i32) -> (i32, i32) {
    %c0_i32 = arith.constant 0 : i32
    %c0_i32_0 = arith.constant 0 : i32
    return %arg0, %c0_i32 : i32, i32
  }
}

module attributes {stable_mosaic.version = 11 : i64} {
  func.func @osu_mlp_kernel(%arg0: i32, %arg1: memref<8x4800xf32, #tpu.memory_space<vmem>>, %arg2: memref<4800x100xbf16, #tpu.memory_space<vmem>>, %arg3: memref<1x100xf32, #tpu.memory_space<vmem>>, %arg4: memref<100x128xf32, #tpu.memory_space<vmem>>, %arg5: memref<1x128xf32, #tpu.memory_space<vmem>>, %arg6: memref<8x128xf32, #tpu.memory_space<vmem>>) attributes {dimension_semantics = [#tpu.dimension_semantics<parallel>], iteration_bounds = array<i64: 1>, scalar_prefetch = 0 : i64, scratch_operands = 0 : i64, tpu.core_type = #tpu.core_type<tc>, window_params = [{transform_indices = @transform_0, window_bounds = array<i64: 8, 4800>}, {pipeline_mode = #tpu.pipeline_mode<synchronous>, transform_indices = @transform_1, window_bounds = array<i64: 4800, 100>}, {pipeline_mode = #tpu.pipeline_mode<synchronous>, transform_indices = @transform_2, window_bounds = array<i64: 1, 100>}, {pipeline_mode = #tpu.pipeline_mode<synchronous>, transform_indices = @transform_3, window_bounds = array<i64: 100, 128>}, {pipeline_mode = #tpu.pipeline_mode<synchronous>, transform_indices = @transform_4, window_bounds = array<i64: 1, 128>}, {transform_indices = @transform_5, window_bounds = array<i64: 8, 128>}]} {
    %c0 = arith.constant 0 : index
    %c0_0 = arith.constant 0 : index
    %0 = vector.load %arg1[%c0, %c0_0] : memref<8x4800xf32, #tpu.memory_space<vmem>>, vector<8x4800xf32>
    %1 = arith.truncf %0 : vector<8x4800xf32> to vector<8x4800xbf16>
    %c0_1 = arith.constant 0 : index
    %c0_2 = arith.constant 0 : index
    %2 = vector.load %arg2[%c0_1, %c0_2] : memref<4800x100xbf16, #tpu.memory_space<vmem>>, vector<4800x100xbf16>
    %cst = arith.constant dense<0.000000e+00> : vector<8x100xf32>
    %3 = tpu.matmul %1, %2, %cst {dimension_numbers = #tpu.dot_dimension_numbers<[1], [0], [0], [1], [0, 0, 1, 1], [], []>} : vector<8x4800xbf16>, vector<4800x100xbf16>, vector<8x100xf32> -> vector<8x100xf32>
    %c0_3 = arith.constant 0 : index
    %c0_4 = arith.constant 0 : index
    %4 = vector.load %arg3[%c0_3, %c0_4] : memref<1x100xf32, #tpu.memory_space<vmem>>, vector<1x100xf32>
    %5 = vector.broadcast %4 : vector<1x100xf32> to vector<8x100xf32>
    %6 = arith.addf %3, %5 : vector<8x100xf32>
    %cst_5 = arith.constant 0.000000e+00 : f32
    %7 = vector.broadcast %cst_5 : f32 to vector<8x100xf32>
    %8 = arith.maximumf %6, %7 : vector<8x100xf32>
    %c0_6 = arith.constant 0 : index
    %c0_7 = arith.constant 0 : index
    %9 = vector.load %arg4[%c0_6, %c0_7] : memref<100x128xf32, #tpu.memory_space<vmem>>, vector<100x128xf32>
    %cst_8 = arith.constant dense<0.000000e+00> : vector<8x128xf32>
    %10 = tpu.matmul %8, %9, %cst_8 {dimension_numbers = #tpu.dot_dimension_numbers<[1], [0], [0], [1], [0, 0, 1, 1], [], []>} : vector<8x100xf32>, vector<100x128xf32>, vector<8x128xf32> -> vector<8x128xf32>
    %c0_9 = arith.constant 0 : index
    %c0_10 = arith.constant 0 : index
    %11 = vector.load %arg5[%c0_9, %c0_10] : memref<1x128xf32, #tpu.memory_space<vmem>>, vector<1x128xf32>
    %12 = vector.broadcast %11 : vector<1x128xf32> to vector<8x128xf32>
    %13 = arith.addf %10, %12 : vector<8x128xf32>
    %c0_11 = arith.constant 0 : index
    %c0_12 = arith.constant 0 : index
    %14 = vector.load %arg6[%c0_11, %c0_12] : memref<8x128xf32, #tpu.memory_space<vmem>>, vector<8x128xf32>
    tpu.vector_store %arg6[%c0_11, %c0_12], %13 {strides = array<i32>} : memref<8x128xf32, #tpu.memory_space<vmem>>, vector<8x128xf32>,
    return
  }
  func.func @transform_0(%arg0: i32) -> (i32, i32) {
    %c0_i32 = arith.constant 0 : i32
    %c0_i32_0 = arith.constant 0 : i32
    return %arg0, %c0_i32 : i32, i32
  }
  func.func @transform_1(%arg0: i32) -> (i32, i32) {
    %c0_i32 = arith.constant 0 : i32
    %c0_i32_0 = arith.constant 0 : i32
    %c0_i32_1 = arith.constant 0 : i32
    return %c0_i32, %c0_i32_0 : i32, i32
  }
  func.func @transform_2(%arg0: i32) -> (i32, i32) {
    %c0_i32 = arith.constant 0 : i32
    %c0_i32_0 = arith.constant 0 : i32
    %c0_i32_1 = arith.constant 0 : i32
    return %c0_i32, %c0_i32_0 : i32, i32
  }
  func.func @transform_3(%arg0: i32) -> (i32, i32) {
    %c0_i32 = arith.constant 0 : i32
    %c0_i32_0 = arith.constant 0 : i32
    %c0_i32_1 = arith.constant 0 : i32
    return %c0_i32, %c0_i32_0 : i32, i32
  }
  func.func @transform_4(%arg0: i32) -> (i32, i32) {
    %c0_i32 = arith.constant 0 : i32
    %c0_i32_0 = arith.constant 0 : i32
    %c0_i32_1 = arith.constant 0 : i32
    return %c0_i32, %c0_i32_0 : i32, i32
  }
  func.func @transform_5(%arg0: i32) -> (i32, i32) {
    %c0_i32 = arith.constant 0 : i32
    %c0_i32_0 = arith.constant 0 : i32
    return %arg0, %c0_i32 : i32, i32
  }
}

</mosaic_0001>

<llo_original>
// kernel: osu_model_forward.1
$region0: #{osu_model_forward.1}
  #allocation0 [shape = 'u32[]', space=smem, size = 0x4, offset = 0x4, fixed_abs, tag = 'smem constant byte address 0x4 - core index']
  #allocation1 [shape = 'u32[144,128]{1,0:T(1,128)}', space=vmem, size = 0x12000, scoped, tag = 'internal scratch']
  %s0 = inlined_call_operand.vmem [shape: f32[8,4800], index: 0, kind: input, shape index: {}]
  %s1 = inlined_call_operand.vmem [shape: bf16[4800,100], index: 1, kind: input, shape index: {}]
  %s2 = inlined_call_operand.vmem [shape: f32[1,100], index: 2, kind: input, shape index: {}]
  %s3 = inlined_call_operand.vmem [shape: f32[100,128], index: 3, kind: input, shape index: {}]
  %s4 = inlined_call_operand.vmem [shape: f32[1,128], index: 4, kind: input, shape index: {}]
  %s5 = inlined_call_operand.vmem [shape: f32[8,128], index: 5, kind: output, shape index: {}]
  %s6 = sld [smem:[#allocation0]]
  $region30: #{osu_model_forward.1} parent=0
    _
  %s8 = ssub.s32 1, %s6
  %s9 = scalar_select 0, %s8, %s6
  // Predicated region
  $region2: #{osu_model_forward.1} parent=0 // pred_check
    _
  $region3: #{osu_model_forward.1} parent=0 // pred_check_branch
    %11 = sbr.rel (0) target = $region5
  $region4: #{osu_model_forward.1} parent=0 // pred_region
    _
  $region5: #{osu_model_forward.1} parent=0 // pred_fallthru
    _
  // Predicated region
  $region6: #{osu_model_forward.1} parent=0 // pred_check
    _
  $region7: #{osu_model_forward.1} parent=0 // pred_check_branch
    %13 = sbr.rel (0) target = $region9
  $region8: #{osu_model_forward.1} parent=0 // pred_region
    _
  $region9: #{osu_model_forward.1} parent=0 // pred_fallthru
    _
  // Predicated region
  $region10: #{osu_model_forward.1} parent=0 // pred_check
    _
  $region11: #{osu_model_forward.1} parent=0 // pred_check_branch
    %15 = sbr.rel (0) target = $region13
  $region12: #{osu_model_forward.1} parent=0 // pred_region
    _
  $region13: #{osu_model_forward.1} parent=0 // pred_fallthru
    _
  // Predicated region
  $region14: #{osu_model_forward.1} parent=0 // pred_check
    _
  $region15: #{osu_model_forward.1} parent=0 // pred_check_branch
    %17 = sbr.rel (0) target = $region17
  $region16: #{osu_model_forward.1} parent=0 // pred_region
    _
  $region17: #{osu_model_forward.1} parent=0 // pred_fallthru
    _
  // Predicated region
  $region18: #{osu_model_forward.1} parent=0 // pred_check
    _
  $region19: #{osu_model_forward.1} parent=0 // pred_check_branch
    %19 = sbr.rel (0) target = $region21
  $region20: #{osu_model_forward.1} parent=0 // pred_region
    _
  $region21: #{osu_model_forward.1} parent=0 // pred_fallthru
    _
  %v21 = vld [vmem:[%s0] sm:$0xff]
  %v22 = vld [vmem:[%s0 + $0x8] sm:$0xff]
  %v23 = vld [vmem:[%s0 + $0x10] sm:$0xff]
  %v24 = vld [vmem:[%s0 + $0x18] sm:$0xff]
  %v25 = vld [vmem:[%s0 + $0x20] sm:$0xff]
  %v26 = vld [vmem:[%s0 + $0x28] sm:$0xff]
  %v27 = vld [vmem:[%s0 + $0x30] sm:$0xff]
  %v28 = vld [vmem:[%s0 + $0x38] sm:$0xff]
  %v29 = vld [vmem:[%s0 + $0x40] sm:$0xff]
  %v30 = vld [vmem:[%s0 + $0x48] sm:$0xff]
  %v31 = vld [vmem:[%s0 + $0x50] sm:$0xff]
  %v32 = vld [vmem:[%s0 + $0x58] sm:$0xff]
  %v33 = vld [vmem:[%s0 + $0x60] sm:$0xff]
  %v34 = vld [vmem:[%s0 + $0x68] sm:$0xff]
  %v35 = vld [vmem:[%s0 + $0x70] sm:$0xff]
  %v36 = vld [vmem:[%s0 + $0x78] sm:$0xff]
  %v37 = vld [vmem:[%s0 + $0x80] sm:$0xff]
  %v38 = vld [vmem:[%s0 + $0x88] sm:$0xff]
  %v39 = vld [vmem:[%s0 + $0x90] sm:$0xff]
  %v40 = vld [vmem:[%s0 + $0x98] sm:$0xff]
  %v41 = vld [vmem:[%s0 + $0xa0] sm:$0xff]
  %v42 = vld [vmem:[%s0 + $0xa8] sm:$0xff]
  %v43 = vld [vmem:[%s0 + $0xb0] sm:$0xff]
  %v44 = vld [vmem:[%s0 + $0xb8] sm:$0xff]
  %v45 = vld [vmem:[%s0 + $0xc0] sm:$0xff]
  %v46 = vld [vmem:[%s0 + $0xc8] sm:$0xff]
  %v47 = vld [vmem:[%s0 + $0xd0] sm:$0xff]
  %v48 = vld [vmem:[%s0 + $0xd8] sm:$0xff]
  %v49 = vld [vmem:[%s0 + $0xe0] sm:$0xff]
  %v50 = vld [vmem:[%s0 + $0xe8] sm:$0xff]
  %v51 = vld [vmem:[%s0 + $0xf0] sm:$0xff]
  %v52 = vld [vmem:[%s0 + $0xf8] sm:$0xff]
  %v53 = vld [vmem:[%s0 + $0x100] sm:$0xff]
  %v54 = vld [vmem:[%s0 + $0x108] sm:$0xff]
  %v55 = vld [vmem:[%s0 + $0x110] sm:$0xff]
  %v56 = vld [vmem:[%s0 + $0x118] sm:$0xff]
  %v57 = vld [vmem:[%s0 + $0x120] sm:$0xff]
  %v58 = vld [vmem:[%s0 + $0x128] sm:$0xff]
  %v59 = vpack.c.bf16 %v21, %v21
  %v60 = vpack.c.bf16 %v22, %v22
  %v61 = vpack.c.bf16 %v23, %v23
  %v62 = vpack.c.bf16 %v24, %v24
  %v63 = vpack.c.bf16 %v25, %v25
  %v64 = vpack.c.bf16 %v26, %v26
  %v65 = vpack.c.bf16 %v27, %v27
  %v66 = vpack.c.bf16 %v28, %v28
  %v67 = vpack.c.bf16 %v29, %v29
  %v68 = vpack.c.bf16 %v30, %v30
  %v69 = vpack.c.bf16 %v31, %v31
  %v70 = vpack.c.bf16 %v32, %v32
  %v71 = vpack.c.bf16 %v33, %v33
  %v72 = vpack.c.bf16 %v34, %v34
  %v73 = vpack.c.bf16 %v35, %v35
  %v74 = vpack.c.bf16 %v36, %v36
  %v75 = vpack.c.bf16 %v37, %v37
  %v76 = vpack.c.bf16 %v38, %v38
  %v77 = vpack.c.bf16 %v39, %v39
  %v78 = vpack.c.bf16 %v40, %v40
  %v79 = vpack.c.bf16 %v41, %v41
  %v80 = vpack.c.bf16 %v42, %v42
  %v81 = vpack.c.bf16 %v43, %v43
  %v82 = vpack.c.bf16 %v44, %v44
  %v83 = vpack.c.bf16 %v45, %v45
  %v84 = vpack.c.bf16 %v46, %v46
  %v85 = vpack.c.bf16 %v47, %v47
  %v86 = vpack.c.bf16 %v48, %v48
  %v87 = vpack.c.bf16 %v49, %v49
  %v88 = vpack.c.bf16 %v50, %v50
  %v89 = vpack.c.bf16 %v51, %v51
  %v90 = vpack.c.bf16 %v52, %v52
  %v91 = vpack.c.bf16 %v53, %v53
  %v92 = vpack.c.bf16 %v54, %v54
  %v93 = vpack.c.bf16 %v55, %v55
  %v94 = vpack.c.bf16 %v56, %v56
  %v95 = vpack.c.bf16 %v57, %v57
  %v96 = vpack.c.bf16 %v58, %v58
  %v97 = vld [vmem:[%s1] sm:$0xf]
  %v98 = vld [vmem:[%s1 + $0x4] sm:$0xf]
  %v99 = vld [vmem:[%s1 + $0x8] sm:$0xf]
  %v100 = vld [vmem:[%s1 + $0xc] sm:$0xf]
  %v101 = vld [vmem:[%s1 + $0x10] sm:$0xf]
  %v102 = vld [vmem:[%s1 + $0x14] sm:$0xf]
  %v103 = vld [vmem:[%s1 + $0x18] sm:$0xf]
  %v104 = vld [vmem:[%s1 + $0x1c] sm:$0xf]
  %v105 = vld [vmem:[%s1 + $0x20] sm:$0xf]
  %v106 = vld [vmem:[%s1 + $0x24] sm:$0xf]
  %v107 = vld [vmem:[%s1 + $0x28] sm:$0xf]
  %v108 = vld [vmem:[%s1 + $0x2c] sm:$0xf]
  %v109 = vld [vmem:[%s1 + $0x30] sm:$0xf]
  %v110 = vld [vmem:[%s1 + $0x34] sm:$0xf]
  %v111 = vld [vmem:[%s1 + $0x38] sm:$0xf]
  %v112 = vld [vmem:[%s1 + $0x3c] sm:$0xf]
  %v113 = vld [vmem:[%s1 + $0x40] sm:$0xf]
  %v114 = vld [vmem:[%s1 + $0x44] sm:$0xf]
  %v115 = vld [vmem:[%s1 + $0x48] sm:$0xf]
  %v116 = vld [vmem:[%s1 + $0x4c] sm:$0xf]
  %v117 = vld [vmem:[%s1 + $0x50] sm:$0xf]
  %v118 = vld [vmem:[%s1 + $0x54] sm:$0xf]
  %v119 = vld [vmem:[%s1 + $0x58] sm:$0xf]
  %v120 = vld [vmem:[%s1 + $0x5c] sm:$0xf]
  %v121 = vld [vmem:[%s1 + $0x60] sm:$0xf]
  %v122 = vld [vmem:[%s1 + $0x64] sm:$0xf]
  %v123 = vld [vmem:[%s1 + $0x68] sm:$0xf]
  %v124 = vld [vmem:[%s1 + $0x6c] sm:$0xf]
  %v125 = vld [vmem:[%s1 + $0x70] sm:$0xf]
  %v126 = vld [vmem:[%s1 + $0x74] sm:$0xf]
  %v127 = vld [vmem:[%s1 + $0x78] sm:$0xf]
  %v128 = vld [vmem:[%s1 + $0x7c] sm:$0xf]
  %v129 = vld [vmem:[%s1 + $0x80] sm:$0xf]
  %v130 = vld [vmem:[%s1 + $0x84] sm:$0xf]
  %v131 = vld [vmem:[%s1 + $0x88] sm:$0xf]
  %v132 = vld [vmem:[%s1 + $0x8c] sm:$0xf]
  %v133 = vld [vmem:[%s1 + $0x90] sm:$0xf]
  %v134 = vld [vmem:[%s1 + $0x94] sm:$0xf]
  %v135 = vld [vmem:[%s1 + $0x98] sm:$0xf]
  %v136 = vld [vmem:[%s1 + $0x9c] sm:$0xf]
  %v137 = vld [vmem:[%s1 + $0xa0] sm:$0xf]
  %v138 = vld [vmem:[%s1 + $0xa4] sm:$0xf]
  %v139 = vld [vmem:[%s1 + $0xa8] sm:$0xf]
  %v140 = vld [vmem:[%s1 + $0xac] sm:$0xf]
  %v141 = vld [vmem:[%s1 + $0xb0] sm:$0xf]
  %v142 = vld [vmem:[%s1 + $0xb4] sm:$0xf]
  %v143 = vld [vmem:[%s1 + $0xb8] sm:$0xf]
  %v144 = vld [vmem:[%s1 + $0xbc] sm:$0xf]
  %v145 = vld [vmem:[%s1 + $0xc0] sm:$0xf]
  %v146 = vld [vmem:[%s1 + $0xc4] sm:$0xf]
  %v147 = vld [vmem:[%s1 + $0xc8] sm:$0xf]
  %v148 = vld [vmem:[%s1 + $0xcc] sm:$0xf]
  %v149 = vld [vmem:[%s1 + $0xd0] sm:$0xf]
  %v150 = vld [vmem:[%s1 + $0xd4] sm:$0xf]
  %v151 = vld [vmem:[%s1 + $0xd8] sm:$0xf]
  %v152 = vld [vmem:[%s1 + $0xdc] sm:$0xf]
  %v153 = vld [vmem:[%s1 + $0xe0] sm:$0xf]
  %v154 = vld [vmem:[%s1 + $0xe4] sm:$0xf]
  %v155 = vld [vmem:[%s1 + $0xe8] sm:$0xf]
  %v156 = vld [vmem:[%s1 + $0xec] sm:$0xf]
  %v157 = vld [vmem:[%s1 + $0xf0] sm:$0xf]
  %v158 = vld [vmem:[%s1 + $0xf4] sm:$0xf]
  %v159 = vld [vmem:[%s1 + $0xf8] sm:$0xf]
  %v160 = vld [vmem:[%s1 + $0xfc] sm:$0xf]
  %v161 = vld [vmem:[%s1 + $0x100] sm:$0xf]
  %v162 = vld [vmem:[%s1 + $0x104] sm:$0xf]
  %v163 = vld [vmem:[%s1 + $0x108] sm:$0xf]
  %v164 = vld [vmem:[%s1 + $0x10c] sm:$0xf]
  %v165 = vld [vmem:[%s1 + $0x110] sm:$0xf]
  %v166 = vld [vmem:[%s1 + $0x114] sm:$0xf]
  %v167 = vld [vmem:[%s1 + $0x118] sm:$0xf]
  %v168 = vld [vmem:[%s1 + $0x11c] sm:$0xf]
  %v169 = vld [vmem:[%s1 + $0x120] sm:$0xf]
  %v170 = vld [vmem:[%s1 + $0x124] sm:$0xf]
  %v171 = vld [vmem:[%s1 + $0x128] sm:$0xf]
  %v172 = vld [vmem:[%s1 + $0x12c] sm:$0xf]
  %v173 = vld [vmem:[%s1 + $0x130] sm:$0xf]
  %v174 = vld [vmem:[%s1 + $0x134] sm:$0xf]
  %v175 = vld [vmem:[%s1 + $0x138] sm:$0xf]
  %v176 = vld [vmem:[%s1 + $0x13c] sm:$0xf]
  %v177 = vld [vmem:[%s1 + $0x140] sm:$0xf]
  %v178 = vld [vmem:[%s1 + $0x144] sm:$0xf]
  %v179 = vld [vmem:[%s1 + $0x148] sm:$0xf]
  %v180 = vld [vmem:[%s1 + $0x14c] sm:$0xf]
  %v181 = vld [vmem:[%s1 + $0x150] sm:$0xf]
  %v182 = vld [vmem:[%s1 + $0x154] sm:$0xf]
  %v183 = vld [vmem:[%s1 + $0x158] sm:$0xf]
  %v184 = vld [vmem:[%s1 + $0x15c] sm:$0xf]
  %v185 = vld [vmem:[%s1 + $0x160] sm:$0xf]
  %v186 = vld [vmem:[%s1 + $0x164] sm:$0xf]
  %v187 = vld [vmem:[%s1 + $0x168] sm:$0xf]
  %v188 = vld [vmem:[%s1 + $0x16c] sm:$0xf]
  %v189 = vld [vmem:[%s1 + $0x170] sm:$0xf]
  %v190 = vld [vmem:[%s1 + $0x174] sm:$0xf]
  %v191 = vld [vmem:[%s1 + $0x178] sm:$0xf]
  %v192 = vld [vmem:[%s1 + $0x17c] sm:$0xf]
  %v193 = vld [vmem:[%s1 + $0x180] sm:$0xf]
  %v194 = vld [vmem:[%s1 + $0x184] sm:$0xf]
  %v195 = vld [vmem:[%s1 + $0x188] sm:$0xf]
  %v196 = vld [vmem:[%s1 + $0x18c] sm:$0xf]
  %v197 = vld [vmem:[%s1 + $0x190] sm:$0xf]
  %v198 = vld [vmem:[%s1 + $0x194] sm:$0xf]
  %v199 = vld [vmem:[%s1 + $0x198] sm:$0xf]
  %v200 = vld [vmem:[%s1 + $0x19c] sm:$0xf]
  %v201 = vld [vmem:[%s1 + $0x1a0] sm:$0xf]
  %v202 = vld [vmem:[%s1 + $0x1a4] sm:$0xf]
  %v203 = vld [vmem:[%s1 + $0x1a8] sm:$0xf]
  %v204 = vld [vmem:[%s1 + $0x1ac] sm:$0xf]
  %v205 = vld [vmem:[%s1 + $0x1b0] sm:$0xf]
  %v206 = vld [vmem:[%s1 + $0x1b4] sm:$0xf]
  %v207 = vld [vmem:[%s1 + $0x1b8] sm:$0xf]
  %v208 = vld [vmem:[%s1 + $0x1bc] sm:$0xf]
  %v209 = vld [vmem:[%s1 + $0x1c0] sm:$0xf]
  %v210 = vld [vmem:[%s1 + $0x1c4] sm:$0xf]
  %v211 = vld [vmem:[%s1 + $0x1c8] sm:$0xf]
  %v212 = vld [vmem:[%s1 + $0x1cc] sm:$0xf]
  %v213 = vld [vmem:[%s1 + $0x1d0] sm:$0xf]
  %v214 = vld [vmem:[%s1 + $0x1d4] sm:$0xf]
  %v215 = vld [vmem:[%s1 + $0x1d8] sm:$0xf]
  %v216 = vld [vmem:[%s1 + $0x1dc] sm:$0xf]
  %v217 = vld [vmem:[%s1 + $0x1e0] sm:$0xf]
  %v218 = vld [vmem:[%s1 + $0x1e4] sm:$0xf]
  %v219 = vld [vmem:[%s1 + $0x1e8] sm:$0xf]
  %v220 = vld [vmem:[%s1 + $0x1ec] sm:$0xf]
  %v221 = vld [vmem:[%s1 + $0x1f0] sm:$0xf]
  %v222 = vld [vmem:[%s1 + $0x1f4] sm:$0xf]
  %v223 = vld [vmem:[%s1 + $0x1f8] sm:$0xf]
  %v224 = vld [vmem:[%s1 + $0x1fc] sm:$0xf]
  %v225 = vld [vmem:[%s1 + $0x200] sm:$0xf]
  %v226 = vld [vmem:[%s1 + $0x204] sm:$0xf]
  %v227 = vld [vmem:[%s1 + $0x208] sm:$0xf]
  %v228 = vld [vmem:[%s1 + $0x20c] sm:$0xf]
  %v229 = vld [vmem:[%s1 + $0x210] sm:$0xf]
  %v230 = vld [vmem:[%s1 + $0x214] sm:$0xf]
  %v231 = vld [vmem:[%s1 + $0x218] sm:$0xf]
  %v232 = vld [vmem:[%s1 + $0x21c] sm:$0xf]
  %v233 = vld [vmem:[%s1 + $0x220] sm:$0xf]
  %v234 = vld [vmem:[%s1 + $0x224] sm:$0xf]
  %v235 = vld [vmem:[%s1 + $0x228] sm:$0xf]
  %v236 = vld [vmem:[%s1 + $0x22c] sm:$0xf]
  %v237 = vld [vmem:[%s1 + $0x230] sm:$0xf]
  %v238 = vld [vmem:[%s1 + $0x234] sm:$0xf]
  %v239 = vld [vmem:[%s1 + $0x238] sm:$0xf]
  %v240 = vld [vmem:[%s1 + $0x23c] sm:$0xf]
  %v241 = vld [vmem:[%s1 + $0x240] sm:$0xf]
  %v242 = vld [vmem:[%s1 + $0x244] sm:$0xf]
  %v243 = vld [vmem:[%s1 + $0x248] sm:$0xf]
  %v244 = vld [vmem:[%s1 + $0x24c] sm:$0xf]
  %v245 = vld [vmem:[%s1 + $0x250] sm:$0xf]
  %v246 = vld [vmem:[%s1 + $0x254] sm:$0xf]
  %v247 = vld [vmem:[%s1 + $0x258] sm:$0xf]
  %v248 = vld [vmem:[%s1 + $0x25c] sm:$0xf]
  %v249 = vld [vmem:[%s1 + $0x260] sm:$0xf]
  %v250 = vld [vmem:[%s1 + $0x264] sm:$0xf]
  %v251 = vld [vmem:[%s1 + $0x268] sm:$0xf]
  %v252 = vld [vmem:[%s1 + $0x26c] sm:$0xf]
  %v253 = vld [vmem:[%s1 + $0x270] sm:$0xf]
  %v254 = vld [vmem:[%s1 + $0x274] sm:$0xf]
  %v255 = vld [vmem:[%s1 + $0x278] sm:$0xf]
  %v256 = vld [vmem:[%s1 + $0x27c] sm:$0xf]
  %v257 = vld [vmem:[%s1 + $0x280] sm:$0xf]
  %v258 = vld [vmem:[%s1 + $0x284] sm:$0xf]
  %v259 = vld [vmem:[%s1 + $0x288] sm:$0xf]
  %v260 = vld [vmem:[%s1 + $0x28c] sm:$0xf]
  %v261 = vld [vmem:[%s1 + $0x290] sm:$0xf]
  %v262 = vld [vmem:[%s1 + $0x294] sm:$0xf]
  %v263 = vld [vmem:[%s1 + $0x298] sm:$0xf]
  %v264 = vld [vmem:[%s1 + $0x29c] sm:$0xf]
  %v265 = vld [vmem:[%s1 + $0x2a0] sm:$0xf]
  %v266 = vld [vmem:[%s1 + $0x2a4] sm:$0xf]
  %v267 = vld [vmem:[%s1 + $0x2a8] sm:$0xf]
  %v268 = vld [vmem:[%s1 + $0x2ac] sm:$0xf]
  %v269 = vld [vmem:[%s1 + $0x2b0] sm:$0xf]
  %v270 = vld [vmem:[%s1 + $0x2b4] sm:$0xf]
  %v271 = vld [vmem:[%s1 + $0x2b8] sm:$0xf]
  %v272 = vld [vmem:[%s1 + $0x2bc] sm:$0xf]
  %v273 = vld [vmem:[%s1 + $0x2c0] sm:$0xf]
  %v274 = vld [vmem:[%s1 + $0x2c4] sm:$0xf]
  %v275 = vld [vmem:[%s1 + $0x2c8] sm:$0xf]
  %v276 = vld [vmem:[%s1 + $0x2cc] sm:$0xf]
  %v277 = vld [vmem:[%s1 + $0x2d0] sm:$0xf]
  %v278 = vld [vmem:[%s1 + $0x2d4] sm:$0xf]
  %v279 = vld [vmem:[%s1 + $0x2d8] sm:$0xf]
  %v280 = vld [vmem:[%s1 + $0x2dc] sm:$0xf]
  %v281 = vld [vmem:[%s1 + $0x2e0] sm:$0xf]
  %v282 = vld [vmem:[%s1 + $0x2e4] sm:$0xf]
  %v283 = vld [vmem:[%s1 + $0x2e8] sm:$0xf]
  %v284 = vld [vmem:[%s1 + $0x2ec] sm:$0xf]
  %v285 = vld [vmem:[%s1 + $0x2f0] sm:$0xf]
  %v286 = vld [vmem:[%s1 + $0x2f4] sm:$0xf]
  %v287 = vld [vmem:[%s1 + $0x2f8] sm:$0xf]
  %v288 = vld [vmem:[%s1 + $0x2fc] sm:$0xf]
  %v289 = vld [vmem:[%s1 + $0x300] sm:$0xf]
  %v290 = vld [vmem:[%s1 + $0x304] sm:$0xf]
  %v291 = vld [vmem:[%s1 + $0x308] sm:$0xf]
  %v292 = vld [vmem:[%s1 + $0x30c] sm:$0xf]
  %v293 = vld [vmem:[%s1 + $0x310] sm:$0xf]
  %v294 = vld [vmem:[%s1 + $0x314] sm:$0xf]
  %v295 = vld [vmem:[%s1 + $0x318] sm:$0xf]
  %v296 = vld [vmem:[%s1 + $0x31c] sm:$0xf]
  %v297 = vld [vmem:[%s1 + $0x320] sm:$0xf]
  %v298 = vld [vmem:[%s1 + $0x324] sm:$0xf]
  %v299 = vld [vmem:[%s1 + $0x328] sm:$0xf]
  %v300 = vld [vmem:[%s1 + $0x32c] sm:$0xf]
  %v301 = vld [vmem:[%s1 + $0x330] sm:$0xf]
  %v302 = vld [vmem:[%s1 + $0x334] sm:$0xf]
  %v303 = vld [vmem:[%s1 + $0x338] sm:$0xf]
  %v304 = vld [vmem:[%s1 + $0x33c] sm:$0xf]
  %v305 = vld [vmem:[%s1 + $0x340] sm:$0xf]
  %v306 = vld [vmem:[%s1 + $0x344] sm:$0xf]
  %v307 = vld [vmem:[%s1 + $0x348] sm:$0xf]
  %v308 = vld [vmem:[%s1 + $0x34c] sm:$0xf]
  %v309 = vld [vmem:[%s1 + $0x350] sm:$0xf]
  %v310 = vld [vmem:[%s1 + $0x354] sm:$0xf]
  %v311 = vld [vmem:[%s1 + $0x358] sm:$0xf]
  %v312 = vld [vmem:[%s1 + $0x35c] sm:$0xf]
  %v313 = vld [vmem:[%s1 + $0x360] sm:$0xf]
  %v314 = vld [vmem:[%s1 + $0x364] sm:$0xf]
  %v315 = vld [vmem:[%s1 + $0x368] sm:$0xf]
  %v316 = vld [vmem:[%s1 + $0x36c] sm:$0xf]
  %v317 = vld [vmem:[%s1 + $0x370] sm:$0xf]
  %v318 = vld [vmem:[%s1 + $0x374] sm:$0xf]
  %v319 = vld [vmem:[%s1 + $0x378] sm:$0xf]
  %v320 = vld [vmem:[%s1 + $0x37c] sm:$0xf]
  %v321 = vld [vmem:[%s1 + $0x380] sm:$0xf]
  %v322 = vld [vmem:[%s1 + $0x384] sm:$0xf]
  %v323 = vld [vmem:[%s1 + $0x388] sm:$0xf]
  %v324 = vld [vmem:[%s1 + $0x38c] sm:$0xf]
  %v325 = vld [vmem:[%s1 + $0x390] sm:$0xf]
  %v326 = vld [vmem:[%s1 + $0x394] sm:$0xf]
  %v327 = vld [vmem:[%s1 + $0x398] sm:$0xf]
  %v328 = vld [vmem:[%s1 + $0x39c] sm:$0xf]
  %v329 = vld [vmem:[%s1 + $0x3a0] sm:$0xf]
  %v330 = vld [vmem:[%s1 + $0x3a4] sm:$0xf]
  %v331 = vld [vmem:[%s1 + $0x3a8] sm:$0xf]
  %v332 = vld [vmem:[%s1 + $0x3ac] sm:$0xf]
  %v333 = vld [vmem:[%s1 + $0x3b0] sm:$0xf]
  %v334 = vld [vmem:[%s1 + $0x3b4] sm:$0xf]
  %v335 = vld [vmem:[%s1 + $0x3b8] sm:$0xf]
  %v336 = vld [vmem:[%s1 + $0x3bc] sm:$0xf]
  %v337 = vld [vmem:[%s1 + $0x3c0] sm:$0xf]
  %v338 = vld [vmem:[%s1 + $0x3c4] sm:$0xf]
  %v339 = vld [vmem:[%s1 + $0x3c8] sm:$0xf]
  %v340 = vld [vmem:[%s1 + $0x3cc] sm:$0xf]
  %v341 = vld [vmem:[%s1 + $0x3d0] sm:$0xf]
  %v342 = vld [vmem:[%s1 + $0x3d4] sm:$0xf]
  %v343 = vld [vmem:[%s1 + $0x3d8] sm:$0xf]
  %v344 = vld [vmem:[%s1 + $0x3dc] sm:$0xf]
  %v345 = vld [vmem:[%s1 + $0x3e0] sm:$0xf]
  %v346 = vld [vmem:[%s1 + $0x3e4] sm:$0xf]
  %v347 = vld [vmem:[%s1 + $0x3e8] sm:$0xf]
  %v348 = vld [vmem:[%s1 + $0x3ec] sm:$0xf]
  %v349 = vld [vmem:[%s1 + $0x3f0] sm:$0xf]
  %v350 = vld [vmem:[%s1 + $0x3f4] sm:$0xf]
  %v351 = vld [vmem:[%s1 + $0x3f8] sm:$0xf]
  %v352 = vld [vmem:[%s1 + $0x3fc] sm:$0xf]
  %v353 = vld [vmem:[%s1 + $0x400] sm:$0xf]
  %v354 = vld [vmem:[%s1 + $0x404] sm:$0xf]
  %v355 = vld [vmem:[%s1 + $0x408] sm:$0xf]
  %v356 = vld [vmem:[%s1 + $0x40c] sm:$0xf]
  %v357 = vld [vmem:[%s1 + $0x410] sm:$0xf]
  %v358 = vld [vmem:[%s1 + $0x414] sm:$0xf]
  %v359 = vld [vmem:[%s1 + $0x418] sm:$0xf]
  %v360 = vld [vmem:[%s1 + $0x41c] sm:$0xf]
  %v361 = vld [vmem:[%s1 + $0x420] sm:$0xf]
  %v362 = vld [vmem:[%s1 + $0x424] sm:$0xf]
  %v363 = vld [vmem:[%s1 + $0x428] sm:$0xf]
  %v364 = vld [vmem:[%s1 + $0x42c] sm:$0xf]
  %v365 = vld [vmem:[%s1 + $0x430] sm:$0xf]
  %v366 = vld [vmem:[%s1 + $0x434] sm:$0xf]
  %v367 = vld [vmem:[%s1 + $0x438] sm:$0xf]
  %v368 = vld [vmem:[%s1 + $0x43c] sm:$0xf]
  %v369 = vld [vmem:[%s1 + $0x440] sm:$0xf]
  %v370 = vld [vmem:[%s1 + $0x444] sm:$0xf]
  %v371 = vld [vmem:[%s1 + $0x448] sm:$0xf]
  %v372 = vld [vmem:[%s1 + $0x44c] sm:$0xf]
  %v373 = vld [vmem:[%s1 + $0x450] sm:$0xf]
  %v374 = vld [vmem:[%s1 + $0x454] sm:$0xf]
  %v375 = vld [vmem:[%s1 + $0x458] sm:$0xf]
  %v376 = vld [vmem:[%s1 + $0x45c] sm:$0xf]
  %v377 = vld [vmem:[%s1 + $0x460] sm:$0xf]
  %v378 = vld [vmem:[%s1 + $0x464] sm:$0xf]
  %v379 = vld [vmem:[%s1 + $0x468] sm:$0xf]
  %v380 = vld [vmem:[%s1 + $0x46c] sm:$0xf]
  %v381 = vld [vmem:[%s1 + $0x470] sm:$0xf]
  %v382 = vld [vmem:[%s1 + $0x474] sm:$0xf]
  %v383 = vld [vmem:[%s1 + $0x478] sm:$0xf]
  %v384 = vld [vmem:[%s1 + $0x47c] sm:$0xf]
  %v385 = vld [vmem:[%s1 + $0x480] sm:$0xf]
  %v386 = vld [vmem:[%s1 + $0x484] sm:$0xf]
  %v387 = vld [vmem:[%s1 + $0x488] sm:$0xf]
  %v388 = vld [vmem:[%s1 + $0x48c] sm:$0xf]
  %v389 = vld [vmem:[%s1 + $0x490] sm:$0xf]
  %v390 = vld [vmem:[%s1 + $0x494] sm:$0xf]
  %v391 = vld [vmem:[%s1 + $0x498] sm:$0xf]
  %v392 = vld [vmem:[%s1 + $0x49c] sm:$0xf]
  %v393 = vld [vmem:[%s1 + $0x4a0] sm:$0xf]
  %v394 = vld [vmem:[%s1 + $0x4a4] sm:$0xf]
  %v395 = vld [vmem:[%s1 + $0x4a8] sm:$0xf]
  %v396 = vld [vmem:[%s1 + $0x4ac] sm:$0xf]
  %v397 = vld [vmem:[%s1 + $0x4b0] sm:$0xf]
  %v398 = vld [vmem:[%s1 + $0x4b4] sm:$0xf]
  %v399 = vld [vmem:[%s1 + $0x4b8] sm:$0xf]
  %v400 = vld [vmem:[%s1 + $0x4bc] sm:$0xf]
  %v401 = vld [vmem:[%s1 + $0x4c0] sm:$0xf]
  %v402 = vld [vmem:[%s1 + $0x4c4] sm:$0xf]
  %v403 = vld [vmem:[%s1 + $0x4c8] sm:$0xf]
  %v404 = vld [vmem:[%s1 + $0x4cc] sm:$0xf]
  %v405 = vld [vmem:[%s1 + $0x4d0] sm:$0xf]
  %v406 = vld [vmem:[%s1 + $0x4d4] sm:$0xf]
  %v407 = vld [vmem:[%s1 + $0x4d8] sm:$0xf]
  %v408 = vld [vmem:[%s1 + $0x4dc] sm:$0xf]
  %v409 = vld [vmem:[%s1 + $0x4e0] sm:$0xf]
  %v410 = vld [vmem:[%s1 + $0x4e4] sm:$0xf]
  %v411 = vld [vmem:[%s1 + $0x4e8] sm:$0xf]
  %v412 = vld [vmem:[%s1 + $0x4ec] sm:$0xf]
  %v413 = vld [vmem:[%s1 + $0x4f0] sm:$0xf]
  %v414 = vld [vmem:[%s1 + $0x4f4] sm:$0xf]
  %v415 = vld [vmem:[%s1 + $0x4f8] sm:$0xf]
  %v416 = vld [vmem:[%s1 + $0x4fc] sm:$0xf]
  %v417 = vld [vmem:[%s1 + $0x500] sm:$0xf]
  %v418 = vld [vmem:[%s1 + $0x504] sm:$0xf]
  %v419 = vld [vmem:[%s1 + $0x508] sm:$0xf]
  %v420 = vld [vmem:[%s1 + $0x50c] sm:$0xf]
  %v421 = vld [vmem:[%s1 + $0x510] sm:$0xf]
  %v422 = vld [vmem:[%s1 + $0x514] sm:$0xf]
  %v423 = vld [vmem:[%s1 + $0x518] sm:$0xf]
  %v424 = vld [vmem:[%s1 + $0x51c] sm:$0xf]
  %v425 = vld [vmem:[%s1 + $0x520] sm:$0xf]
  %v426 = vld [vmem:[%s1 + $0x524] sm:$0xf]
  %v427 = vld [vmem:[%s1 + $0x528] sm:$0xf]
  %v428 = vld [vmem:[%s1 + $0x52c] sm:$0xf]
  %v429 = vld [vmem:[%s1 + $0x530] sm:$0xf]
  %v430 = vld [vmem:[%s1 + $0x534] sm:$0xf]
  %v431 = vld [vmem:[%s1 + $0x538] sm:$0xf]
  %v432 = vld [vmem:[%s1 + $0x53c] sm:$0xf]
  %v433 = vld [vmem:[%s1 + $0x540] sm:$0xf]
  %v434 = vld [vmem:[%s1 + $0x544] sm:$0xf]
  %v435 = vld [vmem:[%s1 + $0x548] sm:$0xf]
  %v436 = vld [vmem:[%s1 + $0x54c] sm:$0xf]
  %v437 = vld [vmem:[%s1 + $0x550] sm:$0xf]
  %v438 = vld [vmem:[%s1 + $0x554] sm:$0xf]
  %v439 = vld [vmem:[%s1 + $0x558] sm:$0xf]
  %v440 = vld [vmem:[%s1 + $0x55c] sm:$0xf]
  %v441 = vld [vmem:[%s1 + $0x560] sm:$0xf]
  %v442 = vld [vmem:[%s1 + $0x564] sm:$0xf]
  %v443 = vld [vmem:[%s1 + $0x568] sm:$0xf]
  %v444 = vld [vmem:[%s1 + $0x56c] sm:$0xf]
  %v445 = vld [vmem:[%s1 + $0x570] sm:$0xf]
  %v446 = vld [vmem:[%s1 + $0x574] sm:$0xf]
  %v447 = vld [vmem:[%s1 + $0x578] sm:$0xf]
  %v448 = vld [vmem:[%s1 + $0x57c] sm:$0xf]
  %v449 = vld [vmem:[%s1 + $0x580] sm:$0xf]
  %v450 = vld [vmem:[%s1 + $0x584] sm:$0xf]
  %v451 = vld [vmem:[%s1 + $0x588] sm:$0xf]
  %v452 = vld [vmem:[%s1 + $0x58c] sm:$0xf]
  %v453 = vld [vmem:[%s1 + $0x590] sm:$0xf]
  %v454 = vld [vmem:[%s1 + $0x594] sm:$0xf]
  %v455 = vld [vmem:[%s1 + $0x598] sm:$0xf]
  %v456 = vld [vmem:[%s1 + $0x59c] sm:$0xf]
  %v457 = vld [vmem:[%s1 + $0x5a0] sm:$0xf]
  %v458 = vld [vmem:[%s1 + $0x5a4] sm:$0xf]
  %v459 = vld [vmem:[%s1 + $0x5a8] sm:$0xf]
  %v460 = vld [vmem:[%s1 + $0x5ac] sm:$0xf]
  %v461 = vld [vmem:[%s1 + $0x5b0] sm:$0xf]
  %v462 = vld [vmem:[%s1 + $0x5b4] sm:$0xf]
  %v463 = vld [vmem:[%s1 + $0x5b8] sm:$0xf]
  %v464 = vld [vmem:[%s1 + $0x5bc] sm:$0xf]
  %v465 = vld [vmem:[%s1 + $0x5c0] sm:$0xf]
  %v466 = vld [vmem:[%s1 + $0x5c4] sm:$0xf]
  %v467 = vld [vmem:[%s1 + $0x5c8] sm:$0xf]
  %v468 = vld [vmem:[%s1 + $0x5cc] sm:$0xf]
  %v469 = vld [vmem:[%s1 + $0x5d0] sm:$0xf]
  %v470 = vld [vmem:[%s1 + $0x5d4] sm:$0xf]
  %v471 = vld [vmem:[%s1 + $0x5d8] sm:$0xf]
  %v472 = vld [vmem:[%s1 + $0x5dc] sm:$0xf]
  %v473 = vld [vmem:[%s1 + $0x5e0] sm:$0xf]
  %v474 = vld [vmem:[%s1 + $0x5e4] sm:$0xf]
  %v475 = vld [vmem:[%s1 + $0x5e8] sm:$0xf]
  %v476 = vld [vmem:[%s1 + $0x5ec] sm:$0xf]
  %v477 = vld [vmem:[%s1 + $0x5f0] sm:$0xf]
  %v478 = vld [vmem:[%s1 + $0x5f4] sm:$0xf]
  %v479 = vld [vmem:[%s1 + $0x5f8] sm:$0xf]
  %v480 = vld [vmem:[%s1 + $0x5fc] sm:$0xf]
  %v481 = vld [vmem:[%s1 + $0x600] sm:$0xf]
  %v482 = vld [vmem:[%s1 + $0x604] sm:$0xf]
  %v483 = vld [vmem:[%s1 + $0x608] sm:$0xf]
  %v484 = vld [vmem:[%s1 + $0x60c] sm:$0xf]
  %v485 = vld [vmem:[%s1 + $0x610] sm:$0xf]
  %v486 = vld [vmem:[%s1 + $0x614] sm:$0xf]
  %v487 = vld [vmem:[%s1 + $0x618] sm:$0xf]
  %v488 = vld [vmem:[%s1 + $0x61c] sm:$0xf]
  %v489 = vld [vmem:[%s1 + $0x620] sm:$0xf]
  %v490 = vld [vmem:[%s1 + $0x624] sm:$0xf]
  %v491 = vld [vmem:[%s1 + $0x628] sm:$0xf]
  %v492 = vld [vmem:[%s1 + $0x62c] sm:$0xf]
  %v493 = vld [vmem:[%s1 + $0x630] sm:$0xf]
  %v494 = vld [vmem:[%s1 + $0x634] sm:$0xf]
  %v495 = vld [vmem:[%s1 + $0x638] sm:$0xf]
  %v496 = vld [vmem:[%s1 + $0x63c] sm:$0xf]
  %v497 = vld [vmem:[%s1 + $0x640] sm:$0xf]
  %v498 = vld [vmem:[%s1 + $0x644] sm:$0xf]
  %v499 = vld [vmem:[%s1 + $0x648] sm:$0xf]
  %v500 = vld [vmem:[%s1 + $0x64c] sm:$0xf]
  %v501 = vld [vmem:[%s1 + $0x650] sm:$0xf]
  %v502 = vld [vmem:[%s1 + $0x654] sm:$0xf]
  %v503 = vld [vmem:[%s1 + $0x658] sm:$0xf]
  %v504 = vld [vmem:[%s1 + $0x65c] sm:$0xf]
  %v505 = vld [vmem:[%s1 + $0x660] sm:$0xf]
  %v506 = vld [vmem:[%s1 + $0x664] sm:$0xf]
  %v507 = vld [vmem:[%s1 + $0x668] sm:$0xf]
  %v508 = vld [vmem:[%s1 + $0x66c] sm:$0xf]
  %v509 = vld [vmem:[%s1 + $0x670] sm:$0xf]
  %v510 = vld [vmem:[%s1 + $0x674] sm:$0xf]
  %v511 = vld [vmem:[%s1 + $0x678] sm:$0xf]
  %v512 = vld [vmem:[%s1 + $0x67c] sm:$0xf]
  %v513 = vld [vmem:[%s1 + $0x680] sm:$0xf]
  %v514 = vld [vmem:[%s1 + $0x684] sm:$0xf]
  %v515 = vld [vmem:[%s1 + $0x688] sm:$0xf]
  %v516 = vld [vmem:[%s1 + $0x68c] sm:$0xf]
  %v517 = vld [vmem:[%s1 + $0x690] sm:$0xf]
  %v518 = vld [vmem:[%s1 + $0x694] sm:$0xf]
  %v519 = vld [vmem:[%s1 + $0x698] sm:$0xf]
  %v520 = vld [vmem:[%s1 + $0x69c] sm:$0xf]
  %v521 = vld [vmem:[%s1 + $0x6a0] sm:$0xf]
  %v522 = vld [vmem:[%s1 + $0x6a4] sm:$0xf]
  %v523 = vld [vmem:[%s1 + $0x6a8] sm:$0xf]
  %v524 = vld [vmem:[%s1 + $0x6ac] sm:$0xf]
  %v525 = vld [vmem:[%s1 + $0x6b0] sm:$0xf]
  %v526 = vld [vmem:[%s1 + $0x6b4] sm:$0xf]
  %v527 = vld [vmem:[%s1 + $0x6b8] sm:$0xf]
  %v528 = vld [vmem:[%s1 + $0x6bc] sm:$0xf]
  %v529 = vld [vmem:[%s1 + $0x6c0] sm:$0xf]
  %v530 = vld [vmem:[%s1 + $0x6c4] sm:$0xf]
  %v531 = vld [vmem:[%s1 + $0x6c8] sm:$0xf]
  %v532 = vld [vmem:[%s1 + $0x6cc] sm:$0xf]
  %v533 = vld [vmem:[%s1 + $0x6d0] sm:$0xf]
  %v534 = vld [vmem:[%s1 + $0x6d4] sm:$0xf]
  %v535 = vld [vmem:[%s1 + $0x6d8] sm:$0xf]
  %v536 = vld [vmem:[%s1 + $0x6dc] sm:$0xf]
  %v537 = vld [vmem:[%s1 + $0x6e0] sm:$0xf]
  %v538 = vld [vmem:[%s1 + $0x6e4] sm:$0xf]
  %v539 = vld [vmem:[%s1 + $0x6e8] sm:$0xf]
  %v540 = vld [vmem:[%s1 + $0x6ec] sm:$0xf]
  %v541 = vld [vmem:[%s1 + $0x6f0] sm:$0xf]
  %v542 = vld [vmem:[%s1 + $0x6f4] sm:$0xf]
  %v543 = vld [vmem:[%s1 + $0x6f8] sm:$0xf]
  %v544 = vld [vmem:[%s1 + $0x6fc] sm:$0xf]
  %v545 = vld [vmem:[%s1 + $0x700] sm:$0xf]
  %v546 = vld [vmem:[%s1 + $0x704] sm:$0xf]
  %v547 = vld [vmem:[%s1 + $0x708] sm:$0xf]
  %v548 = vld [vmem:[%s1 + $0x70c] sm:$0xf]
  %v549 = vld [vmem:[%s1 + $0x710] sm:$0xf]
  %v550 = vld [vmem:[%s1 + $0x714] sm:$0xf]
  %v551 = vld [vmem:[%s1 + $0x718] sm:$0xf]
  %v552 = vld [vmem:[%s1 + $0x71c] sm:$0xf]
  %v553 = vld [vmem:[%s1 + $0x720] sm:$0xf]
  %v554 = vld [vmem:[%s1 + $0x724] sm:$0xf]
  %v555 = vld [vmem:[%s1 + $0x728] sm:$0xf]
  %v556 = vld [vmem:[%s1 + $0x72c] sm:$0xf]
  %v557 = vld [vmem:[%s1 + $0x730] sm:$0xf]
  %v558 = vld [vmem:[%s1 + $0x734] sm:$0xf]
  %v559 = vld [vmem:[%s1 + $0x738] sm:$0xf]
  %v560 = vld [vmem:[%s1 + $0x73c] sm:$0xf]
  %v561 = vld [vmem:[%s1 + $0x740] sm:$0xf]
  %v562 = vld [vmem:[%s1 + $0x744] sm:$0xf]
  %v563 = vld [vmem:[%s1 + $0x748] sm:$0xf]
  %v564 = vld [vmem:[%s1 + $0x74c] sm:$0xf]
  %v565 = vld [vmem:[%s1 + $0x750] sm:$0xf]
  %v566 = vld [vmem:[%s1 + $0x754] sm:$0xf]
  %v567 = vld [vmem:[%s1 + $0x758] sm:$0xf]
  %v568 = vld [vmem:[%s1 + $0x75c] sm:$0xf]
  %v569 = vld [vmem:[%s1 + $0x760] sm:$0xf]
  %v570 = vld [vmem:[%s1 + $0x764] sm:$0xf]
  %v571 = vld [vmem:[%s1 + $0x768] sm:$0xf]
  %v572 = vld [vmem:[%s1 + $0x76c] sm:$0xf]
  %v573 = vld [vmem:[%s1 + $0x770] sm:$0xf]
  %v574 = vld [vmem:[%s1 + $0x774] sm:$0xf]
  %v575 = vld [vmem:[%s1 + $0x778] sm:$0xf]
  %v576 = vld [vmem:[%s1 + $0x77c] sm:$0xf]
  %v577 = vld [vmem:[%s1 + $0x780] sm:$0xf]
  %v578 = vld [vmem:[%s1 + $0x784] sm:$0xf]
  %v579 = vld [vmem:[%s1 + $0x788] sm:$0xf]
  %v580 = vld [vmem:[%s1 + $0x78c] sm:$0xf]
  %v581 = vld [vmem:[%s1 + $0x790] sm:$0xf]
  %v582 = vld [vmem:[%s1 + $0x794] sm:$0xf]
  %v583 = vld [vmem:[%s1 + $0x798] sm:$0xf]
  %v584 = vld [vmem:[%s1 + $0x79c] sm:$0xf]
  %v585 = vld [vmem:[%s1 + $0x7a0] sm:$0xf]
  %v586 = vld [vmem:[%s1 + $0x7a4] sm:$0xf]
  %v587 = vld [vmem:[%s1 + $0x7a8] sm:$0xf]
  %v588 = vld [vmem:[%s1 + $0x7ac] sm:$0xf]
  %v589 = vld [vmem:[%s1 + $0x7b0] sm:$0xf]
  %v590 = vld [vmem:[%s1 + $0x7b4] sm:$0xf]
  %v591 = vld [vmem:[%s1 + $0x7b8] sm:$0xf]
  %v592 = vld [vmem:[%s1 + $0x7bc] sm:$0xf]
  %v593 = vld [vmem:[%s1 + $0x7c0] sm:$0xf]
  %v594 = vld [vmem:[%s1 + $0x7c4] sm:$0xf]
  %v595 = vld [vmem:[%s1 + $0x7c8] sm:$0xf]
  %v596 = vld [vmem:[%s1 + $0x7cc] sm:$0xf]
  %v597 = vld [vmem:[%s1 + $0x7d0] sm:$0xf]
  %v598 = vld [vmem:[%s1 + $0x7d4] sm:$0xf]
  %v599 = vld [vmem:[%s1 + $0x7d8] sm:$0xf]
  %v600 = vld [vmem:[%s1 + $0x7dc] sm:$0xf]
  %v601 = vld [vmem:[%s1 + $0x7e0] sm:$0xf]
  %v602 = vld [vmem:[%s1 + $0x7e4] sm:$0xf]
  %v603 = vld [vmem:[%s1 + $0x7e8] sm:$0xf]
  %v604 = vld [vmem:[%s1 + $0x7ec] sm:$0xf]
  %v605 = vld [vmem:[%s1 + $0x7f0] sm:$0xf]
  %v606 = vld [vmem:[%s1 + $0x7f4] sm:$0xf]
  %v607 = vld [vmem:[%s1 + $0x7f8] sm:$0xf]
  %v608 = vld [vmem:[%s1 + $0x7fc] sm:$0xf]
  %v609 = vld [vmem:[%s1 + $0x800] sm:$0xf]
  %v610 = vld [vmem:[%s1 + $0x804] sm:$0xf]
  %v611 = vld [vmem:[%s1 + $0x808] sm:$0xf]
  %v612 = vld [vmem:[%s1 + $0x80c] sm:$0xf]
  %v613 = vld [vmem:[%s1 + $0x810] sm:$0xf]
  %v614 = vld [vmem:[%s1 + $0x814] sm:$0xf]
  %v615 = vld [vmem:[%s1 + $0x818] sm:$0xf]
  %v616 = vld [vmem:[%s1 + $0x81c] sm:$0xf]
  %v617 = vld [vmem:[%s1 + $0x820] sm:$0xf]
  %v618 = vld [vmem:[%s1 + $0x824] sm:$0xf]
  %v619 = vld [vmem:[%s1 + $0x828] sm:$0xf]
  %v620 = vld [vmem:[%s1 + $0x82c] sm:$0xf]
  %v621 = vld [vmem:[%s1 + $0x830] sm:$0xf]
  %v622 = vld [vmem:[%s1 + $0x834] sm:$0xf]
  %v623 = vld [vmem:[%s1 + $0x838] sm:$0xf]
  %v624 = vld [vmem:[%s1 + $0x83c] sm:$0xf]
  %v625 = vld [vmem:[%s1 + $0x840] sm:$0xf]
  %v626 = vld [vmem:[%s1 + $0x844] sm:$0xf]
  %v627 = vld [vmem:[%s1 + $0x848] sm:$0xf]
  %v628 = vld [vmem:[%s1 + $0x84c] sm:$0xf]
  %v629 = vld [vmem:[%s1 + $0x850] sm:$0xf]
  %v630 = vld [vmem:[%s1 + $0x854] sm:$0xf]
  %v631 = vld [vmem:[%s1 + $0x858] sm:$0xf]
  %v632 = vld [vmem:[%s1 + $0x85c] sm:$0xf]
  %v633 = vld [vmem:[%s1 + $0x860] sm:$0xf]
  %v634 = vld [vmem:[%s1 + $0x864] sm:$0xf]
  %v635 = vld [vmem:[%s1 + $0x868] sm:$0xf]
  %v636 = vld [vmem:[%s1 + $0x86c] sm:$0xf]
  %v637 = vld [vmem:[%s1 + $0x870] sm:$0xf]
  %v638 = vld [vmem:[%s1 + $0x874] sm:$0xf]
  %v639 = vld [vmem:[%s1 + $0x878] sm:$0xf]
  %v640 = vld [vmem:[%s1 + $0x87c] sm:$0xf]
  %v641 = vld [vmem:[%s1 + $0x880] sm:$0xf]
  %v642 = vld [vmem:[%s1 + $0x884] sm:$0xf]
  %v643 = vld [vmem:[%s1 + $0x888] sm:$0xf]
  %v644 = vld [vmem:[%s1 + $0x88c] sm:$0xf]
  %v645 = vld [vmem:[%s1 + $0x890] sm:$0xf]
  %v646 = vld [vmem:[%s1 + $0x894] sm:$0xf]
  %v647 = vld [vmem:[%s1 + $0x898] sm:$0xf]
  %v648 = vld [vmem:[%s1 + $0x89c] sm:$0xf]
  %v649 = vld [vmem:[%s1 + $0x8a0] sm:$0xf]
  %v650 = vld [vmem:[%s1 + $0x8a4] sm:$0xf]
  %v651 = vld [vmem:[%s1 + $0x8a8] sm:$0xf]
  %v652 = vld [vmem:[%s1 + $0x8ac] sm:$0xf]
  %v653 = vld [vmem:[%s1 + $0x8b0] sm:$0xf]
  %v654 = vld [vmem:[%s1 + $0x8b4] sm:$0xf]
  %v655 = vld [vmem:[%s1 + $0x8b8] sm:$0xf]
  %v656 = vld [vmem:[%s1 + $0x8bc] sm:$0xf]
  %v657 = vld [vmem:[%s1 + $0x8c0] sm:$0xf]
  %v658 = vld [vmem:[%s1 + $0x8c4] sm:$0xf]
  %v659 = vld [vmem:[%s1 + $0x8c8] sm:$0xf]
  %v660 = vld [vmem:[%s1 + $0x8cc] sm:$0xf]
  %v661 = vld [vmem:[%s1 + $0x8d0] sm:$0xf]
  %v662 = vld [vmem:[%s1 + $0x8d4] sm:$0xf]
  %v663 = vld [vmem:[%s1 + $0x8d8] sm:$0xf]
  %v664 = vld [vmem:[%s1 + $0x8dc] sm:$0xf]
  %v665 = vld [vmem:[%s1 + $0x8e0] sm:$0xf]
  %v666 = vld [vmem:[%s1 + $0x8e4] sm:$0xf]
  %v667 = vld [vmem:[%s1 + $0x8e8] sm:$0xf]
  %v668 = vld [vmem:[%s1 + $0x8ec] sm:$0xf]
  %v669 = vld [vmem:[%s1 + $0x8f0] sm:$0xf]
  %v670 = vld [vmem:[%s1 + $0x8f4] sm:$0xf]
  %v671 = vld [vmem:[%s1 + $0x8f8] sm:$0xf]
  %v672 = vld [vmem:[%s1 + $0x8fc] sm:$0xf]
  %v673 = vld [vmem:[%s1 + $0x900] sm:$0xf]
  %v674 = vld [vmem:[%s1 + $0x904] sm:$0xf]
  %v675 = vld [vmem:[%s1 + $0x908] sm:$0xf]
  %v676 = vld [vmem:[%s1 + $0x90c] sm:$0xf]
  %v677 = vld [vmem:[%s1 + $0x910] sm:$0xf]
  %v678 = vld [vmem:[%s1 + $0x914] sm:$0xf]
  %v679 = vld [vmem:[%s1 + $0x918] sm:$0xf]
  %v680 = vld [vmem:[%s1 + $0x91c] sm:$0xf]
  %v681 = vld [vmem:[%s1 + $0x920] sm:$0xf]
  %v682 = vld [vmem:[%s1 + $0x924] sm:$0xf]
  %v683 = vld [vmem:[%s1 + $0x928] sm:$0xf]
  %v684 = vld [vmem:[%s1 + $0x92c] sm:$0xf]
  %v685 = vld [vmem:[%s1 + $0x930] sm:$0xf]
  %v686 = vld [vmem:[%s1 + $0x934] sm:$0xf]
  %v687 = vld [vmem:[%s1 + $0x938] sm:$0xf]
  %v688 = vld [vmem:[%s1 + $0x93c] sm:$0xf]
  %v689 = vld [vmem:[%s1 + $0x940] sm:$0xf]
  %v690 = vld [vmem:[%s1 + $0x944] sm:$0xf]
  %v691 = vld [vmem:[%s1 + $0x948] sm:$0xf]
  %v692 = vld [vmem:[%s1 + $0x94c] sm:$0xf]
  %v693 = vld [vmem:[%s1 + $0x950] sm:$0xf]
  %v694 = vld [vmem:[%s1 + $0x954] sm:$0xf]
  %v695 = vld [vmem:[%s1 + $0x958] sm:$0xf]
  %v696 = vld [vmem:[%s1 + $0x95c] sm:$0xf]
  %v697 = vld [vmem:[%s2] sm:$0x1]
  %v699 = vlaneseq
  %v700 = vshrl.u32 %v699, 7
  %v701 = vsub.s32 0, %v700
  %v702 = vrot.slane %v697, %v701
  %v1304 = vunpack.c.l.b16 %v97
  %v1305 = vunpack.c.l.b16 %v98
  %v1306 = vunpack.c.l.b16 %v99
  %v1307 = vunpack.c.l.b16 %v100
  %v1308 = vunpack.c.l.b16 %v101
  %v1309 = vunpack.c.l.b16 %v102
  %v1310 = vunpack.c.l.b16 %v103
  %v1311 = vunpack.c.l.b16 %v104
  %v1312 = vunpack.c.l.b16 %v105
  %v1313 = vunpack.c.l.b16 %v106
  %v1314 = vunpack.c.l.b16 %v107
  %v1315 = vunpack.c.l.b16 %v108
  %v1316 = vunpack.c.l.b16 %v109
  %v1317 = vunpack.c.l.b16 %v110
  %v1318 = vunpack.c.l.b16 %v111
  %v1319 = vunpack.c.l.b16 %v112
  %v1320 = vunpack.c.l.b16 %v113
  %v1321 = vunpack.c.l.b16 %v114
  %v1322 = vunpack.c.l.b16 %v115
  %v1323 = vunpack.c.l.b16 %v116
  %v1324 = vunpack.c.l.b16 %v117
  %v1325 = vunpack.c.l.b16 %v118
  %v1326 = vunpack.c.l.b16 %v119
  %v1327 = vunpack.c.l.b16 %v120
  %v1328 = vunpack.c.l.b16 %v121
  %v1329 = vunpack.c.l.b16 %v122
  %v1330 = vunpack.c.l.b16 %v123
  %v1331 = vunpack.c.l.b16 %v124
  %v1332 = vunpack.c.l.b16 %v125
  %v1333 = vunpack.c.l.b16 %v126
  %v1334 = vunpack.c.l.b16 %v127
  %v1335 = vunpack.c.l.b16 %v128
  %v1336 = vunpack.c.l.b16 %v129
  %v1337 = vunpack.c.l.b16 %v130
  %v1338 = vunpack.c.l.b16 %v131
  %v1339 = vunpack.c.l.b16 %v132
  %v1340 = vunpack.c.l.b16 %v133
  %v1341 = vunpack.c.l.b16 %v134
  %v1342 = vunpack.c.l.b16 %v135
  %v1343 = vunpack.c.l.b16 %v136
  %v1344 = vunpack.c.l.b16 %v137
  %v1345 = vunpack.c.l.b16 %v138
  %v1346 = vunpack.c.l.b16 %v139
  %v1347 = vunpack.c.l.b16 %v140
  %v1348 = vunpack.c.l.b16 %v141
  %v1349 = vunpack.c.l.b16 %v142
  %v1350 = vunpack.c.l.b16 %v143
  %v1351 = vunpack.c.l.b16 %v144
  %v1352 = vunpack.c.l.b16 %v145
  %v1353 = vunpack.c.l.b16 %v146
  %v1354 = vunpack.c.l.b16 %v147
  %v1355 = vunpack.c.l.b16 %v148
  %v1356 = vunpack.c.l.b16 %v149
  %v1357 = vunpack.c.l.b16 %v150
  %v1358 = vunpack.c.l.b16 %v151
  %v1359 = vunpack.c.l.b16 %v152
  %v1360 = vunpack.c.l.b16 %v153
  %v1361 = vunpack.c.l.b16 %v154
  %v1362 = vunpack.c.l.b16 %v155
  %v1363 = vunpack.c.l.b16 %v156
  %v1364 = vunpack.c.l.b16 %v157
  %v1365 = vunpack.c.l.b16 %v158
  %v1366 = vunpack.c.l.b16 %v159
  %v1367 = vunpack.c.l.b16 %v160
  %v1368 = vunpack.c.l.b16 %v161
  %v1369 = vunpack.c.l.b16 %v162
  %v1370 = vunpack.c.l.b16 %v163
  %v1371 = vunpack.c.l.b16 %v164
  %v1372 = vunpack.c.l.b16 %v165
  %v1373 = vunpack.c.l.b16 %v166
  %v1374 = vunpack.c.l.b16 %v167
  %v1375 = vunpack.c.l.b16 %v168
  %v1376 = vunpack.c.l.b16 %v169
  %v1377 = vunpack.c.l.b16 %v170
  %v1378 = vunpack.c.l.b16 %v171
  %v1379 = vunpack.c.l.b16 %v172
  %v1380 = vunpack.c.l.b16 %v173
  %v1381 = vunpack.c.l.b16 %v174
  %v1382 = vunpack.c.l.b16 %v175
  %v1383 = vunpack.c.l.b16 %v176
  %v1384 = vunpack.c.l.b16 %v177
  %v1385 = vunpack.c.l.b16 %v178
  %v1386 = vunpack.c.l.b16 %v179
  %v1387 = vunpack.c.l.b16 %v180
  %v1388 = vunpack.c.l.b16 %v181
  %v1389 = vunpack.c.l.b16 %v182
  %v1390 = vunpack.c.l.b16 %v183
  %v1391 = vunpack.c.l.b16 %v184
  %v1392 = vunpack.c.l.b16 %v185
  %v1393 = vunpack.c.l.b16 %v186
  %v1394 = vunpack.c.l.b16 %v187
  %v1395 = vunpack.c.l.b16 %v188
  %v1396 = vunpack.c.l.b16 %v189
  %v1397 = vunpack.c.l.b16 %v190
  %v1398 = vunpack.c.l.b16 %v191
  %v1399 = vunpack.c.l.b16 %v192
  %v1400 = vunpack.c.l.b16 %v193
  %v1401 = vunpack.c.l.b16 %v194
  %v1402 = vunpack.c.l.b16 %v195
  %v1403 = vunpack.c.l.b16 %v196
  %v1404 = vunpack.c.l.b16 %v197
  %v1405 = vunpack.c.l.b16 %v198
  %v1406 = vunpack.c.l.b16 %v199
  %v1407 = vunpack.c.l.b16 %v200
  %v1408 = vunpack.c.l.b16 %v201
  %v1409 = vunpack.c.l.b16 %v202
  %v1410 = vunpack.c.l.b16 %v203
  %v1411 = vunpack.c.l.b16 %v204
  %v1412 = vunpack.c.l.b16 %v205
  %v1413 = vunpack.c.l.b16 %v206
  %v1414 = vunpack.c.l.b16 %v207
  %v1415 = vunpack.c.l.b16 %v208
  %v1416 = vunpack.c.l.b16 %v209
  %v1417 = vunpack.c.l.b16 %v210
  %v1418 = vunpack.c.l.b16 %v211
  %v1419 = vunpack.c.l.b16 %v212
  %v1420 = vunpack.c.l.b16 %v213
  %v1421 = vunpack.c.l.b16 %v214
  %v1422 = vunpack.c.l.b16 %v215
  %v1423 = vunpack.c.l.b16 %v216
  %v1424 = vunpack.c.l.b16 %v217
  %v1425 = vunpack.c.l.b16 %v218
  %v1426 = vunpack.c.l.b16 %v219
  %v1427 = vunpack.c.l.b16 %v220
  %v1428 = vunpack.c.l.b16 %v221
  %v1429 = vunpack.c.l.b16 %v222
  %v1430 = vunpack.c.l.b16 %v223
  %v1431 = vunpack.c.l.b16 %v224
  %v1432 = vunpack.c.l.b16 %v225
  %v1433 = vunpack.c.l.b16 %v226
  %v1434 = vunpack.c.l.b16 %v227
  %v1435 = vunpack.c.l.b16 %v228
  %v1436 = vunpack.c.l.b16 %v229
  %v1437 = vunpack.c.l.b16 %v230
  %v1438 = vunpack.c.l.b16 %v231
  %v1439 = vunpack.c.l.b16 %v232
  %v1440 = vunpack.c.l.b16 %v233
  %v1441 = vunpack.c.l.b16 %v234
  %v1442 = vunpack.c.l.b16 %v235
  %v1443 = vunpack.c.l.b16 %v236
  %v1444 = vunpack.c.l.b16 %v237
  %v1445 = vunpack.c.l.b16 %v238
  %v1446 = vunpack.c.l.b16 %v239
  %v1447 = vunpack.c.l.b16 %v240
  %v1448 = vunpack.c.l.b16 %v241
  %v1449 = vunpack.c.l.b16 %v242
  %v1450 = vunpack.c.l.b16 %v243
  %v1451 = vunpack.c.l.b16 %v244
  %v1452 = vunpack.c.l.b16 %v245
  %v1453 = vunpack.c.l.b16 %v246
  %v1454 = vunpack.c.l.b16 %v247
  %v1455 = vunpack.c.l.b16 %v248
  %v1456 = vunpack.c.l.b16 %v249
  %v1457 = vunpack.c.l.b16 %v250
  %v1458 = vunpack.c.l.b16 %v251
  %v1459 = vunpack.c.l.b16 %v252
  %v1460 = vunpack.c.l.b16 %v253
  %v1461 = vunpack.c.l.b16 %v254
  %v1462 = vunpack.c.l.b16 %v255
  %v1463 = vunpack.c.l.b16 %v256
  %v1464 = vunpack.c.l.b16 %v257
  %v1465 = vunpack.c.l.b16 %v258
  %v1466 = vunpack.c.l.b16 %v259
  %v1467 = vunpack.c.l.b16 %v260
  %v1468 = vunpack.c.l.b16 %v261
  %v1469 = vunpack.c.l.b16 %v262
  %v1470 = vunpack.c.l.b16 %v263
  %v1471 = vunpack.c.l.b16 %v264
  %v1472 = vunpack.c.l.b16 %v265
  %v1473 = vunpack.c.l.b16 %v266
  %v1474 = vunpack.c.l.b16 %v267
  %v1475 = vunpack.c.l.b16 %v268
  %v1476 = vunpack.c.l.b16 %v269
  %v1477 = vunpack.c.l.b16 %v270
  %v1478 = vunpack.c.l.b16 %v271
  %v1479 = vunpack.c.l.b16 %v272
  %v1480 = vunpack.c.l.b16 %v273
  %v1481 = vunpack.c.l.b16 %v274
  %v1482 = vunpack.c.l.b16 %v275
  %v1483 = vunpack.c.l.b16 %v276
  %v1484 = vunpack.c.l.b16 %v277
  %v1485 = vunpack.c.l.b16 %v278
  %v1486 = vunpack.c.l.b16 %v279
  %v1487 = vunpack.c.l.b16 %v280
  %v1488 = vunpack.c.l.b16 %v281
  %v1489 = vunpack.c.l.b16 %v282
  %v1490 = vunpack.c.l.b16 %v283
  %v1491 = vunpack.c.l.b16 %v284
  %v1492 = vunpack.c.l.b16 %v285
  %v1493 = vunpack.c.l.b16 %v286
  %v1494 = vunpack.c.l.b16 %v287
  %v1495 = vunpack.c.l.b16 %v288
  %v1496 = vunpack.c.l.b16 %v289
  %v1497 = vunpack.c.l.b16 %v290
  %v1498 = vunpack.c.l.b16 %v291
  %v1499 = vunpack.c.l.b16 %v292
  %v1500 = vunpack.c.l.b16 %v293
  %v1501 = vunpack.c.l.b16 %v294
  %v1502 = vunpack.c.l.b16 %v295
  %v1503 = vunpack.c.l.b16 %v296
  %v1504 = vunpack.c.l.b16 %v297
  %v1505 = vunpack.c.l.b16 %v298
  %v1506 = vunpack.c.l.b16 %v299
  %v1507 = vunpack.c.l.b16 %v300
  %v1508 = vunpack.c.l.b16 %v301
  %v1509 = vunpack.c.l.b16 %v302
  %v1510 = vunpack.c.l.b16 %v303
  %v1511 = vunpack.c.l.b16 %v304
  %v1512 = vunpack.c.l.b16 %v305
  %v1513 = vunpack.c.l.b16 %v306
  %v1514 = vunpack.c.l.b16 %v307
  %v1515 = vunpack.c.l.b16 %v308
  %v1516 = vunpack.c.l.b16 %v309
  %v1517 = vunpack.c.l.b16 %v310
  %v1518 = vunpack.c.l.b16 %v311
  %v1519 = vunpack.c.l.b16 %v312
  %v1520 = vunpack.c.l.b16 %v313
  %v1521 = vunpack.c.l.b16 %v314
  %v1522 = vunpack.c.l.b16 %v315
  %v1523 = vunpack.c.l.b16 %v316
  %v1524 = vunpack.c.l.b16 %v317
  %v1525 = vunpack.c.l.b16 %v318
  %v1526 = vunpack.c.l.b16 %v319
  %v1527 = vunpack.c.l.b16 %v320
  %v1528 = vunpack.c.l.b16 %v321
  %v1529 = vunpack.c.l.b16 %v322
  %v1530 = vunpack.c.l.b16 %v323
  %v1531 = vunpack.c.l.b16 %v324
  %v1532 = vunpack.c.l.b16 %v325
  %v1533 = vunpack.c.l.b16 %v326
  %v1534 = vunpack.c.l.b16 %v327
  %v1535 = vunpack.c.l.b16 %v328
  %v1536 = vunpack.c.l.b16 %v329
  %v1537 = vunpack.c.l.b16 %v330
  %v1538 = vunpack.c.l.b16 %v331
  %v1539 = vunpack.c.l.b16 %v332
  %v1540 = vunpack.c.l.b16 %v333
  %v1541 = vunpack.c.l.b16 %v334
  %v1542 = vunpack.c.l.b16 %v335
  %v1543 = vunpack.c.l.b16 %v336
  %v1544 = vunpack.c.l.b16 %v337
  %v1545 = vunpack.c.l.b16 %v338
  %v1546 = vunpack.c.l.b16 %v339
  %v1547 = vunpack.c.l.b16 %v340
  %v1548 = vunpack.c.l.b16 %v341
  %v1549 = vunpack.c.l.b16 %v342
  %v1550 = vunpack.c.l.b16 %v343
  %v1551 = vunpack.c.l.b16 %v344
  %v1552 = vunpack.c.l.b16 %v345
  %v1553 = vunpack.c.l.b16 %v346
  %v1554 = vunpack.c.l.b16 %v347
  %v1555 = vunpack.c.l.b16 %v348
  %v1556 = vunpack.c.l.b16 %v349
  %v1557 = vunpack.c.l.b16 %v350
  %v1558 = vunpack.c.l.b16 %v351
  %v1559 = vunpack.c.l.b16 %v352
  %v1560 = vunpack.c.l.b16 %v353
  %v1561 = vunpack.c.l.b16 %v354
  %v1562 = vunpack.c.l.b16 %v355
  %v1563 = vunpack.c.l.b16 %v356
  %v1564 = vunpack.c.l.b16 %v357
  %v1565 = vunpack.c.l.b16 %v358
  %v1566 = vunpack.c.l.b16 %v359
  %v1567 = vunpack.c.l.b16 %v360
  %v1568 = vunpack.c.l.b16 %v361
  %v1569 = vunpack.c.l.b16 %v362
  %v1570 = vunpack.c.l.b16 %v363
  %v1571 = vunpack.c.l.b16 %v364
  %v1572 = vunpack.c.l.b16 %v365
  %v1573 = vunpack.c.l.b16 %v366
  %v1574 = vunpack.c.l.b16 %v367
  %v1575 = vunpack.c.l.b16 %v368
  %v1576 = vunpack.c.l.b16 %v369
  %v1577 = vunpack.c.l.b16 %v370
  %v1578 = vunpack.c.l.b16 %v371
  %v1579 = vunpack.c.l.b16 %v372
  %v1580 = vunpack.c.l.b16 %v373
  %v1581 = vunpack.c.l.b16 %v374
  %v1582 = vunpack.c.l.b16 %v375
  %v1583 = vunpack.c.l.b16 %v376
  %v1584 = vunpack.c.l.b16 %v377
  %v1585 = vunpack.c.l.b16 %v378
  %v1586 = vunpack.c.l.b16 %v379
  %v1587 = vunpack.c.l.b16 %v380
  %v1588 = vunpack.c.l.b16 %v381
  %v1589 = vunpack.c.l.b16 %v382
  %v1590 = vunpack.c.l.b16 %v383
  %v1591 = vunpack.c.l.b16 %v384
  %v1592 = vunpack.c.l.b16 %v385
  %v1593 = vunpack.c.l.b16 %v386
  %v1594 = vunpack.c.l.b16 %v387
  %v1595 = vunpack.c.l.b16 %v388
  %v1596 = vunpack.c.l.b16 %v389
  %v1597 = vunpack.c.l.b16 %v390
  %v1598 = vunpack.c.l.b16 %v391
  %v1599 = vunpack.c.l.b16 %v392
  %v1600 = vunpack.c.l.b16 %v393
  %v1601 = vunpack.c.l.b16 %v394
  %v1602 = vunpack.c.l.b16 %v395
  %v1603 = vunpack.c.l.b16 %v396
  %v1604 = vunpack.c.l.b16 %v397
  %v1605 = vunpack.c.l.b16 %v398
  %v1606 = vunpack.c.l.b16 %v399
  %v1607 = vunpack.c.l.b16 %v400
  %v1608 = vunpack.c.l.b16 %v401
  %v1609 = vunpack.c.l.b16 %v402
  %v1610 = vunpack.c.l.b16 %v403
  %v1611 = vunpack.c.l.b16 %v404
  %v1612 = vunpack.c.l.b16 %v405
  %v1613 = vunpack.c.l.b16 %v406
  %v1614 = vunpack.c.l.b16 %v407
  %v1615 = vunpack.c.l.b16 %v408
  %v1616 = vunpack.c.l.b16 %v409
  %v1617 = vunpack.c.l.b16 %v410
  %v1618 = vunpack.c.l.b16 %v411
  %v1619 = vunpack.c.l.b16 %v412
  %v1620 = vunpack.c.l.b16 %v413
  %v1621 = vunpack.c.l.b16 %v414
  %v1622 = vunpack.c.l.b16 %v415
  %v1623 = vunpack.c.l.b16 %v416
  %v1624 = vunpack.c.l.b16 %v417
  %v1625 = vunpack.c.l.b16 %v418
  %v1626 = vunpack.c.l.b16 %v419
  %v1627 = vunpack.c.l.b16 %v420
  %v1628 = vunpack.c.l.b16 %v421
  %v1629 = vunpack.c.l.b16 %v422
  %v1630 = vunpack.c.l.b16 %v423
  %v1631 = vunpack.c.l.b16 %v424
  %v1632 = vunpack.c.l.b16 %v425
  %v1633 = vunpack.c.l.b16 %v426
  %v1634 = vunpack.c.l.b16 %v427
  %v1635 = vunpack.c.l.b16 %v428
  %v1636 = vunpack.c.l.b16 %v429
  %v1637 = vunpack.c.l.b16 %v430
  %v1638 = vunpack.c.l.b16 %v431
  %v1639 = vunpack.c.l.b16 %v432
  %v1640 = vunpack.c.l.b16 %v433
  %v1641 = vunpack.c.l.b16 %v434
  %v1642 = vunpack.c.l.b16 %v435
  %v1643 = vunpack.c.l.b16 %v436
  %v1644 = vunpack.c.l.b16 %v437
  %v1645 = vunpack.c.l.b16 %v438
  %v1646 = vunpack.c.l.b16 %v439
  %v1647 = vunpack.c.l.b16 %v440
  %v1648 = vunpack.c.l.b16 %v441
  %v1649 = vunpack.c.l.b16 %v442
  %v1650 = vunpack.c.l.b16 %v443
  %v1651 = vunpack.c.l.b16 %v444
  %v1652 = vunpack.c.l.b16 %v445
  %v1653 = vunpack.c.l.b16 %v446
  %v1654 = vunpack.c.l.b16 %v447
  %v1655 = vunpack.c.l.b16 %v448
  %v1656 = vunpack.c.l.b16 %v449
  %v1657 = vunpack.c.l.b16 %v450
  %v1658 = vunpack.c.l.b16 %v451
  %v1659 = vunpack.c.l.b16 %v452
  %v1660 = vunpack.c.l.b16 %v453
  %v1661 = vunpack.c.l.b16 %v454
  %v1662 = vunpack.c.l.b16 %v455
  %v1663 = vunpack.c.l.b16 %v456
  %v1664 = vunpack.c.l.b16 %v457
  %v1665 = vunpack.c.l.b16 %v458
  %v1666 = vunpack.c.l.b16 %v459
  %v1667 = vunpack.c.l.b16 %v460
  %v1668 = vunpack.c.l.b16 %v461
  %v1669 = vunpack.c.l.b16 %v462
  %v1670 = vunpack.c.l.b16 %v463
  %v1671 = vunpack.c.l.b16 %v464
  %v1672 = vunpack.c.l.b16 %v465
  %v1673 = vunpack.c.l.b16 %v466
  %v1674 = vunpack.c.l.b16 %v467
  %v1675 = vunpack.c.l.b16 %v468
  %v1676 = vunpack.c.l.b16 %v469
  %v1677 = vunpack.c.l.b16 %v470
  %v1678 = vunpack.c.l.b16 %v471
  %v1679 = vunpack.c.l.b16 %v472
  %v1680 = vunpack.c.l.b16 %v473
  %v1681 = vunpack.c.l.b16 %v474
  %v1682 = vunpack.c.l.b16 %v475
  %v1683 = vunpack.c.l.b16 %v476
  %v1684 = vunpack.c.l.b16 %v477
  %v1685 = vunpack.c.l.b16 %v478
  %v1686 = vunpack.c.l.b16 %v479
  %v1687 = vunpack.c.l.b16 %v480
  %v1688 = vunpack.c.l.b16 %v481
  %v1689 = vunpack.c.l.b16 %v482
  %v1690 = vunpack.c.l.b16 %v483
  %v1691 = vunpack.c.l.b16 %v484
  %v1692 = vunpack.c.l.b16 %v485
  %v1693 = vunpack.c.l.b16 %v486
  %v1694 = vunpack.c.l.b16 %v487
  %v1695 = vunpack.c.l.b16 %v488
  %v1696 = vunpack.c.l.b16 %v489
  %v1697 = vunpack.c.l.b16 %v490
  %v1698 = vunpack.c.l.b16 %v491
  %v1699 = vunpack.c.l.b16 %v492
  %v1700 = vunpack.c.l.b16 %v493
  %v1701 = vunpack.c.l.b16 %v494
  %v1702 = vunpack.c.l.b16 %v495
  %v1703 = vunpack.c.l.b16 %v496
  %v1704 = vunpack.c.l.b16 %v497
  %v1705 = vunpack.c.l.b16 %v498
  %v1706 = vunpack.c.l.b16 %v499
  %v1707 = vunpack.c.l.b16 %v500
  %v1708 = vunpack.c.l.b16 %v501
  %v1709 = vunpack.c.l.b16 %v502
  %v1710 = vunpack.c.l.b16 %v503
  %v1711 = vunpack.c.l.b16 %v504
  %v1712 = vunpack.c.l.b16 %v505
  %v1713 = vunpack.c.l.b16 %v506
  %v1714 = vunpack.c.l.b16 %v507
  %v1715 = vunpack.c.l.b16 %v508
  %v1716 = vunpack.c.l.b16 %v509
  %v1717 = vunpack.c.l.b16 %v510
  %v1718 = vunpack.c.l.b16 %v511
  %v1719 = vunpack.c.l.b16 %v512
  %v1720 = vunpack.c.l.b16 %v513
  %v1721 = vunpack.c.l.b16 %v514
  %v1722 = vunpack.c.l.b16 %v515
  %v1723 = vunpack.c.l.b16 %v516
  %v1724 = vunpack.c.l.b16 %v517
  %v1725 = vunpack.c.l.b16 %v518
  %v1726 = vunpack.c.l.b16 %v519
  %v1727 = vunpack.c.l.b16 %v520
  %v1728 = vunpack.c.l.b16 %v521
  %v1729 = vunpack.c.l.b16 %v522
  %v1730 = vunpack.c.l.b16 %v523
  %v1731 = vunpack.c.l.b16 %v524
  %v1732 = vunpack.c.l.b16 %v525
  %v1733 = vunpack.c.l.b16 %v526
  %v1734 = vunpack.c.l.b16 %v527
  %v1735 = vunpack.c.l.b16 %v528
  %v1736 = vunpack.c.l.b16 %v529
  %v1737 = vunpack.c.l.b16 %v530
  %v1738 = vunpack.c.l.b16 %v531
  %v1739 = vunpack.c.l.b16 %v532
  %v1740 = vunpack.c.l.b16 %v533
  %v1741 = vunpack.c.l.b16 %v534
  %v1742 = vunpack.c.l.b16 %v535
  %v1743 = vunpack.c.l.b16 %v536
  %v1744 = vunpack.c.l.b16 %v537
  %v1745 = vunpack.c.l.b16 %v538
  %v1746 = vunpack.c.l.b16 %v539
  %v1747 = vunpack.c.l.b16 %v540
  %v1748 = vunpack.c.l.b16 %v541
  %v1749 = vunpack.c.l.b16 %v542
  %v1750 = vunpack.c.l.b16 %v543
  %v1751 = vunpack.c.l.b16 %v544
  %v1752 = vunpack.c.l.b16 %v545
  %v1753 = vunpack.c.l.b16 %v546
  %v1754 = vunpack.c.l.b16 %v547
  %v1755 = vunpack.c.l.b16 %v548
  %v1756 = vunpack.c.l.b16 %v549
  %v1757 = vunpack.c.l.b16 %v550
  %v1758 = vunpack.c.l.b16 %v551
  %v1759 = vunpack.c.l.b16 %v552
  %v1760 = vunpack.c.l.b16 %v553
  %v1761 = vunpack.c.l.b16 %v554
  %v1762 = vunpack.c.l.b16 %v555
  %v1763 = vunpack.c.l.b16 %v556
  %v1764 = vunpack.c.l.b16 %v557
  %v1765 = vunpack.c.l.b16 %v558
  %v1766 = vunpack.c.l.b16 %v559
  %v1767 = vunpack.c.l.b16 %v560
  %v1768 = vunpack.c.l.b16 %v561
  %v1769 = vunpack.c.l.b16 %v562
  %v1770 = vunpack.c.l.b16 %v563
  %v1771 = vunpack.c.l.b16 %v564
  %v1772 = vunpack.c.l.b16 %v565
  %v1773 = vunpack.c.l.b16 %v566
  %v1774 = vunpack.c.l.b16 %v567
  %v1775 = vunpack.c.l.b16 %v568
  %v1776 = vunpack.c.l.b16 %v569
  %v1777 = vunpack.c.l.b16 %v570
  %v1778 = vunpack.c.l.b16 %v571
  %v1779 = vunpack.c.l.b16 %v572
  %v1780 = vunpack.c.l.b16 %v573
  %v1781 = vunpack.c.l.b16 %v574
  %v1782 = vunpack.c.l.b16 %v575
  %v1783 = vunpack.c.l.b16 %v576
  %v1784 = vunpack.c.l.b16 %v577
  %v1785 = vunpack.c.l.b16 %v578
  %v1786 = vunpack.c.l.b16 %v579
  %v1787 = vunpack.c.l.b16 %v580
  %v1788 = vunpack.c.l.b16 %v581
  %v1789 = vunpack.c.l.b16 %v582
  %v1790 = vunpack.c.l.b16 %v583
  %v1791 = vunpack.c.l.b16 %v584
  %v1792 = vunpack.c.l.b16 %v585
  %v1793 = vunpack.c.l.b16 %v586
  %v1794 = vunpack.c.l.b16 %v587
  %v1795 = vunpack.c.l.b16 %v588
  %v1796 = vunpack.c.l.b16 %v589
  %v1797 = vunpack.c.l.b16 %v590
  %v1798 = vunpack.c.l.b16 %v591
  %v1799 = vunpack.c.l.b16 %v592
  %v1800 = vunpack.c.l.b16 %v593
  %v1801 = vunpack.c.l.b16 %v594
  %v1802 = vunpack.c.l.b16 %v595
  %v1803 = vunpack.c.l.b16 %v596
  %v1804 = vunpack.c.l.b16 %v597
  %v1805 = vunpack.c.l.b16 %v598
  %v1806 = vunpack.c.l.b16 %v599
  %v1807 = vunpack.c.l.b16 %v600
  %v1808 = vunpack.c.l.b16 %v601
  %v1809 = vunpack.c.l.b16 %v602
  %v1810 = vunpack.c.l.b16 %v603
  %v1811 = vunpack.c.l.b16 %v604
  %v1812 = vunpack.c.l.b16 %v605
  %v1813 = vunpack.c.l.b16 %v606
  %v1814 = vunpack.c.l.b16 %v607
  %v1815 = vunpack.c.l.b16 %v608
  %v1816 = vunpack.c.l.b16 %v609
  %v1817 = vunpack.c.l.b16 %v610
  %v1818 = vunpack.c.l.b16 %v611
  %v1819 = vunpack.c.l.b16 %v612
  %v1820 = vunpack.c.l.b16 %v613
  %v1821 = vunpack.c.l.b16 %v614
  %v1822 = vunpack.c.l.b16 %v615
  %v1823 = vunpack.c.l.b16 %v616
  %v1824 = vunpack.c.l.b16 %v617
  %v1825 = vunpack.c.l.b16 %v618
  %v1826 = vunpack.c.l.b16 %v619
  %v1827 = vunpack.c.l.b16 %v620
  %v1828 = vunpack.c.l.b16 %v621
  %v1829 = vunpack.c.l.b16 %v622
  %v1830 = vunpack.c.l.b16 %v623
  %v1831 = vunpack.c.l.b16 %v624
  %v1832 = vunpack.c.l.b16 %v625
  %v1833 = vunpack.c.l.b16 %v626
  %v1834 = vunpack.c.l.b16 %v627
  %v1835 = vunpack.c.l.b16 %v628
  %v1836 = vunpack.c.l.b16 %v629
  %v1837 = vunpack.c.l.b16 %v630
  %v1838 = vunpack.c.l.b16 %v631
  %v1839 = vunpack.c.l.b16 %v632
  %v1840 = vunpack.c.l.b16 %v633
  %v1841 = vunpack.c.l.b16 %v634
  %v1842 = vunpack.c.l.b16 %v635
  %v1843 = vunpack.c.l.b16 %v636
  %v1844 = vunpack.c.l.b16 %v637
  %v1845 = vunpack.c.l.b16 %v638
  %v1846 = vunpack.c.l.b16 %v639
  %v1847 = vunpack.c.l.b16 %v640
  %v1848 = vunpack.c.l.b16 %v641
  %v1849 = vunpack.c.l.b16 %v642
  %v1850 = vunpack.c.l.b16 %v643
  %v1851 = vunpack.c.l.b16 %v644
  %v1852 = vunpack.c.l.b16 %v645
  %v1853 = vunpack.c.l.b16 %v646
  %v1854 = vunpack.c.l.b16 %v647
  %v1855 = vunpack.c.l.b16 %v648
  %v1856 = vunpack.c.l.b16 %v649
  %v1857 = vunpack.c.l.b16 %v650
  %v1858 = vunpack.c.l.b16 %v651
  %v1859 = vunpack.c.l.b16 %v652
  %v1860 = vunpack.c.l.b16 %v653
  %v1861 = vunpack.c.l.b16 %v654
  %v1862 = vunpack.c.l.b16 %v655
  %v1863 = vunpack.c.l.b16 %v656
  %v1864 = vunpack.c.l.b16 %v657
  %v1865 = vunpack.c.l.b16 %v658
  %v1866 = vunpack.c.l.b16 %v659
  %v1867 = vunpack.c.l.b16 %v660
  %v1868 = vunpack.c.l.b16 %v661
  %v1869 = vunpack.c.l.b16 %v662
  %v1870 = vunpack.c.l.b16 %v663
  %v1871 = vunpack.c.l.b16 %v664
  %v1872 = vunpack.c.l.b16 %v665
  %v1873 = vunpack.c.l.b16 %v666
  %v1874 = vunpack.c.l.b16 %v667
  %v1875 = vunpack.c.l.b16 %v668
  %v1876 = vunpack.c.l.b16 %v669
  %v1877 = vunpack.c.l.b16 %v670
  %v1878 = vunpack.c.l.b16 %v671
  %v1879 = vunpack.c.l.b16 %v672
  %v1880 = vunpack.c.l.b16 %v673
  %v1881 = vunpack.c.l.b16 %v674
  %v1882 = vunpack.c.l.b16 %v675
  %v1883 = vunpack.c.l.b16 %v676
  %v1884 = vunpack.c.l.b16 %v677
  %v1885 = vunpack.c.l.b16 %v678
  %v1886 = vunpack.c.l.b16 %v679
  %v1887 = vunpack.c.l.b16 %v680
  %v1888 = vunpack.c.l.b16 %v681
  %v1889 = vunpack.c.l.b16 %v682
  %v1890 = vunpack.c.l.b16 %v683
  %v1891 = vunpack.c.l.b16 %v684
  %v1892 = vunpack.c.l.b16 %v685
  %v1893 = vunpack.c.l.b16 %v686
  %v1894 = vunpack.c.l.b16 %v687
  %v1895 = vunpack.c.l.b16 %v688
  %v1896 = vunpack.c.l.b16 %v689
  %v1897 = vunpack.c.l.b16 %v690
  %v1898 = vunpack.c.l.b16 %v691
  %v1899 = vunpack.c.l.b16 %v692
  %v1900 = vunpack.c.l.b16 %v693
  %v1901 = vunpack.c.l.b16 %v694
  %v1902 = vunpack.c.l.b16 %v695
  %v1903 = vunpack.c.l.b16 %v696
  %v1904 = vpack.c.b16 %v1305, %v1304
  %v1905 = vpack.c.b16 %v1307, %v1306
  %v1906 = vpack.c.b16 %v1309, %v1308
  %v1907 = vpack.c.b16 %v1311, %v1310
  %v1908 = vpack.c.b16 %v1313, %v1312
  %v1909 = vpack.c.b16 %v1315, %v1314
  %v1910 = vpack.c.b16 %v1317, %v1316
  %v1911 = vpack.c.b16 %v1319, %v1318
  %v1912 = vpack.c.b16 %v1321, %v1320
  %v1913 = vpack.c.b16 %v1323, %v1322
  %v1914 = vpack.c.b16 %v1325, %v1324
  %v1915 = vpack.c.b16 %v1327, %v1326
  %v1916 = vpack.c.b16 %v1329, %v1328
  %v1917 = vpack.c.b16 %v1331, %v1330
  %v1918 = vpack.c.b16 %v1333, %v1332
  %v1919 = vpack.c.b16 %v1335, %v1334
  %v1920 = vpack.c.b16 %v1337, %v1336
  %v1921 = vpack.c.b16 %v1339, %v1338
  %v1922 = vpack.c.b16 %v1341, %v1340
  %v1923 = vpack.c.b16 %v1343, %v1342
  %v1924 = vpack.c.b16 %v1345, %v1344
  %v1925 = vpack.c.b16 %v1347, %v1346
  %v1926 = vpack.c.b16 %v1349, %v1348
  %v1927 = vpack.c.b16 %v1351, %v1350
  %v1928 = vpack.c.b16 %v1353, %v1352
  %v1929 = vpack.c.b16 %v1355, %v1354
  %v1930 = vpack.c.b16 %v1357, %v1356
  %v1931 = vpack.c.b16 %v1359, %v1358
  %v1932 = vpack.c.b16 %v1361, %v1360
  %v1933 = vpack.c.b16 %v1363, %v1362
  %v1934 = vpack.c.b16 %v1365, %v1364
  %v1935 = vpack.c.b16 %v1367, %v1366
  %v1936 = vpack.c.b16 %v1369, %v1368
  %v1937 = vpack.c.b16 %v1371, %v1370
  %v1938 = vpack.c.b16 %v1373, %v1372
  %v1939 = vpack.c.b16 %v1375, %v1374
  %v1940 = vpack.c.b16 %v1377, %v1376
  %v1941 = vpack.c.b16 %v1379, %v1378
  %v1942 = vpack.c.b16 %v1381, %v1380
  %v1943 = vpack.c.b16 %v1383, %v1382
  %v1944 = vpack.c.b16 %v1385, %v1384
  %v1945 = vpack.c.b16 %v1387, %v1386
  %v1946 = vpack.c.b16 %v1389, %v1388
  %v1947 = vpack.c.b16 %v1391, %v1390
  %v1948 = vpack.c.b16 %v1393, %v1392
  %v1949 = vpack.c.b16 %v1395, %v1394
  %v1950 = vpack.c.b16 %v1397, %v1396
  %v1951 = vpack.c.b16 %v1399, %v1398
  %v1952 = vpack.c.b16 %v1401, %v1400
  %v1953 = vpack.c.b16 %v1403, %v1402
  %v1954 = vpack.c.b16 %v1405, %v1404
  %v1955 = vpack.c.b16 %v1407, %v1406
  %v1956 = vpack.c.b16 %v1409, %v1408
  %v1957 = vpack.c.b16 %v1411, %v1410
  %v1958 = vpack.c.b16 %v1413, %v1412
  %v1959 = vpack.c.b16 %v1415, %v1414
  %v1960 = vpack.c.b16 %v1417, %v1416
  %v1961 = vpack.c.b16 %v1419, %v1418
  %v1962 = vpack.c.b16 %v1421, %v1420
  %v1963 = vpack.c.b16 %v1423, %v1422
  %v1964 = vpack.c.b16 %v1425, %v1424
  %v1965 = vpack.c.b16 %v1427, %v1426
  %v1966 = vpack.c.b16 %v1429, %v1428
  %v1967 = vpack.c.b16 %v1431, %v1430
  %v1968 = vpack.c.b16 %v1433, %v1432
  %v1969 = vpack.c.b16 %v1435, %v1434
  %v1970 = vpack.c.b16 %v1437, %v1436
  %v1971 = vpack.c.b16 %v1439, %v1438
  %v1972 = vpack.c.b16 %v1441, %v1440
  %v1973 = vpack.c.b16 %v1443, %v1442
  %v1974 = vpack.c.b16 %v1445, %v1444
  %v1975 = vpack.c.b16 %v1447, %v1446
  %v1976 = vpack.c.b16 %v1449, %v1448
  %v1977 = vpack.c.b16 %v1451, %v1450
  %v1978 = vpack.c.b16 %v1453, %v1452
  %v1979 = vpack.c.b16 %v1455, %v1454
  %v1980 = vpack.c.b16 %v1457, %v1456
  %v1981 = vpack.c.b16 %v1459, %v1458
  %v1982 = vpack.c.b16 %v1461, %v1460
  %v1983 = vpack.c.b16 %v1463, %v1462
  %v1984 = vpack.c.b16 %v1465, %v1464
  %v1985 = vpack.c.b16 %v1467, %v1466
  %v1986 = vpack.c.b16 %v1469, %v1468
  %v1987 = vpack.c.b16 %v1471, %v1470
  %v1988 = vpack.c.b16 %v1473, %v1472
  %v1989 = vpack.c.b16 %v1475, %v1474
  %v1990 = vpack.c.b16 %v1477, %v1476
  %v1991 = vpack.c.b16 %v1479, %v1478
  %v1992 = vpack.c.b16 %v1481, %v1480
  %v1993 = vpack.c.b16 %v1483, %v1482
  %v1994 = vpack.c.b16 %v1485, %v1484
  %v1995 = vpack.c.b16 %v1487, %v1486
  %v1996 = vpack.c.b16 %v1489, %v1488
  %v1997 = vpack.c.b16 %v1491, %v1490
  %v1998 = vpack.c.b16 %v1493, %v1492
  %v1999 = vpack.c.b16 %v1495, %v1494
  %v2000 = vpack.c.b16 %v1497, %v1496
  %v2001 = vpack.c.b16 %v1499, %v1498
  %v2002 = vpack.c.b16 %v1501, %v1500
  %v2003 = vpack.c.b16 %v1503, %v1502
  %v2004 = vpack.c.b16 %v1505, %v1504
  %v2005 = vpack.c.b16 %v1507, %v1506
  %v2006 = vpack.c.b16 %v1509, %v1508
  %v2007 = vpack.c.b16 %v1511, %v1510
  %v2008 = vpack.c.b16 %v1513, %v1512
  %v2009 = vpack.c.b16 %v1515, %v1514
  %v2010 = vpack.c.b16 %v1517, %v1516
  %v2011 = vpack.c.b16 %v1519, %v1518
  %v2012 = vpack.c.b16 %v1521, %v1520
  %v2013 = vpack.c.b16 %v1523, %v1522
  %v2014 = vpack.c.b16 %v1525, %v1524
  %v2015 = vpack.c.b16 %v1527, %v1526
  %v2016 = vpack.c.b16 %v1529, %v1528
  %v2017 = vpack.c.b16 %v1531, %v1530
  %v2018 = vpack.c.b16 %v1533, %v1532
  %v2019 = vpack.c.b16 %v1535, %v1534
  %v2020 = vpack.c.b16 %v1537, %v1536
  %v2021 = vpack.c.b16 %v1539, %v1538
  %v2022 = vpack.c.b16 %v1541, %v1540
  %v2023 = vpack.c.b16 %v1543, %v1542
  %v2024 = vpack.c.b16 %v1545, %v1544
  %v2025 = vpack.c.b16 %v1547, %v1546
  %v2026 = vpack.c.b16 %v1549, %v1548
  %v2027 = vpack.c.b16 %v1551, %v1550
  %v2028 = vpack.c.b16 %v1553, %v1552
  %v2029 = vpack.c.b16 %v1555, %v1554
  %v2030 = vpack.c.b16 %v1557, %v1556
  %v2031 = vpack.c.b16 %v1559, %v1558
  %v2032 = vpack.c.b16 %v1561, %v1560
  %v2033 = vpack.c.b16 %v1563, %v1562
  %v2034 = vpack.c.b16 %v1565, %v1564
  %v2035 = vpack.c.b16 %v1567, %v1566
  %v2036 = vpack.c.b16 %v1569, %v1568
  %v2037 = vpack.c.b16 %v1571, %v1570
  %v2038 = vpack.c.b16 %v1573, %v1572
  %v2039 = vpack.c.b16 %v1575, %v1574
  %v2040 = vpack.c.b16 %v1577, %v1576
  %v2041 = vpack.c.b16 %v1579, %v1578
  %v2042 = vpack.c.b16 %v1581, %v1580
  %v2043 = vpack.c.b16 %v1583, %v1582
  %v2044 = vpack.c.b16 %v1585, %v1584
  %v2045 = vpack.c.b16 %v1587, %v1586
  %v2046 = vpack.c.b16 %v1589, %v1588
  %v2047 = vpack.c.b16 %v1591, %v1590
  %v2048 = vpack.c.b16 %v1593, %v1592
  %v2049 = vpack.c.b16 %v1595, %v1594
  %v2050 = vpack.c.b16 %v1597, %v1596
  %v2051 = vpack.c.b16 %v1599, %v1598
  %v2052 = vpack.c.b16 %v1601, %v1600
  %v2053 = vpack.c.b16 %v1603, %v1602
  %v2054 = vpack.c.b16 %v1605, %v1604
  %v2055 = vpack.c.b16 %v1607, %v1606
  %v2056 = vpack.c.b16 %v1609, %v1608
  %v2057 = vpack.c.b16 %v1611, %v1610
  %v2058 = vpack.c.b16 %v1613, %v1612
  %v2059 = vpack.c.b16 %v1615, %v1614
  %v2060 = vpack.c.b16 %v1617, %v1616
  %v2061 = vpack.c.b16 %v1619, %v1618
  %v2062 = vpack.c.b16 %v1621, %v1620
  %v2063 = vpack.c.b16 %v1623, %v1622
  %v2064 = vpack.c.b16 %v1625, %v1624
  %v2065 = vpack.c.b16 %v1627, %v1626
  %v2066 = vpack.c.b16 %v1629, %v1628
  %v2067 = vpack.c.b16 %v1631, %v1630
  %v2068 = vpack.c.b16 %v1633, %v1632
  %v2069 = vpack.c.b16 %v1635, %v1634
  %v2070 = vpack.c.b16 %v1637, %v1636
  %v2071 = vpack.c.b16 %v1639, %v1638
  %v2072 = vpack.c.b16 %v1641, %v1640
  %v2073 = vpack.c.b16 %v1643, %v1642
  %v2074 = vpack.c.b16 %v1645, %v1644
  %v2075 = vpack.c.b16 %v1647, %v1646
  %v2076 = vpack.c.b16 %v1649, %v1648
  %v2077 = vpack.c.b16 %v1651, %v1650
  %v2078 = vpack.c.b16 %v1653, %v1652
  %v2079 = vpack.c.b16 %v1655, %v1654
  %v2080 = vpack.c.b16 %v1657, %v1656
  %v2081 = vpack.c.b16 %v1659, %v1658
  %v2082 = vpack.c.b16 %v1661, %v1660
  %v2083 = vpack.c.b16 %v1663, %v1662
  %v2084 = vpack.c.b16 %v1665, %v1664
  %v2085 = vpack.c.b16 %v1667, %v1666
  %v2086 = vpack.c.b16 %v1669, %v1668
  %v2087 = vpack.c.b16 %v1671, %v1670
  %v2088 = vpack.c.b16 %v1673, %v1672
  %v2089 = vpack.c.b16 %v1675, %v1674
  %v2090 = vpack.c.b16 %v1677, %v1676
  %v2091 = vpack.c.b16 %v1679, %v1678
  %v2092 = vpack.c.b16 %v1681, %v1680
  %v2093 = vpack.c.b16 %v1683, %v1682
  %v2094 = vpack.c.b16 %v1685, %v1684
  %v2095 = vpack.c.b16 %v1687, %v1686
  %v2096 = vpack.c.b16 %v1689, %v1688
  %v2097 = vpack.c.b16 %v1691, %v1690
  %v2098 = vpack.c.b16 %v1693, %v1692
  %v2099 = vpack.c.b16 %v1695, %v1694
  %v2100 = vpack.c.b16 %v1697, %v1696
  %v2101 = vpack.c.b16 %v1699, %v1698
  %v2102 = vpack.c.b16 %v1701, %v1700
  %v2103 = vpack.c.b16 %v1703, %v1702
  %v2104 = vpack.c.b16 %v1705, %v1704
  %v2105 = vpack.c.b16 %v1707, %v1706
  %v2106 = vpack.c.b16 %v1709, %v1708
  %v2107 = vpack.c.b16 %v1711, %v1710
  %v2108 = vpack.c.b16 %v1713, %v1712
  %v2109 = vpack.c.b16 %v1715, %v1714
  %v2110 = vpack.c.b16 %v1717, %v1716
  %v2111 = vpack.c.b16 %v1719, %v1718
  %v2112 = vpack.c.b16 %v1721, %v1720
  %v2113 = vpack.c.b16 %v1723, %v1722
  %v2114 = vpack.c.b16 %v1725, %v1724
  %v2115 = vpack.c.b16 %v1727, %v1726
  %v2116 = vpack.c.b16 %v1729, %v1728
  %v2117 = vpack.c.b16 %v1731, %v1730
  %v2118 = vpack.c.b16 %v1733, %v1732
  %v2119 = vpack.c.b16 %v1735, %v1734
  %v2120 = vpack.c.b16 %v1737, %v1736
  %v2121 = vpack.c.b16 %v1739, %v1738
  %v2122 = vpack.c.b16 %v1741, %v1740
  %v2123 = vpack.c.b16 %v1743, %v1742
  %v2124 = vpack.c.b16 %v1745, %v1744
  %v2125 = vpack.c.b16 %v1747, %v1746
  %v2126 = vpack.c.b16 %v1749, %v1748
  %v2127 = vpack.c.b16 %v1751, %v1750
  %v2128 = vpack.c.b16 %v1753, %v1752
  %v2129 = vpack.c.b16 %v1755, %v1754
  %v2130 = vpack.c.b16 %v1757, %v1756
  %v2131 = vpack.c.b16 %v1759, %v1758
  %v2132 = vpack.c.b16 %v1761, %v1760
  %v2133 = vpack.c.b16 %v1763, %v1762
  %v2134 = vpack.c.b16 %v1765, %v1764
  %v2135 = vpack.c.b16 %v1767, %v1766
  %v2136 = vpack.c.b16 %v1769, %v1768
  %v2137 = vpack.c.b16 %v1771, %v1770
  %v2138 = vpack.c.b16 %v1773, %v1772
  %v2139 = vpack.c.b16 %v1775, %v1774
  %v2140 = vpack.c.b16 %v1777, %v1776
  %v2141 = vpack.c.b16 %v1779, %v1778
  %v2142 = vpack.c.b16 %v1781, %v1780
  %v2143 = vpack.c.b16 %v1783, %v1782
  %v2144 = vpack.c.b16 %v1785, %v1784
  %v2145 = vpack.c.b16 %v1787, %v1786
  %v2146 = vpack.c.b16 %v1789, %v1788
  %v2147 = vpack.c.b16 %v1791, %v1790
  %v2148 = vpack.c.b16 %v1793, %v1792
  %v2149 = vpack.c.b16 %v1795, %v1794
  %v2150 = vpack.c.b16 %v1797, %v1796
  %v2151 = vpack.c.b16 %v1799, %v1798
  %v2152 = vpack.c.b16 %v1801, %v1800
  %v2153 = vpack.c.b16 %v1803, %v1802
  %v2154 = vpack.c.b16 %v1805, %v1804
  %v2155 = vpack.c.b16 %v1807, %v1806
  %v2156 = vpack.c.b16 %v1809, %v1808
  %v2157 = vpack.c.b16 %v1811, %v1810
  %v2158 = vpack.c.b16 %v1813, %v1812
  %v2159 = vpack.c.b16 %v1815, %v1814
  %v2160 = vpack.c.b16 %v1817, %v1816
  %v2161 = vpack.c.b16 %v1819, %v1818
  %v2162 = vpack.c.b16 %v1821, %v1820
  %v2163 = vpack.c.b16 %v1823, %v1822
  %v2164 = vpack.c.b16 %v1825, %v1824
  %v2165 = vpack.c.b16 %v1827, %v1826
  %v2166 = vpack.c.b16 %v1829, %v1828
  %v2167 = vpack.c.b16 %v1831, %v1830
  %v2168 = vpack.c.b16 %v1833, %v1832
  %v2169 = vpack.c.b16 %v1835, %v1834
  %v2170 = vpack.c.b16 %v1837, %v1836
  %v2171 = vpack.c.b16 %v1839, %v1838
  %v2172 = vpack.c.b16 %v1841, %v1840
  %v2173 = vpack.c.b16 %v1843, %v1842
  %v2174 = vpack.c.b16 %v1845, %v1844
  %v2175 = vpack.c.b16 %v1847, %v1846
  %v2176 = vpack.c.b16 %v1849, %v1848
  %v2177 = vpack.c.b16 %v1851, %v1850
  %v2178 = vpack.c.b16 %v1853, %v1852
  %v2179 = vpack.c.b16 %v1855, %v1854
  %v2180 = vpack.c.b16 %v1857, %v1856
  %v2181 = vpack.c.b16 %v1859, %v1858
  %v2182 = vpack.c.b16 %v1861, %v1860
  %v2183 = vpack.c.b16 %v1863, %v1862
  %v2184 = vpack.c.b16 %v1865, %v1864
  %v2185 = vpack.c.b16 %v1867, %v1866
  %v2186 = vpack.c.b16 %v1869, %v1868
  %v2187 = vpack.c.b16 %v1871, %v1870
  %v2188 = vpack.c.b16 %v1873, %v1872
  %v2189 = vpack.c.b16 %v1875, %v1874
  %v2190 = vpack.c.b16 %v1877, %v1876
  %v2191 = vpack.c.b16 %v1879, %v1878
  %v2192 = vpack.c.b16 %v1881, %v1880
  %v2193 = vpack.c.b16 %v1883, %v1882
  %v2194 = vpack.c.b16 %v1885, %v1884
  %v2195 = vpack.c.b16 %v1887, %v1886
  %v2196 = vpack.c.b16 %v1889, %v1888
  %v2197 = vpack.c.b16 %v1891, %v1890
  %v2198 = vpack.c.b16 %v1893, %v1892
  %v2199 = vpack.c.b16 %v1895, %v1894
  %v2200 = vpack.c.b16 %v1897, %v1896
  %v2201 = vpack.c.b16 %v1899, %v1898
  %v2202 = vpack.c.b16 %v1901, %v1900
  %v2203 = vpack.c.b16 %v1903, %v1902
  %vm2504 = vcmask 523264
  %v2506 = vsel %vm2504, %v96, 0
  %2508 = vmatprep.subr.bf16.mxu0 0
  %2509 = vmatpush1.bf16.msra.mxu0 %v1904
  %2510 = vmatprep.subr.bf16.mxu0 0
  %2511 = vmatpush1.bf16.msra.mxu0 %v1905
  %2512 = vmatprep.subr.bf16.mxu0 0
  %2513 = vmatpush1.bf16.msra.mxu0 %v1906
  %2514 = vmatprep.subr.bf16.mxu0 0
  %2515 = vmatpush1.bf16.msra.mxu0 %v1907
  %2516 = vmatprep.subr.bf16.mxu0 0
  %2517 = vmatpush1.bf16.msra.mxu0 %v1908
  %2518 = vmatprep.subr.bf16.mxu0 0
  %2519 = vmatpush1.bf16.msra.mxu0 %v1909
  %2520 = vmatprep.subr.bf16.mxu0 0
  %2521 = vmatpush1.bf16.msra.mxu0 %v1910
  %2522 = vmatprep.subr.bf16.mxu0 0
  %2523 = vmatpush1.bf16.msra.mxu0 %v1911
  %2524 = vmatprep.subr.bf16.mxu0 0
  %2525 = vmatpush1.bf16.msra.mxu0 %v1912
  %2526 = vmatprep.subr.bf16.mxu0 0
  %2527 = vmatpush1.bf16.msra.mxu0 %v1913
  %2528 = vmatprep.subr.bf16.mxu0 0
  %2529 = vmatpush1.bf16.msra.mxu0 %v1914
  %2530 = vmatprep.subr.bf16.mxu0 0
  %2531 = vmatpush1.bf16.msra.mxu0 %v1915
  %2532 = vmatprep.subr.bf16.mxu0 0
  %2533 = vmatpush1.bf16.msra.mxu0 %v1916
  %2534 = vmatprep.subr.bf16.mxu0 0
  %2535 = vmatpush1.bf16.msra.mxu0 %v1917
  %2536 = vmatprep.subr.bf16.mxu0 0
  %2537 = vmatpush1.bf16.msra.mxu0 %v1918
  %2538 = vmatprep.subr.bf16.mxu0 0
  %2539 = vmatpush1.bf16.msra.mxu0 %v1919
  %2540 = vmatprep.mubr.bf16.mxu0 %v60
  %2541 = vmatmul.mubr.bf16.gmra.mrb[0].mxu0 %v59
  %v2542 = vpop.f32.mrb[0].mxu0
  %v2543 = vadd.f32 %v702, %v2542
  %v2544 = vpop.f32.mrb[0].mxu0
  %v2545 = vpop.f32.mrb[0].mxu0
  %v2546 = vpop.f32.mrb[0].mxu0
  %2547 = vdwg.mxu0
  %2548 = vmatprep.subr.bf16.mxu0 0
  %2549 = vmatpush1.bf16.msra.mxu0 %v1920
  %2550 = vmatprep.subr.bf16.mxu0 0
  %2551 = vmatpush1.bf16.msra.mxu0 %v1921
  %2552 = vmatprep.subr.bf16.mxu0 0
  %2553 = vmatpush1.bf16.msra.mxu0 %v1922
  %2554 = vmatprep.subr.bf16.mxu0 0
  %2555 = vmatpush1.bf16.msra.mxu0 %v1923
  %2556 = vmatprep.subr.bf16.mxu0 0
  %2557 = vmatpush1.bf16.msra.mxu0 %v1924
  %2558 = vmatprep.subr.bf16.mxu0 0
  %2559 = vmatpush1.bf16.msra.mxu0 %v1925
  %2560 = vmatprep.subr.bf16.mxu0 0
  %2561 = vmatpush1.bf16.msra.mxu0 %v1926
  %2562 = vmatprep.subr.bf16.mxu0 0
  %2563 = vmatpush1.bf16.msra.mxu0 %v1927
  %2564 = vmatprep.subr.bf16.mxu0 0
  %2565 = vmatpush1.bf16.msra.mxu0 %v1928
  %2566 = vmatprep.subr.bf16.mxu0 0
  %2567 = vmatpush1.bf16.msra.mxu0 %v1929
  %2568 = vmatprep.subr.bf16.mxu0 0
  %2569 = vmatpush1.bf16.msra.mxu0 %v1930
  %2570 = vmatprep.subr.bf16.mxu0 0
  %2571 = vmatpush1.bf16.msra.mxu0 %v1931
  %2572 = vmatprep.subr.bf16.mxu0 0
  %2573 = vmatpush1.bf16.msra.mxu0 %v1932
  %2574 = vmatprep.subr.bf16.mxu0 0
  %2575 = vmatpush1.bf16.msra.mxu0 %v1933
  %2576 = vmatprep.subr.bf16.mxu0 0
  %2577 = vmatpush1.bf16.msra.mxu0 %v1934
  %2578 = vmatprep.subr.bf16.mxu0 0
  %2579 = vmatpush1.bf16.msra.mxu0 %v1935
  %2580 = vmatprep.mubr.bf16.mxu0 %v62
  %2581 = vmatmul.mubr.bf16.gmra.mrb[0].mxu0 %v61
  %v2582 = vpop.f32.mrb[0].mxu0
  %v2583 = vadd.f32 %v2543, %v2582
  %v2584 = vpop.f32.mrb[0].mxu0
  %v2585 = vpop.f32.mrb[0].mxu0
  %v2586 = vpop.f32.mrb[0].mxu0
  %2587 = vdwg.mxu0
  %2588 = vmatprep.subr.bf16.mxu0 0
  %2589 = vmatpush1.bf16.msra.mxu0 %v1936
  %2590 = vmatprep.subr.bf16.mxu0 0
  %2591 = vmatpush1.bf16.msra.mxu0 %v1937
  %2592 = vmatprep.subr.bf16.mxu0 0
  %2593 = vmatpush1.bf16.msra.mxu0 %v1938
  %2594 = vmatprep.subr.bf16.mxu0 0
  %2595 = vmatpush1.bf16.msra.mxu0 %v1939
  %2596 = vmatprep.subr.bf16.mxu0 0
  %2597 = vmatpush1.bf16.msra.mxu0 %v1940
  %2598 = vmatprep.subr.bf16.mxu0 0
  %2599 = vmatpush1.bf16.msra.mxu0 %v1941
  %2600 = vmatprep.subr.bf16.mxu0 0
  %2601 = vmatpush1.bf16.msra.mxu0 %v1942
  %2602 = vmatprep.subr.bf16.mxu0 0
  %2603 = vmatpush1.bf16.msra.mxu0 %v1943
  %2604 = vmatprep.subr.bf16.mxu0 0
  %2605 = vmatpush1.bf16.msra.mxu0 %v1944
  %2606 = vmatprep.subr.bf16.mxu0 0
  %2607 = vmatpush1.bf16.msra.mxu0 %v1945
  %2608 = vmatprep.subr.bf16.mxu0 0
  %2609 = vmatpush1.bf16.msra.mxu0 %v1946
  %2610 = vmatprep.subr.bf16.mxu0 0
  %2611 = vmatpush1.bf16.msra.mxu0 %v1947
  %2612 = vmatprep.subr.bf16.mxu0 0
  %2613 = vmatpush1.bf16.msra.mxu0 %v1948
  %2614 = vmatprep.subr.bf16.mxu0 0
  %2615 = vmatpush1.bf16.msra.mxu0 %v1949
  %2616 = vmatprep.subr.bf16.mxu0 0
  %2617 = vmatpush1.bf16.msra.mxu0 %v1950
  %2618 = vmatprep.subr.bf16.mxu0 0
  %2619 = vmatpush1.bf16.msra.mxu0 %v1951
  %2620 = vmatprep.mubr.bf16.mxu0 %v64
  %2621 = vmatmul.mubr.bf16.gmra.mrb[0].mxu0 %v63
  %v2622 = vpop.f32.mrb[0].mxu0
  %v2623 = vadd.f32 %v2583, %v2622
  %v2624 = vpop.f32.mrb[0].mxu0
  %v2625 = vpop.f32.mrb[0].mxu0
  %v2626 = vpop.f32.mrb[0].mxu0
  %2627 = vdwg.mxu0
  %2628 = vmatprep.subr.bf16.mxu0 0
  %2629 = vmatpush1.bf16.msra.mxu0 %v1952
  %2630 = vmatprep.subr.bf16.mxu0 0
  %2631 = vmatpush1.bf16.msra.mxu0 %v1953
  %2632 = vmatprep.subr.bf16.mxu0 0
  %2633 = vmatpush1.bf16.msra.mxu0 %v1954
  %2634 = vmatprep.subr.bf16.mxu0 0
  %2635 = vmatpush1.bf16.msra.mxu0 %v1955
  %2636 = vmatprep.subr.bf16.mxu0 0
  %2637 = vmatpush1.bf16.msra.mxu0 %v1956
  %2638 = vmatprep.subr.bf16.mxu0 0
  %2639 = vmatpush1.bf16.msra.mxu0 %v1957
  %2640 = vmatprep.subr.bf16.mxu0 0
  %2641 = vmatpush1.bf16.msra.mxu0 %v1958
  %2642 = vmatprep.subr.bf16.mxu0 0
  %2643 = vmatpush1.bf16.msra.mxu0 %v1959
  %2644 = vmatprep.subr.bf16.mxu0 0
  %2645 = vmatpush1.bf16.msra.mxu0 %v1960
  %2646 = vmatprep.subr.bf16.mxu0 0
  %2647 = vmatpush1.bf16.msra.mxu0 %v1961
  %2648 = vmatprep.subr.bf16.mxu0 0
  %2649 = vmatpush1.bf16.msra.mxu0 %v1962
  %2650 = vmatprep.subr.bf16.mxu0 0
  %2651 = vmatpush1.bf16.msra.mxu0 %v1963
  %2652 = vmatprep.subr.bf16.mxu0 0
  %2653 = vmatpush1.bf16.msra.mxu0 %v1964
  %2654 = vmatprep.subr.bf16.mxu0 0
  %2655 = vmatpush1.bf16.msra.mxu0 %v1965
  %2656 = vmatprep.subr.bf16.mxu0 0
  %2657 = vmatpush1.bf16.msra.mxu0 %v1966
  %2658 = vmatprep.subr.bf16.mxu0 0
  %2659 = vmatpush1.bf16.msra.mxu0 %v1967
  %2660 = vmatprep.mubr.bf16.mxu0 %v66
  %2661 = vmatmul.mubr.bf16.gmra.mrb[0].mxu0 %v65
  %v2662 = vpop.f32.mrb[0].mxu0
  %v2663 = vadd.f32 %v2623, %v2662
  %v2664 = vpop.f32.mrb[0].mxu0
  %v2665 = vpop.f32.mrb[0].mxu0
  %v2666 = vpop.f32.mrb[0].mxu0
  %2667 = vdwg.mxu0
  %2668 = vmatprep.subr.bf16.mxu0 0
  %2669 = vmatpush1.bf16.msra.mxu0 %v1968
  %2670 = vmatprep.subr.bf16.mxu0 0
  %2671 = vmatpush1.bf16.msra.mxu0 %v1969
  %2672 = vmatprep.subr.bf16.mxu0 0
  %2673 = vmatpush1.bf16.msra.mxu0 %v1970
  %2674 = vmatprep.subr.bf16.mxu0 0
  %2675 = vmatpush1.bf16.msra.mxu0 %v1971
  %2676 = vmatprep.subr.bf16.mxu0 0
  %2677 = vmatpush1.bf16.msra.mxu0 %v1972
  %2678 = vmatprep.subr.bf16.mxu0 0
  %2679 = vmatpush1.bf16.msra.mxu0 %v1973
  %2680 = vmatprep.subr.bf16.mxu0 0
  %2681 = vmatpush1.bf16.msra.mxu0 %v1974
  %2682 = vmatprep.subr.bf16.mxu0 0
  %2683 = vmatpush1.bf16.msra.mxu0 %v1975
  %2684 = vmatprep.subr.bf16.mxu0 0
  %2685 = vmatpush1.bf16.msra.mxu0 %v1976
  %2686 = vmatprep.subr.bf16.mxu0 0
  %2687 = vmatpush1.bf16.msra.mxu0 %v1977
  %2688 = vmatprep.subr.bf16.mxu0 0
  %2689 = vmatpush1.bf16.msra.mxu0 %v1978
  %2690 = vmatprep.subr.bf16.mxu0 0
  %2691 = vmatpush1.bf16.msra.mxu0 %v1979
  %2692 = vmatprep.subr.bf16.mxu0 0
  %2693 = vmatpush1.bf16.msra.mxu0 %v1980
  %2694 = vmatprep.subr.bf16.mxu0 0
  %2695 = vmatpush1.bf16.msra.mxu0 %v1981
  %2696 = vmatprep.subr.bf16.mxu0 0
  %2697 = vmatpush1.bf16.msra.mxu0 %v1982
  %2698 = vmatprep.subr.bf16.mxu0 0
  %2699 = vmatpush1.bf16.msra.mxu0 %v1983
  %2700 = vmatprep.mubr.bf16.mxu0 %v68
  %2701 = vmatmul.mubr.bf16.gmra.mrb[0].mxu0 %v67
  %v2702 = vpop.f32.mrb[0].mxu0
  %v2703 = vadd.f32 %v2663, %v2702
  %v2704 = vpop.f32.mrb[0].mxu0
  %v2705 = vpop.f32.mrb[0].mxu0
  %v2706 = vpop.f32.mrb[0].mxu0
  %2707 = vdwg.mxu0
  %2708 = vmatprep.subr.bf16.mxu0 0
  %2709 = vmatpush1.bf16.msra.mxu0 %v1984
  %2710 = vmatprep.subr.bf16.mxu0 0
  %2711 = vmatpush1.bf16.msra.mxu0 %v1985
  %2712 = vmatprep.subr.bf16.mxu0 0
  %2713 = vmatpush1.bf16.msra.mxu0 %v1986
  %2714 = vmatprep.subr.bf16.mxu0 0
  %2715 = vmatpush1.bf16.msra.mxu0 %v1987
  %2716 = vmatprep.subr.bf16.mxu0 0
  %2717 = vmatpush1.bf16.msra.mxu0 %v1988
  %2718 = vmatprep.subr.bf16.mxu0 0
  %2719 = vmatpush1.bf16.msra.mxu0 %v1989
  %2720 = vmatprep.subr.bf16.mxu0 0
  %2721 = vmatpush1.bf16.msra.mxu0 %v1990
  %2722 = vmatprep.subr.bf16.mxu0 0
  %2723 = vmatpush1.bf16.msra.mxu0 %v1991
  %2724 = vmatprep.subr.bf16.mxu0 0
  %2725 = vmatpush1.bf16.msra.mxu0 %v1992
  %2726 = vmatprep.subr.bf16.mxu0 0
  %2727 = vmatpush1.bf16.msra.mxu0 %v1993
  %2728 = vmatprep.subr.bf16.mxu0 0
  %2729 = vmatpush1.bf16.msra.mxu0 %v1994
  %2730 = vmatprep.subr.bf16.mxu0 0
  %2731 = vmatpush1.bf16.msra.mxu0 %v1995
  %2732 = vmatprep.subr.bf16.mxu0 0
  %2733 = vmatpush1.bf16.msra.mxu0 %v1996
  %2734 = vmatprep.subr.bf16.mxu0 0
  %2735 = vmatpush1.bf16.msra.mxu0 %v1997
  %2736 = vmatprep.subr.bf16.mxu0 0
  %2737 = vmatpush1.bf16.msra.mxu0 %v1998
  %2738 = vmatprep.subr.bf16.mxu0 0
  %2739 = vmatpush1.bf16.msra.mxu0 %v1999
  %2740 = vmatprep.mubr.bf16.mxu0 %v70
  %2741 = vmatmul.mubr.bf16.gmra.mrb[0].mxu0 %v69
  %v2742 = vpop.f32.mrb[0].mxu0
  %v2743 = vadd.f32 %v2703, %v2742
  %v2744 = vpop.f32.mrb[0].mxu0
  %v2745 = vpop.f32.mrb[0].mxu0
  %v2746 = vpop.f32.mrb[0].mxu0
  %2747 = vdwg.mxu0
  %2748 = vmatprep.subr.bf16.mxu0 0
  %2749 = vmatpush1.bf16.msra.mxu0 %v2000
  %2750 = vmatprep.subr.bf16.mxu0 0
  %2751 = vmatpush1.bf16.msra.mxu0 %v2001
  %2752 = vmatprep.subr.bf16.mxu0 0
  %2753 = vmatpush1.bf16.msra.mxu0 %v2002
  %2754 = vmatprep.subr.bf16.mxu0 0
  %2755 = vmatpush1.bf16.msra.mxu0 %v2003
  %2756 = vmatprep.subr.bf16.mxu0 0
  %2757 = vmatpush1.bf16.msra.mxu0 %v2004
  %2758 = vmatprep.subr.bf16.mxu0 0
  %2759 = vmatpush1.bf16.msra.mxu0 %v2005
  %2760 = vmatprep.subr.bf16.mxu0 0
  %2761 = vmatpush1.bf16.msra.mxu0 %v2006
  %2762 = vmatprep.subr.bf16.mxu0 0
  %2763 = vmatpush1.bf16.msra.mxu0 %v2007
  %2764 = vmatprep.subr.bf16.mxu0 0
  %2765 = vmatpush1.bf16.msra.mxu0 %v2008
  %2766 = vmatprep.subr.bf16.mxu0 0
  %2767 = vmatpush1.bf16.msra.mxu0 %v2009
  %2768 = vmatprep.subr.bf16.mxu0 0
  %2769 = vmatpush1.bf16.msra.mxu0 %v2010
  %2770 = vmatprep.subr.bf16.mxu0 0
  %2771 = vmatpush1.bf16.msra.mxu0 %v2011
  %2772 = vmatprep.subr.bf16.mxu0 0
  %2773 = vmatpush1.bf16.msra.mxu0 %v2012
  %2774 = vmatprep.subr.bf16.mxu0 0
  %2775 = vmatpush1.bf16.msra.mxu0 %v2013
  %2776 = vmatprep.subr.bf16.mxu0 0
  %2777 = vmatpush1.bf16.msra.mxu0 %v2014
  %2778 = vmatprep.subr.bf16.mxu0 0
  %2779 = vmatpush1.bf16.msra.mxu0 %v2015
  %2780 = vmatprep.mubr.bf16.mxu0 %v72
  %2781 = vmatmul.mubr.bf16.gmra.mrb[0].mxu0 %v71
  %v2782 = vpop.f32.mrb[0].mxu0
  %v2783 = vadd.f32 %v2743, %v2782
  %v2784 = vpop.f32.mrb[0].mxu0
  %v2785 = vpop.f32.mrb[0].mxu0
  %v2786 = vpop.f32.mrb[0].mxu0
  %2787 = vdwg.mxu0
  %2788 = vmatprep.subr.bf16.mxu0 0
  %2789 = vmatpush1.bf16.msra.mxu0 %v2016
  %2790 = vmatprep.subr.bf16.mxu0 0
  %2791 = vmatpush1.bf16.msra.mxu0 %v2017
  %2792 = vmatprep.subr.bf16.mxu0 0
  %2793 = vmatpush1.bf16.msra.mxu0 %v2018
  %2794 = vmatprep.subr.bf16.mxu0 0
  %2795 = vmatpush1.bf16.msra.mxu0 %v2019
  %2796 = vmatprep.subr.bf16.mxu0 0
  %2797 = vmatpush1.bf16.msra.mxu0 %v2020
  %2798 = vmatprep.subr.bf16.mxu0 0
  %2799 = vmatpush1.bf16.msra.mxu0 %v2021
  %2800 = vmatprep.subr.bf16.mxu0 0
  %2801 = vmatpush1.bf16.msra.mxu0 %v2022
  %2802 = vmatprep.subr.bf16.mxu0 0
  %2803 = vmatpush1.bf16.msra.mxu0 %v2023
  %2804 = vmatprep.subr.bf16.mxu0 0
  %2805 = vmatpush1.bf16.msra.mxu0 %v2024
  %2806 = vmatprep.subr.bf16.mxu0 0
  %2807 = vmatpush1.bf16.msra.mxu0 %v2025
  %2808 = vmatprep.subr.bf16.mxu0 0
  %2809 = vmatpush1.bf16.msra.mxu0 %v2026
  %2810 = vmatprep.subr.bf16.mxu0 0
  %2811 = vmatpush1.bf16.msra.mxu0 %v2027
  %2812 = vmatprep.subr.bf16.mxu0 0
  %2813 = vmatpush1.bf16.msra.mxu0 %v2028
  %2814 = vmatprep.subr.bf16.mxu0 0
  %2815 = vmatpush1.bf16.msra.mxu0 %v2029
  %2816 = vmatprep.subr.bf16.mxu0 0
  %2817 = vmatpush1.bf16.msra.mxu0 %v2030
  %2818 = vmatprep.subr.bf16.mxu0 0
  %2819 = vmatpush1.bf16.msra.mxu0 %v2031
  %2820 = vmatprep.mubr.bf16.mxu0 %v74
  %2821 = vmatmul.mubr.bf16.gmra.mrb[0].mxu0 %v73
  %v2822 = vpop.f32.mrb[0].mxu0
  %v2823 = vadd.f32 %v2783, %v2822
  %v2824 = vpop.f32.mrb[0].mxu0
  %v2825 = vpop.f32.mrb[0].mxu0
  %v2826 = vpop.f32.mrb[0].mxu0
  %2827 = vdwg.mxu0
  %2828 = vmatprep.subr.bf16.mxu0 0
  %2829 = vmatpush1.bf16.msra.mxu0 %v2032
  %2830 = vmatprep.subr.bf16.mxu0 0
  %2831 = vmatpush1.bf16.msra.mxu0 %v2033
  %2832 = vmatprep.subr.bf16.mxu0 0
  %2833 = vmatpush1.bf16.msra.mxu0 %v2034
  %2834 = vmatprep.subr.bf16.mxu0 0
  %2835 = vmatpush1.bf16.msra.mxu0 %v2035
  %2836 = vmatprep.subr.bf16.mxu0 0
  %2837 = vmatpush1.bf16.msra.mxu0 %v2036
  %2838 = vmatprep.subr.bf16.mxu0 0
  %2839 = vmatpush1.bf16.msra.mxu0 %v2037
  %2840 = vmatprep.subr.bf16.mxu0 0
  %2841 = vmatpush1.bf16.msra.mxu0 %v2038
  %2842 = vmatprep.subr.bf16.mxu0 0
  %2843 = vmatpush1.bf16.msra.mxu0 %v2039
  %2844 = vmatprep.subr.bf16.mxu0 0
  %2845 = vmatpush1.bf16.msra.mxu0 %v2040
  %2846 = vmatprep.subr.bf16.mxu0 0
  %2847 = vmatpush1.bf16.msra.mxu0 %v2041
  %2848 = vmatprep.subr.bf16.mxu0 0
  %2849 = vmatpush1.bf16.msra.mxu0 %v2042
  %2850 = vmatprep.subr.bf16.mxu0 0
  %2851 = vmatpush1.bf16.msra.mxu0 %v2043
  %2852 = vmatprep.subr.bf16.mxu0 0
  %2853 = vmatpush1.bf16.msra.mxu0 %v2044
  %2854 = vmatprep.subr.bf16.mxu0 0
  %2855 = vmatpush1.bf16.msra.mxu0 %v2045
  %2856 = vmatprep.subr.bf16.mxu0 0
  %2857 = vmatpush1.bf16.msra.mxu0 %v2046
  %2858 = vmatprep.subr.bf16.mxu0 0
  %2859 = vmatpush1.bf16.msra.mxu0 %v2047
  %2860 = vmatprep.mubr.bf16.mxu0 %v76
  %2861 = vmatmul.mubr.bf16.gmra.mrb[0].mxu0 %v75
  %v2862 = vpop.f32.mrb[0].mxu0
  %v2863 = vadd.f32 %v2823, %v2862
  %v2864 = vpop.f32.mrb[0].mxu0
  %v2865 = vpop.f32.mrb[0].mxu0
  %v2866 = vpop.f32.mrb[0].mxu0
  %2867 = vdwg.mxu0
  %2868 = vmatprep.subr.bf16.mxu0 0
  %2869 = vmatpush1.bf16.msra.mxu0 %v2048
  %2870 = vmatprep.subr.bf16.mxu0 0
  %2871 = vmatpush1.bf16.msra.mxu0 %v2049
  %2872 = vmatprep.subr.bf16.mxu0 0
  %2873 = vmatpush1.bf16.msra.mxu0 %v2050
  %2874 = vmatprep.subr.bf16.mxu0 0
  %2875 = vmatpush1.bf16.msra.mxu0 %v2051
  %2876 = vmatprep.subr.bf16.mxu0 0
  %2877 = vmatpush1.bf16.msra.mxu0 %v2052
  %2878 = vmatprep.subr.bf16.mxu0 0
  %2879 = vmatpush1.bf16.msra.mxu0 %v2053
  %2880 = vmatprep.subr.bf16.mxu0 0
  %2881 = vmatpush1.bf16.msra.mxu0 %v2054
  %2882 = vmatprep.subr.bf16.mxu0 0
  %2883 = vmatpush1.bf16.msra.mxu0 %v2055
  %2884 = vmatprep.subr.bf16.mxu0 0
  %2885 = vmatpush1.bf16.msra.mxu0 %v2056
  %2886 = vmatprep.subr.bf16.mxu0 0
  %2887 = vmatpush1.bf16.msra.mxu0 %v2057
  %2888 = vmatprep.subr.bf16.mxu0 0
  %2889 = vmatpush1.bf16.msra.mxu0 %v2058
  %2890 = vmatprep.subr.bf16.mxu0 0
  %2891 = vmatpush1.bf16.msra.mxu0 %v2059
  %2892 = vmatprep.subr.bf16.mxu0 0
  %2893 = vmatpush1.bf16.msra.mxu0 %v2060
  %2894 = vmatprep.subr.bf16.mxu0 0
  %2895 = vmatpush1.bf16.msra.mxu0 %v2061
  %2896 = vmatprep.subr.bf16.mxu0 0
  %2897 = vmatpush1.bf16.msra.mxu0 %v2062
  %2898 = vmatprep.subr.bf16.mxu0 0
  %2899 = vmatpush1.bf16.msra.mxu0 %v2063
  %2900 = vmatprep.mubr.bf16.mxu0 %v78
  %2901 = vmatmul.mubr.bf16.gmra.mrb[0].mxu0 %v77
  %v2902 = vpop.f32.mrb[0].mxu0
  %v2903 = vadd.f32 %v2863, %v2902
  %v2904 = vpop.f32.mrb[0].mxu0
  %v2905 = vpop.f32.mrb[0].mxu0
  %v2906 = vpop.f32.mrb[0].mxu0
  %2907 = vdwg.mxu0
  %2908 = vmatprep.subr.bf16.mxu0 0
  %2909 = vmatpush1.bf16.msra.mxu0 %v2064
  %2910 = vmatprep.subr.bf16.mxu0 0
  %2911 = vmatpush1.bf16.msra.mxu0 %v2065
  %2912 = vmatprep.subr.bf16.mxu0 0
  %2913 = vmatpush1.bf16.msra.mxu0 %v2066
  %2914 = vmatprep.subr.bf16.mxu0 0
  %2915 = vmatpush1.bf16.msra.mxu0 %v2067
  %2916 = vmatprep.subr.bf16.mxu0 0
  %2917 = vmatpush1.bf16.msra.mxu0 %v2068
  %2918 = vmatprep.subr.bf16.mxu0 0
  %2919 = vmatpush1.bf16.msra.mxu0 %v2069
  %2920 = vmatprep.subr.bf16.mxu0 0
  %2921 = vmatpush1.bf16.msra.mxu0 %v2070
  %2922 = vmatprep.subr.bf16.mxu0 0
  %2923 = vmatpush1.bf16.msra.mxu0 %v2071
  %2924 = vmatprep.subr.bf16.mxu0 0
  %2925 = vmatpush1.bf16.msra.mxu0 %v2072
  %2926 = vmatprep.subr.bf16.mxu0 0
  %2927 = vmatpush1.bf16.msra.mxu0 %v2073
  %2928 = vmatprep.subr.bf16.mxu0 0
  %2929 = vmatpush1.bf16.msra.mxu0 %v2074
  %2930 = vmatprep.subr.bf16.mxu0 0
  %2931 = vmatpush1.bf16.msra.mxu0 %v2075
  %2932 = vmatprep.subr.bf16.mxu0 0
  %2933 = vmatpush1.bf16.msra.mxu0 %v2076
  %2934 = vmatprep.subr.bf16.mxu0 0
  %2935 = vmatpush1.bf16.msra.mxu0 %v2077
  %2936 = vmatprep.subr.bf16.mxu0 0
  %2937 = vmatpush1.bf16.msra.mxu0 %v2078
  %2938 = vmatprep.subr.bf16.mxu0 0
  %2939 = vmatpush1.bf16.msra.mxu0 %v2079
  %2940 = vmatprep.mubr.bf16.mxu0 %v80
  %2941 = vmatmul.mubr.bf16.gmra.mrb[0].mxu0 %v79
  %v2942 = vpop.f32.mrb[0].mxu0
  %v2943 = vadd.f32 %v2903, %v2942
  %v2944 = vpop.f32.mrb[0].mxu0
  %v2945 = vpop.f32.mrb[0].mxu0
  %v2946 = vpop.f32.mrb[0].mxu0
  %2947 = vdwg.mxu0
  %2948 = vmatprep.subr.bf16.mxu0 0
  %2949 = vmatpush1.bf16.msra.mxu0 %v2080
  %2950 = vmatprep.subr.bf16.mxu0 0
  %2951 = vmatpush1.bf16.msra.mxu0 %v2081
  %2952 = vmatprep.subr.bf16.mxu0 0
  %2953 = vmatpush1.bf16.msra.mxu0 %v2082
  %2954 = vmatprep.subr.bf16.mxu0 0
  %2955 = vmatpush1.bf16.msra.mxu0 %v2083
  %2956 = vmatprep.subr.bf16.mxu0 0
  %2957 = vmatpush1.bf16.msra.mxu0 %v2084
  %2958 = vmatprep.subr.bf16.mxu0 0
  %2959 = vmatpush1.bf16.msra.mxu0 %v2085
  %2960 = vmatprep.subr.bf16.mxu0 0
  %2961 = vmatpush1.bf16.msra.mxu0 %v2086
  %2962 = vmatprep.subr.bf16.mxu0 0
  %2963 = vmatpush1.bf16.msra.mxu0 %v2087
  %2964 = vmatprep.subr.bf16.mxu0 0
  %2965 = vmatpush1.bf16.msra.mxu0 %v2088
  %2966 = vmatprep.subr.bf16.mxu0 0
  %2967 = vmatpush1.bf16.msra.mxu0 %v2089
  %2968 = vmatprep.subr.bf16.mxu0 0
  %2969 = vmatpush1.bf16.msra.mxu0 %v2090
  %2970 = vmatprep.subr.bf16.mxu0 0
  %2971 = vmatpush1.bf16.msra.mxu0 %v2091
  %2972 = vmatprep.subr.bf16.mxu0 0
  %2973 = vmatpush1.bf16.msra.mxu0 %v2092
  %2974 = vmatprep.subr.bf16.mxu0 0
  %2975 = vmatpush1.bf16.msra.mxu0 %v2093
  %2976 = vmatprep.subr.bf16.mxu0 0
  %2977 = vmatpush1.bf16.msra.mxu0 %v2094
  %2978 = vmatprep.subr.bf16.mxu0 0
  %2979 = vmatpush1.bf16.msra.mxu0 %v2095
  %2980 = vmatprep.mubr.bf16.mxu0 %v82
  %2981 = vmatmul.mubr.bf16.gmra.mrb[0].mxu0 %v81
  %v2982 = vpop.f32.mrb[0].mxu0
  %v2983 = vadd.f32 %v2943, %v2982
  %v2984 = vpop.f32.mrb[0].mxu0
  %v2985 = vpop.f32.mrb[0].mxu0
  %v2986 = vpop.f32.mrb[0].mxu0
  %2987 = vdwg.mxu0
  %2988 = vmatprep.subr.bf16.mxu0 0
  %2989 = vmatpush1.bf16.msra.mxu0 %v2096
  %2990 = vmatprep.subr.bf16.mxu0 0
  %2991 = vmatpush1.bf16.msra.mxu0 %v2097
  %2992 = vmatprep.subr.bf16.mxu0 0
  %2993 = vmatpush1.bf16.msra.mxu0 %v2098
  %2994 = vmatprep.subr.bf16.mxu0 0
  %2995 = vmatpush1.bf16.msra.mxu0 %v2099
  %2996 = vmatprep.subr.bf16.mxu0 0
  %2997 = vmatpush1.bf16.msra.mxu0 %v2100
  %2998 = vmatprep.subr.bf16.mxu0 0
  %2999 = vmatpush1.bf16.msra.mxu0 %v2101
  %3000 = vmatprep.subr.bf16.mxu0 0
  %3001 = vmatpush1.bf16.msra.mxu0 %v2102
  %3002 = vmatprep.subr.bf16.mxu0 0
  %3003 = vmatpush1.bf16.msra.mxu0 %v2103
  %3004 = vmatprep.subr.bf16.mxu0 0
  %3005 = vmatpush1.bf16.msra.mxu0 %v2104
  %3006 = vmatprep.subr.bf16.mxu0 0
  %3007 = vmatpush1.bf16.msra.mxu0 %v2105
  %3008 = vmatprep.subr.bf16.mxu0 0
  %3009 = vmatpush1.bf16.msra.mxu0 %v2106
  %3010 = vmatprep.subr.bf16.mxu0 0
  %3011 = vmatpush1.bf16.msra.mxu0 %v2107
  %3012 = vmatprep.subr.bf16.mxu0 0
  %3013 = vmatpush1.bf16.msra.mxu0 %v2108
  %3014 = vmatprep.subr.bf16.mxu0 0
  %3015 = vmatpush1.bf16.msra.mxu0 %v2109
  %3016 = vmatprep.subr.bf16.mxu0 0
  %3017 = vmatpush1.bf16.msra.mxu0 %v2110
  %3018 = vmatprep.subr.bf16.mxu0 0
  %3019 = vmatpush1.bf16.msra.mxu0 %v2111
  %3020 = vmatprep.mubr.bf16.mxu0 %v84
  %3021 = vmatmul.mubr.bf16.gmra.mrb[0].mxu0 %v83
  %v3022 = vpop.f32.mrb[0].mxu0
  %v3023 = vadd.f32 %v2983, %v3022
  %v3024 = vpop.f32.mrb[0].mxu0
  %v3025 = vpop.f32.mrb[0].mxu0
  %v3026 = vpop.f32.mrb[0].mxu0
  %3027 = vdwg.mxu0
  %3028 = vmatprep.subr.bf16.mxu0 0
  %3029 = vmatpush1.bf16.msra.mxu0 %v2112
  %3030 = vmatprep.subr.bf16.mxu0 0
  %3031 = vmatpush1.bf16.msra.mxu0 %v2113
  %3032 = vmatprep.subr.bf16.mxu0 0
  %3033 = vmatpush1.bf16.msra.mxu0 %v2114
  %3034 = vmatprep.subr.bf16.mxu0 0
  %3035 = vmatpush1.bf16.msra.mxu0 %v2115
  %3036 = vmatprep.subr.bf16.mxu0 0
  %3037 = vmatpush1.bf16.msra.mxu0 %v2116
  %3038 = vmatprep.subr.bf16.mxu0 0
  %3039 = vmatpush1.bf16.msra.mxu0 %v2117
  %3040 = vmatprep.subr.bf16.mxu0 0
  %3041 = vmatpush1.bf16.msra.mxu0 %v2118
  %3042 = vmatprep.subr.bf16.mxu0 0
  %3043 = vmatpush1.bf16.msra.mxu0 %v2119
  %3044 = vmatprep.subr.bf16.mxu0 0
  %3045 = vmatpush1.bf16.msra.mxu0 %v2120
  %3046 = vmatprep.subr.bf16.mxu0 0
  %3047 = vmatpush1.bf16.msra.mxu0 %v2121
  %3048 = vmatprep.subr.bf16.mxu0 0
  %3049 = vmatpush1.bf16.msra.mxu0 %v2122
  %3050 = vmatprep.subr.bf16.mxu0 0
  %3051 = vmatpush1.bf16.msra.mxu0 %v2123
  %3052 = vmatprep.subr.bf16.mxu0 0
  %3053 = vmatpush1.bf16.msra.mxu0 %v2124
  %3054 = vmatprep.subr.bf16.mxu0 0
  %3055 = vmatpush1.bf16.msra.mxu0 %v2125
  %3056 = vmatprep.subr.bf16.mxu0 0
  %3057 = vmatpush1.bf16.msra.mxu0 %v2126
  %3058 = vmatprep.subr.bf16.mxu0 0
  %3059 = vmatpush1.bf16.msra.mxu0 %v2127
  %3060 = vmatprep.mubr.bf16.mxu0 %v86
  %3061 = vmatmul.mubr.bf16.gmra.mrb[0].mxu0 %v85
  %v3062 = vpop.f32.mrb[0].mxu0
  %v3063 = vadd.f32 %v3023, %v3062
  %v3064 = vpop.f32.mrb[0].mxu0
  %v3065 = vpop.f32.mrb[0].mxu0
  %v3066 = vpop.f32.mrb[0].mxu0
  %3067 = vdwg.mxu0
  %3068 = vmatprep.subr.bf16.mxu0 0
  %3069 = vmatpush1.bf16.msra.mxu0 %v2128
  %3070 = vmatprep.subr.bf16.mxu0 0
  %3071 = vmatpush1.bf16.msra.mxu0 %v2129
  %3072 = vmatprep.subr.bf16.mxu0 0
  %3073 = vmatpush1.bf16.msra.mxu0 %v2130
  %3074 = vmatprep.subr.bf16.mxu0 0
  %3075 = vmatpush1.bf16.msra.mxu0 %v2131
  %3076 = vmatprep.subr.bf16.mxu0 0
  %3077 = vmatpush1.bf16.msra.mxu0 %v2132
  %3078 = vmatprep.subr.bf16.mxu0 0
  %3079 = vmatpush1.bf16.msra.mxu0 %v2133
  %3080 = vmatprep.subr.bf16.mxu0 0
  %3081 = vmatpush1.bf16.msra.mxu0 %v2134
  %3082 = vmatprep.subr.bf16.mxu0 0
  %3083 = vmatpush1.bf16.msra.mxu0 %v2135
  %3084 = vmatprep.subr.bf16.mxu0 0
  %3085 = vmatpush1.bf16.msra.mxu0 %v2136
  %3086 = vmatprep.subr.bf16.mxu0 0
  %3087 = vmatpush1.bf16.msra.mxu0 %v2137
  %3088 = vmatprep.subr.bf16.mxu0 0
  %3089 = vmatpush1.bf16.msra.mxu0 %v2138
  %3090 = vmatprep.subr.bf16.mxu0 0
  %3091 = vmatpush1.bf16.msra.mxu0 %v2139
  %3092 = vmatprep.subr.bf16.mxu0 0
  %3093 = vmatpush1.bf16.msra.mxu0 %v2140
  %3094 = vmatprep.subr.bf16.mxu0 0
  %3095 = vmatpush1.bf16.msra.mxu0 %v2141
  %3096 = vmatprep.subr.bf16.mxu0 0
  %3097 = vmatpush1.bf16.msra.mxu0 %v2142
  %3098 = vmatprep.subr.bf16.mxu0 0
  %3099 = vmatpush1.bf16.msra.mxu0 %v2143
  %3100 = vmatprep.mubr.bf16.mxu0 %v88
  %3101 = vmatmul.mubr.bf16.gmra.mrb[0].mxu0 %v87
  %v3102 = vpop.f32.mrb[0].mxu0
  %v3103 = vadd.f32 %v3063, %v3102
  %v3104 = vpop.f32.mrb[0].mxu0
  %v3105 = vpop.f32.mrb[0].mxu0
  %v3106 = vpop.f32.mrb[0].mxu0
  %3107 = vdwg.mxu0
  %3108 = vmatprep.subr.bf16.mxu0 0
  %3109 = vmatpush1.bf16.msra.mxu0 %v2144
  %3110 = vmatprep.subr.bf16.mxu0 0
  %3111 = vmatpush1.bf16.msra.mxu0 %v2145
  %3112 = vmatprep.subr.bf16.mxu0 0
  %3113 = vmatpush1.bf16.msra.mxu0 %v2146
  %3114 = vmatprep.subr.bf16.mxu0 0
  %3115 = vmatpush1.bf16.msra.mxu0 %v2147
  %3116 = vmatprep.subr.bf16.mxu0 0
  %3117 = vmatpush1.bf16.msra.mxu0 %v2148
  %3118 = vmatprep.subr.bf16.mxu0 0
  %3119 = vmatpush1.bf16.msra.mxu0 %v2149
  %3120 = vmatprep.subr.bf16.mxu0 0
  %3121 = vmatpush1.bf16.msra.mxu0 %v2150
  %3122 = vmatprep.subr.bf16.mxu0 0
  %3123 = vmatpush1.bf16.msra.mxu0 %v2151
  %3124 = vmatprep.subr.bf16.mxu0 0
  %3125 = vmatpush1.bf16.msra.mxu0 %v2152
  %3126 = vmatprep.subr.bf16.mxu0 0
  %3127 = vmatpush1.bf16.msra.mxu0 %v2153
  %3128 = vmatprep.subr.bf16.mxu0 0
  %3129 = vmatpush1.bf16.msra.mxu0 %v2154
  %3130 = vmatprep.subr.bf16.mxu0 0
  %3131 = vmatpush1.bf16.msra.mxu0 %v2155
  %3132 = vmatprep.subr.bf16.mxu0 0
  %3133 = vmatpush1.bf16.msra.mxu0 %v2156
  %3134 = vmatprep.subr.bf16.mxu0 0
  %3135 = vmatpush1.bf16.msra.mxu0 %v2157
  %3136 = vmatprep.subr.bf16.mxu0 0
  %3137 = vmatpush1.bf16.msra.mxu0 %v2158
  %3138 = vmatprep.subr.bf16.mxu0 0
  %3139 = vmatpush1.bf16.msra.mxu0 %v2159
  %3140 = vmatprep.mubr.bf16.mxu0 %v90
  %3141 = vmatmul.mubr.bf16.gmra.mrb[0].mxu0 %v89
  %v3142 = vpop.f32.mrb[0].mxu0
  %v3143 = vadd.f32 %v3103, %v3142
  %v3144 = vpop.f32.mrb[0].mxu0
  %v3145 = vpop.f32.mrb[0].mxu0
  %v3146 = vpop.f32.mrb[0].mxu0
  %3147 = vdwg.mxu0
  %3148 = vmatprep.subr.bf16.mxu0 0
  %3149 = vmatpush1.bf16.msra.mxu0 %v2160
  %3150 = vmatprep.subr.bf16.mxu0 0
  %3151 = vmatpush1.bf16.msra.mxu0 %v2161
  %3152 = vmatprep.subr.bf16.mxu0 0
  %3153 = vmatpush1.bf16.msra.mxu0 %v2162
  %3154 = vmatprep.subr.bf16.mxu0 0
  %3155 = vmatpush1.bf16.msra.mxu0 %v2163
  %3156 = vmatprep.subr.bf16.mxu0 0
  %3157 = vmatpush1.bf16.msra.mxu0 %v2164
  %3158 = vmatprep.subr.bf16.mxu0 0
  %3159 = vmatpush1.bf16.msra.mxu0 %v2165
  %3160 = vmatprep.subr.bf16.mxu0 0
  %3161 = vmatpush1.bf16.msra.mxu0 %v2166
  %3162 = vmatprep.subr.bf16.mxu0 0
  %3163 = vmatpush1.bf16.msra.mxu0 %v2167
  %3164 = vmatprep.subr.bf16.mxu0 0
  %3165 = vmatpush1.bf16.msra.mxu0 %v2168
  %3166 = vmatprep.subr.bf16.mxu0 0
  %3167 = vmatpush1.bf16.msra.mxu0 %v2169
  %3168 = vmatprep.subr.bf16.mxu0 0
  %3169 = vmatpush1.bf16.msra.mxu0 %v2170
  %3170 = vmatprep.subr.bf16.mxu0 0
  %3171 = vmatpush1.bf16.msra.mxu0 %v2171
  %3172 = vmatprep.subr.bf16.mxu0 0
  %3173 = vmatpush1.bf16.msra.mxu0 %v2172
  %3174 = vmatprep.subr.bf16.mxu0 0
  %3175 = vmatpush1.bf16.msra.mxu0 %v2173
  %3176 = vmatprep.subr.bf16.mxu0 0
  %3177 = vmatpush1.bf16.msra.mxu0 %v2174
  %3178 = vmatprep.subr.bf16.mxu0 0
  %3179 = vmatpush1.bf16.msra.mxu0 %v2175
  %3180 = vmatprep.mubr.bf16.mxu0 %v92
  %3181 = vmatmul.mubr.bf16.gmra.mrb[0].mxu0 %v91
  %v3182 = vpop.f32.mrb[0].mxu0
  %v3183 = vadd.f32 %v3143, %v3182
  %v3184 = vpop.f32.mrb[0].mxu0
  %v3185 = vpop.f32.mrb[0].mxu0
  %v3186 = vpop.f32.mrb[0].mxu0
  %3187 = vdwg.mxu0
  %3188 = vmatprep.subr.bf16.mxu0 0
  %3189 = vmatpush1.bf16.msra.mxu0 %v2176
  %3190 = vmatprep.subr.bf16.mxu0 0
  %3191 = vmatpush1.bf16.msra.mxu0 %v2177
  %3192 = vmatprep.subr.bf16.mxu0 0
  %3193 = vmatpush1.bf16.msra.mxu0 %v2178
  %3194 = vmatprep.subr.bf16.mxu0 0
  %3195 = vmatpush1.bf16.msra.mxu0 %v2179
  %3196 = vmatprep.subr.bf16.mxu0 0
  %3197 = vmatpush1.bf16.msra.mxu0 %v2180
  %3198 = vmatprep.subr.bf16.mxu0 0
  %3199 = vmatpush1.bf16.msra.mxu0 %v2181
  %3200 = vmatprep.subr.bf16.mxu0 0
  %3201 = vmatpush1.bf16.msra.mxu0 %v2182
  %3202 = vmatprep.subr.bf16.mxu0 0
  %3203 = vmatpush1.bf16.msra.mxu0 %v2183
  %3204 = vmatprep.subr.bf16.mxu0 0
  %3205 = vmatpush1.bf16.msra.mxu0 %v2184
  %3206 = vmatprep.subr.bf16.mxu0 0
  %3207 = vmatpush1.bf16.msra.mxu0 %v2185
  %3208 = vmatprep.subr.bf16.mxu0 0
  %3209 = vmatpush1.bf16.msra.mxu0 %v2186
  %3210 = vmatprep.subr.bf16.mxu0 0
  %3211 = vmatpush1.bf16.msra.mxu0 %v2187
  %3212 = vmatprep.subr.bf16.mxu0 0
  %3213 = vmatpush1.bf16.msra.mxu0 %v2188
  %3214 = vmatprep.subr.bf16.mxu0 0
  %3215 = vmatpush1.bf16.msra.mxu0 %v2189
  %3216 = vmatprep.subr.bf16.mxu0 0
  %3217 = vmatpush1.bf16.msra.mxu0 %v2190
  %3218 = vmatprep.subr.bf16.mxu0 0
  %3219 = vmatpush1.bf16.msra.mxu0 %v2191
  %3220 = vmatprep.mubr.bf16.mxu0 %v94
  %3221 = vmatmul.mubr.bf16.gmra.mrb[0].mxu0 %v93
  %v3222 = vpop.f32.mrb[0].mxu0
  %v3223 = vadd.f32 %v3183, %v3222
  %v3224 = vpop.f32.mrb[0].mxu0
  %v3225 = vpop.f32.mrb[0].mxu0
  %v3226 = vpop.f32.mrb[0].mxu0
  %3227 = vdwg.mxu0
  %3228 = vmatprep.subr.bf16.mxu0 0
  %3229 = vmatpush1.bf16.msra.mxu0 %v2192
  %3230 = vmatprep.subr.bf16.mxu0 0
  %3231 = vmatpush1.bf16.msra.mxu0 %v2193
  %3232 = vmatprep.subr.bf16.mxu0 0
  %3233 = vmatpush1.bf16.msra.mxu0 %v2194
  %3234 = vmatprep.subr.bf16.mxu0 0
  %3235 = vmatpush1.bf16.msra.mxu0 %v2195
  %3236 = vmatprep.subr.bf16.mxu0 0
  %3237 = vmatpush1.bf16.msra.mxu0 %v2196
  %3238 = vmatprep.subr.bf16.mxu0 0
  %3239 = vmatpush1.bf16.msra.mxu0 %v2197
  %3240 = vmatprep.subr.bf16.mxu0 0
  %3241 = vmatpush1.bf16.msra.mxu0 %v2198
  %3242 = vmatprep.subr.bf16.mxu0 0
  %3243 = vmatpush1.bf16.msra.mxu0 %v2199
  %3244 = vmatprep.subr.bf16.mxu0 0
  %3245 = vmatpush1.bf16.msra.mxu0 %v2200
  %3246 = vmatprep.subr.bf16.mxu0 0
  %3247 = vmatpush1.bf16.msra.mxu0 %v2201
  %3248 = vmatprep.subr.bf16.mxu0 0
  %3249 = vmatpush1.bf16.msra.mxu0 %v2202
  %3250 = vmatprep.subr.bf16.mxu0 0
  %3251 = vmatpush1.bf16.msra.mxu0 %v2203
  %3252 = vmatprep.subr.bf16.mxu0 0
  %3253 = vmatpush1.bf16.msra.mxu0 0
  %3254 = vmatprep.subr.bf16.mxu0 0
  %3255 = vmatpush1.bf16.msra.mxu0 0
  %3256 = vmatprep.subr.bf16.mxu0 0
  %3257 = vmatpush1.bf16.msra.mxu0 0
  %3258 = vmatprep.subr.bf16.mxu0 0
  %3259 = vmatpush1.bf16.msra.mxu0 0
  %3260 = vmatprep.mubr.bf16.mxu0 %v2506
  %3261 = vmatmul.mubr.bf16.gmra.mrb[0].mxu0 %v95
  %v3262 = vpop.f32.mrb[0].mxu0
  %v3263 = vadd.f32 %v3223, %v3262
  %v3264 = vpop.f32.mrb[0].mxu0
  %v3265 = vpop.f32.mrb[0].mxu0
  %v3266 = vpop.f32.mrb[0].mxu0
  %3267 = vdwg.mxu0
  %v3268 = vmax.f32 %v3263, 0.0
  %v3269 = vld [vmem:[%s3] sm:$0xff]
  %v3270 = vld [vmem:[%s3 + $0x8] sm:$0xff]
  %v3271 = vld [vmem:[%s3 + $0x10] sm:$0xff]
  %v3272 = vld [vmem:[%s3 + $0x18] sm:$0xff]
  %v3273 = vld [vmem:[%s3 + $0x20] sm:$0xff]
  %v3274 = vld [vmem:[%s3 + $0x28] sm:$0xff]
  %v3275 = vld [vmem:[%s3 + $0x30] sm:$0xff]
  %v3276 = vld [vmem:[%s3 + $0x38] sm:$0xff]
  %v3277 = vld [vmem:[%s3 + $0x40] sm:$0xff]
  %v3278 = vld [vmem:[%s3 + $0x48] sm:$0xff]
  %v3279 = vld [vmem:[%s3 + $0x50] sm:$0xff]
  %v3280 = vld [vmem:[%s3 + $0x58] sm:$0xff]
  %v3281 = vld [vmem:[%s3 + $0x60] sm:$0xf]
  %v3282 = vld [vmem:[%s4] sm:$0x1]
  %v3284 = vlaneseq
  %v3285 = vshrl.u32 %v3284, 7
  %v3286 = vsub.s32 0, %v3285
  %v3287 = vrot.slane %v3282, %v3286
  %vm3289 = vcmask 818176
  %v3291 = vsel %vm3289, %v3268, 0
  %vm3293 = vcmask 1043456
  %v3295 = vsel %vm3293, %v3281, 0
  %3297 = vmatprep.subr.mxu0 0.0
  %3298 = vmatpush1.msra.mxu0 %v3269
  %3299 = vmatprep.subr.mxu0 0.0
  %3300 = vmatpush1.msra.mxu0 %v3270
  %3301 = vmatprep.subr.mxu0 0.0
  %3302 = vmatpush1.msra.mxu0 %v3271
  %3303 = vmatprep.subr.mxu0 0.0
  %3304 = vmatpush1.msra.mxu0 %v3272
  %3305 = vmatprep.subr.mxu0 0.0
  %3306 = vmatpush1.msra.mxu0 %v3273
  %3307 = vmatprep.subr.mxu0 0.0
  %3308 = vmatpush1.msra.mxu0 %v3274
  %3309 = vmatprep.subr.mxu0 0.0
  %3310 = vmatpush1.msra.mxu0 %v3275
  %3311 = vmatprep.subr.mxu0 0.0
  %3312 = vmatpush1.msra.mxu0 %v3276
  %3313 = vmatprep.subr.mxu0 0.0
  %3314 = vmatpush1.msra.mxu0 %v3277
  %3315 = vmatprep.subr.mxu0 0.0
  %3316 = vmatpush1.msra.mxu0 %v3278
  %3317 = vmatprep.subr.mxu0 0.0
  %3318 = vmatpush1.msra.mxu0 %v3279
  %3319 = vmatprep.subr.mxu0 0.0
  %3320 = vmatpush1.msra.mxu0 %v3280
  %3321 = vmatprep.subr.mxu0 0.0
  %3322 = vmatpush1.msra.mxu0 %v3295
  %3323 = vmatprep.subr.mxu0 0.0
  %3324 = vmatpush1.msra.mxu0 0.0
  %3325 = vmatprep.subr.mxu0 0.0
  %3326 = vmatpush1.msra.mxu0 0.0
  %3327 = vmatprep.subr.mxu0 0.0
  %3328 = vmatpush1.msra.mxu0 0.0
  %3329 = vmatprep.subr.mxu0 0.0
  %3330 = vmatpush1.msra.mxu0 0.0
  %3331 = vmatprep.subr.mxu0 0.0
  %3332 = vmatpush1.msra.mxu0 0.0
  %3333 = vmatprep.subr.mxu0 0.0
  %3334 = vmatpush1.msra.mxu0 0.0
  %3335 = vmatprep.subr.mxu0 0.0
  %3336 = vmatpush1.msra.mxu0 0.0
  %3337 = vmatprep.subr.mxu0 0.0
  %3338 = vmatpush1.msra.mxu0 0.0
  %3339 = vmatprep.subr.mxu0 0.0
  %3340 = vmatpush1.msra.mxu0 0.0
  %3341 = vmatprep.subr.mxu0 0.0
  %3342 = vmatpush1.msra.mxu0 0.0
  %3343 = vmatprep.subr.mxu0 0.0
  %3344 = vmatpush1.msra.mxu0 0.0
  %3345 = vmatprep.subr.mxu0 0.0
  %3346 = vmatpush1.msra.mxu0 0.0
  %3347 = vmatprep.subr.mxu0 0.0
  %3348 = vmatpush1.msra.mxu0 0.0
  %3349 = vmatprep.subr.mxu0 0.0
  %3350 = vmatpush1.msra.mxu0 0.0
  %3351 = vmatprep.subr.mxu0 0.0
  %3352 = vmatpush1.msra.mxu0 0.0
  %3353 = vmatprep.subr.mxu0 0.0
  %3354 = vmatpush1.msra.mxu0 0.0
  %3355 = vmatprep.subr.mxu0 0.0
  %3356 = vmatpush1.msra.mxu0 0.0
  %3357 = vmatprep.subr.mxu0 0.0
  %3358 = vmatpush1.msra.mxu0 0.0
  %3359 = vmatprep.subr.mxu0 0.0
  %3360 = vmatpush1.msra.mxu0 0.0
  %3361 = vmatprep.mubr.f32.mxu0 0.0
  %3362 = vmatmul.mubr.f32.gmra.mrb[0].mxu0 %v3291
  %v3363 = vpop.f32.mrb[0].mxu0
  %v3364 = vadd.f32 %v3287, %v3363
  %v3365 = vpop.f32.mrb[0].mxu0
  %3366 = vdwg.mxu0
  %3367 = vst [vmem:[%s5] sm:$0xff] %v3364
  // Predicated region
  $region22: #{osu_model_forward.1} parent=0 // pred_check
    _
  $region23: #{osu_model_forward.1} parent=0 // pred_check_branch
    %3369 = sbr.rel (0) target = $region25
  $region24: #{osu_model_forward.1} parent=0 // pred_region
    _
  $region25: #{osu_model_forward.1} parent=0 // pred_fallthru
    _
  // Predicated region
  $region26: #{osu_model_forward.1} parent=0 // pred_check
    _
  $region27: #{osu_model_forward.1} parent=0 // pred_check_branch
    %3371 = sbr.rel (0) target = $region29
  $region28: #{osu_model_forward.1} parent=0 // pred_region
    _
  $region29: #{osu_model_forward.1} parent=0 // pred_fallthru
    _

// kernel: osu_model_forward.1
$region0: #{osu_model_forward.1}
  #allocation0 [shape = 'u32[]', space=smem, size = 0x4, offset = 0x4, fixed_abs, tag = 'smem constant byte address 0x4 - core index']
  #allocation1 [shape = 'u32[144,128]{1,0:T(1,128)}', space=vmem, size = 0x12000, scoped, tag = 'internal scratch']
  %s0 = inlined_call_operand.vmem [shape: f32[8,4800], index: 0, kind: input, shape index: {}]
  %s1 = inlined_call_operand.vmem [shape: bf16[4800,100], index: 1, kind: input, shape index: {}]
  %s2 = inlined_call_operand.vmem [shape: f32[1,100], index: 2, kind: input, shape index: {}]
  %s3 = inlined_call_operand.vmem [shape: f32[100,128], index: 3, kind: input, shape index: {}]
  %s4 = inlined_call_operand.vmem [shape: f32[1,128], index: 4, kind: input, shape index: {}]
  %s5 = inlined_call_operand.vmem [shape: f32[8,128], index: 5, kind: output, shape index: {}]
  %s6 = sld [smem:[#allocation0]]
  $region30: #{osu_model_forward.1} parent=0
    _
  %s8 = ssub.s32 1, %s6
  %s9 = scalar_select 0, %s8, %s6
  // Predicated region
  $region2: #{osu_model_forward.1} parent=0 // pred_check
    _
  $region3: #{osu_model_forward.1} parent=0 // pred_check_branch
    %11 = sbr.rel (0) target = $region5
  $region4: #{osu_model_forward.1} parent=0 // pred_region
    _
  $region5: #{osu_model_forward.1} parent=0 // pred_fallthru
    _
  // Predicated region
  $region6: #{osu_model_forward.1} parent=0 // pred_check
    _
  $region7: #{osu_model_forward.1} parent=0 // pred_check_branch
    %13 = sbr.rel (0) target = $region9
  $region8: #{osu_model_forward.1} parent=0 // pred_region
    _
  $region9: #{osu_model_forward.1} parent=0 // pred_fallthru
    _
  // Predicated region
  $region10: #{osu_model_forward.1} parent=0 // pred_check
    _
  $region11: #{osu_model_forward.1} parent=0 // pred_check_branch
    %15 = sbr.rel (0) target = $region13
  $region12: #{osu_model_forward.1} parent=0 // pred_region
    _
  $region13: #{osu_model_forward.1} parent=0 // pred_fallthru
    _
  // Predicated region
  $region14: #{osu_model_forward.1} parent=0 // pred_check
    _
  $region15: #{osu_model_forward.1} parent=0 // pred_check_branch
    %17 = sbr.rel (0) target = $region17
  $region16: #{osu_model_forward.1} parent=0 // pred_region
    _
  $region17: #{osu_model_forward.1} parent=0 // pred_fallthru
    _
  // Predicated region
  $region18: #{osu_model_forward.1} parent=0 // pred_check
    _
  $region19: #{osu_model_forward.1} parent=0 // pred_check_branch
    %19 = sbr.rel (0) target = $region21
  $region20: #{osu_model_forward.1} parent=0 // pred_region
    _
  $region21: #{osu_model_forward.1} parent=0 // pred_fallthru
    _
  %v21 = vld [vmem:[%s0] sm:$0xff]
  %v22 = vld [vmem:[%s0 + $0x8] sm:$0xff]
  %v23 = vld [vmem:[%s0 + $0x10] sm:$0xff]
  %v24 = vld [vmem:[%s0 + $0x18] sm:$0xff]
  %v25 = vld [vmem:[%s0 + $0x20] sm:$0xff]
  %v26 = vld [vmem:[%s0 + $0x28] sm:$0xff]
  %v27 = vld [vmem:[%s0 + $0x30] sm:$0xff]
  %v28 = vld [vmem:[%s0 + $0x38] sm:$0xff]
  %v29 = vld [vmem:[%s0 + $0x40] sm:$0xff]
  %v30 = vld [vmem:[%s0 + $0x48] sm:$0xff]
  %v31 = vld [vmem:[%s0 + $0x50] sm:$0xff]
  %v32 = vld [vmem:[%s0 + $0x58] sm:$0xff]
  %v33 = vld [vmem:[%s0 + $0x60] sm:$0xff]
  %v34 = vld [vmem:[%s0 + $0x68] sm:$0xff]
  %v35 = vld [vmem:[%s0 + $0x70] sm:$0xff]
  %v36 = vld [vmem:[%s0 + $0x78] sm:$0xff]
  %v37 = vld [vmem:[%s0 + $0x80] sm:$0xff]
  %v38 = vld [vmem:[%s0 + $0x88] sm:$0xff]
  %v39 = vld [vmem:[%s0 + $0x90] sm:$0xff]
  %v40 = vld [vmem:[%s0 + $0x98] sm:$0xff]
  %v41 = vld [vmem:[%s0 + $0xa0] sm:$0xff]
  %v42 = vld [vmem:[%s0 + $0xa8] sm:$0xff]
  %v43 = vld [vmem:[%s0 + $0xb0] sm:$0xff]
  %v44 = vld [vmem:[%s0 + $0xb8] sm:$0xff]
  %v45 = vld [vmem:[%s0 + $0xc0] sm:$0xff]
  %v46 = vld [vmem:[%s0 + $0xc8] sm:$0xff]
  %v47 = vld [vmem:[%s0 + $0xd0] sm:$0xff]
  %v48 = vld [vmem:[%s0 + $0xd8] sm:$0xff]
  %v49 = vld [vmem:[%s0 + $0xe0] sm:$0xff]
  %v50 = vld [vmem:[%s0 + $0xe8] sm:$0xff]
  %v51 = vld [vmem:[%s0 + $0xf0] sm:$0xff]
  %v52 = vld [vmem:[%s0 + $0xf8] sm:$0xff]
  %v53 = vld [vmem:[%s0 + $0x100] sm:$0xff]
  %v54 = vld [vmem:[%s0 + $0x108] sm:$0xff]
  %v55 = vld [vmem:[%s0 + $0x110] sm:$0xff]
  %v56 = vld [vmem:[%s0 + $0x118] sm:$0xff]
  %v57 = vld [vmem:[%s0 + $0x120] sm:$0xff]
  %v58 = vld [vmem:[%s0 + $0x128] sm:$0xff]
  %v59 = vpack.c.bf16 %v21, %v21
  %v60 = vpack.c.bf16 %v22, %v22
  %v61 = vpack.c.bf16 %v23, %v23
  %v62 = vpack.c.bf16 %v24, %v24
  %v63 = vpack.c.bf16 %v25, %v25
  %v64 = vpack.c.bf16 %v26, %v26
  %v65 = vpack.c.bf16 %v27, %v27
  %v66 = vpack.c.bf16 %v28, %v28
  %v67 = vpack.c.bf16 %v29, %v29
  %v68 = vpack.c.bf16 %v30, %v30
  %v69 = vpack.c.bf16 %v31, %v31
  %v70 = vpack.c.bf16 %v32, %v32
  %v71 = vpack.c.bf16 %v33, %v33
  %v72 = vpack.c.bf16 %v34, %v34
  %v73 = vpack.c.bf16 %v35, %v35
  %v74 = vpack.c.bf16 %v36, %v36
  %v75 = vpack.c.bf16 %v37, %v37
  %v76 = vpack.c.bf16 %v38, %v38
  %v77 = vpack.c.bf16 %v39, %v39
  %v78 = vpack.c.bf16 %v40, %v40
  %v79 = vpack.c.bf16 %v41, %v41
  %v80 = vpack.c.bf16 %v42, %v42
  %v81 = vpack.c.bf16 %v43, %v43
  %v82 = vpack.c.bf16 %v44, %v44
  %v83 = vpack.c.bf16 %v45, %v45
  %v84 = vpack.c.bf16 %v46, %v46
  %v85 = vpack.c.bf16 %v47, %v47
  %v86 = vpack.c.bf16 %v48, %v48
  %v87 = vpack.c.bf16 %v49, %v49
  %v88 = vpack.c.bf16 %v50, %v50
  %v89 = vpack.c.bf16 %v51, %v51
  %v90 = vpack.c.bf16 %v52, %v52
  %v91 = vpack.c.bf16 %v53, %v53
  %v92 = vpack.c.bf16 %v54, %v54
  %v93 = vpack.c.bf16 %v55, %v55
  %v94 = vpack.c.bf16 %v56, %v56
  %v95 = vpack.c.bf16 %v57, %v57
  %v96 = vpack.c.bf16 %v58, %v58
  %v97 = vld [vmem:[%s1] sm:$0xf]
  %v98 = vld [vmem:[%s1 + $0x4] sm:$0xf]
  %v99 = vld [vmem:[%s1 + $0x8] sm:$0xf]
  %v100 = vld [vmem:[%s1 + $0xc] sm:$0xf]
  %v101 = vld [vmem:[%s1 + $0x10] sm:$0xf]
  %v102 = vld [vmem:[%s1 + $0x14] sm:$0xf]
  %v103 = vld [vmem:[%s1 + $0x18] sm:$0xf]
  %v104 = vld [vmem:[%s1 + $0x1c] sm:$0xf]
  %v105 = vld [vmem:[%s1 + $0x20] sm:$0xf]
  %v106 = vld [vmem:[%s1 + $0x24] sm:$0xf]
  %v107 = vld [vmem:[%s1 + $0x28] sm:$0xf]
  %v108 = vld [vmem:[%s1 + $0x2c] sm:$0xf]
  %v109 = vld [vmem:[%s1 + $0x30] sm:$0xf]
  %v110 = vld [vmem:[%s1 + $0x34] sm:$0xf]
  %v111 = vld [vmem:[%s1 + $0x38] sm:$0xf]
  %v112 = vld [vmem:[%s1 + $0x3c] sm:$0xf]
  %v113 = vld [vmem:[%s1 + $0x40] sm:$0xf]
  %v114 = vld [vmem:[%s1 + $0x44] sm:$0xf]
  %v115 = vld [vmem:[%s1 + $0x48] sm:$0xf]
  %v116 = vld [vmem:[%s1 + $0x4c] sm:$0xf]
  %v117 = vld [vmem:[%s1 + $0x50] sm:$0xf]
  %v118 = vld [vmem:[%s1 + $0x54] sm:$0xf]
  %v119 = vld [vmem:[%s1 + $0x58] sm:$0xf]
  %v120 = vld [vmem:[%s1 + $0x5c] sm:$0xf]
  %v121 = vld [vmem:[%s1 + $0x60] sm:$0xf]
  %v122 = vld [vmem:[%s1 + $0x64] sm:$0xf]
  %v123 = vld [vmem:[%s1 + $0x68] sm:$0xf]
  %v124 = vld [vmem:[%s1 + $0x6c] sm:$0xf]
  %v125 = vld [vmem:[%s1 + $0x70] sm:$0xf]
  %v126 = vld [vmem:[%s1 + $0x74] sm:$0xf]
  %v127 = vld [vmem:[%s1 + $0x78] sm:$0xf]
  %v128 = vld [vmem:[%s1 + $0x7c] sm:$0xf]
  %v129 = vld [vmem:[%s1 + $0x80] sm:$0xf]
  %v130 = vld [vmem:[%s1 + $0x84] sm:$0xf]
  %v131 = vld [vmem:[%s1 + $0x88] sm:$0xf]
  %v132 = vld [vmem:[%s1 + $0x8c] sm:$0xf]
  %v133 = vld [vmem:[%s1 + $0x90] sm:$0xf]
  %v134 = vld [vmem:[%s1 + $0x94] sm:$0xf]
  %v135 = vld [vmem:[%s1 + $0x98] sm:$0xf]
  %v136 = vld [vmem:[%s1 + $0x9c] sm:$0xf]
  %v137 = vld [vmem:[%s1 + $0xa0] sm:$0xf]
  %v138 = vld [vmem:[%s1 + $0xa4] sm:$0xf]
  %v139 = vld [vmem:[%s1 + $0xa8] sm:$0xf]
  %v140 = vld [vmem:[%s1 + $0xac] sm:$0xf]
  %v141 = vld [vmem:[%s1 + $0xb0] sm:$0xf]
  %v142 = vld [vmem:[%s1 + $0xb4] sm:$0xf]
  %v143 = vld [vmem:[%s1 + $0xb8] sm:$0xf]
  %v144 = vld [vmem:[%s1 + $0xbc] sm:$0xf]
  %v145 = vld [vmem:[%s1 + $0xc0] sm:$0xf]
  %v146 = vld [vmem:[%s1 + $0xc4] sm:$0xf]
  %v147 = vld [vmem:[%s1 + $0xc8] sm:$0xf]
  %v148 = vld [vmem:[%s1 + $0xcc] sm:$0xf]
  %v149 = vld [vmem:[%s1 + $0xd0] sm:$0xf]
  %v150 = vld [vmem:[%s1 + $0xd4] sm:$0xf]
  %v151 = vld [vmem:[%s1 + $0xd8] sm:$0xf]
  %v152 = vld [vmem:[%s1 + $0xdc] sm:$0xf]
  %v153 = vld [vmem:[%s1 + $0xe0] sm:$0xf]
  %v154 = vld [vmem:[%s1 + $0xe4] sm:$0xf]
  %v155 = vld [vmem:[%s1 + $0xe8] sm:$0xf]
  %v156 = vld [vmem:[%s1 + $0xec] sm:$0xf]
  %v157 = vld [vmem:[%s1 + $0xf0] sm:$0xf]
  %v158 = vld [vmem:[%s1 + $0xf4] sm:$0xf]
  %v159 = vld [vmem:[%s1 + $0xf8] sm:$0xf]
  %v160 = vld [vmem:[%s1 + $0xfc] sm:$0xf]
  %v161 = vld [vmem:[%s1 + $0x100] sm:$0xf]
  %v162 = vld [vmem:[%s1 + $0x104] sm:$0xf]
  %v163 = vld [vmem:[%s1 + $0x108] sm:$0xf]
  %v164 = vld [vmem:[%s1 + $0x10c] sm:$0xf]
  %v165 = vld [vmem:[%s1 + $0x110] sm:$0xf]
  %v166 = vld [vmem:[%s1 + $0x114] sm:$0xf]
  %v167 = vld [vmem:[%s1 + $0x118] sm:$0xf]
  %v168 = vld [vmem:[%s1 + $0x11c] sm:$0xf]
  %v169 = vld [vmem:[%s1 + $0x120] sm:$0xf]
  %v170 = vld [vmem:[%s1 + $0x124] sm:$0xf]
  %v171 = vld [vmem:[%s1 + $0x128] sm:$0xf]
  %v172 = vld [vmem:[%s1 + $0x12c] sm:$0xf]
  %v173 = vld [vmem:[%s1 + $0x130] sm:$0xf]
  %v174 = vld [vmem:[%s1 + $0x134] sm:$0xf]
  %v175 = vld [vmem:[%s1 + $0x138] sm:$0xf]
  %v176 = vld [vmem:[%s1 + $0x13c] sm:$0xf]
  %v177 = vld [vmem:[%s1 + $0x140] sm:$0xf]
  %v178 = vld [vmem:[%s1 + $0x144] sm:$0xf]
  %v179 = vld [vmem:[%s1 + $0x148] sm:$0xf]
  %v180 = vld [vmem:[%s1 + $0x14c] sm:$0xf]
  %v181 = vld [vmem:[%s1 + $0x150] sm:$0xf]
  %v182 = vld [vmem:[%s1 + $0x154] sm:$0xf]
  %v183 = vld [vmem:[%s1 + $0x158] sm:$0xf]
  %v184 = vld [vmem:[%s1 + $0x15c] sm:$0xf]
  %v185 = vld [vmem:[%s1 + $0x160] sm:$0xf]
  %v186 = vld [vmem:[%s1 + $0x164] sm:$0xf]
  %v187 = vld [vmem:[%s1 + $0x168] sm:$0xf]
  %v188 = vld [vmem:[%s1 + $0x16c] sm:$0xf]
  %v189 = vld [vmem:[%s1 + $0x170] sm:$0xf]
  %v190 = vld [vmem:[%s1 + $0x174] sm:$0xf]
  %v191 = vld [vmem:[%s1 + $0x178] sm:$0xf]
  %v192 = vld [vmem:[%s1 + $0x17c] sm:$0xf]
  %v193 = vld [vmem:[%s1 + $0x180] sm:$0xf]
  %v194 = vld [vmem:[%s1 + $0x184] sm:$0xf]
  %v195 = vld [vmem:[%s1 + $0x188] sm:$0xf]
  %v196 = vld [vmem:[%s1 + $0x18c] sm:$0xf]
  %v197 = vld [vmem:[%s1 + $0x190] sm:$0xf]
  %v198 = vld [vmem:[%s1 + $0x194] sm:$0xf]
  %v199 = vld [vmem:[%s1 + $0x198] sm:$0xf]
  %v200 = vld [vmem:[%s1 + $0x19c] sm:$0xf]
  %v201 = vld [vmem:[%s1 + $0x1a0] sm:$0xf]
  %v202 = vld [vmem:[%s1 + $0x1a4] sm:$0xf]
  %v203 = vld [vmem:[%s1 + $0x1a8] sm:$0xf]
  %v204 = vld [vmem:[%s1 + $0x1ac] sm:$0xf]
  %v205 = vld [vmem:[%s1 + $0x1b0] sm:$0xf]
  %v206 = vld [vmem:[%s1 + $0x1b4] sm:$0xf]
  %v207 = vld [vmem:[%s1 + $0x1b8] sm:$0xf]
  %v208 = vld [vmem:[%s1 + $0x1bc] sm:$0xf]
  %v209 = vld [vmem:[%s1 + $0x1c0] sm:$0xf]
  %v210 = vld [vmem:[%s1 + $0x1c4] sm:$0xf]
  %v211 = vld [vmem:[%s1 + $0x1c8] sm:$0xf]
  %v212 = vld [vmem:[%s1 + $0x1cc] sm:$0xf]
  %v213 = vld [vmem:[%s1 + $0x1d0] sm:$0xf]
  %v214 = vld [vmem:[%s1 + $0x1d4] sm:$0xf]
  %v215 = vld [vmem:[%s1 + $0x1d8] sm:$0xf]
  %v216 = vld [vmem:[%s1 + $0x1dc] sm:$0xf]
  %v217 = vld [vmem:[%s1 + $0x1e0] sm:$0xf]
  %v218 = vld [vmem:[%s1 + $0x1e4] sm:$0xf]
  %v219 = vld [vmem:[%s1 + $0x1e8] sm:$0xf]
  %v220 = vld [vmem:[%s1 + $0x1ec] sm:$0xf]
  %v221 = vld [vmem:[%s1 + $0x1f0] sm:$0xf]
  %v222 = vld [vmem:[%s1 + $0x1f4] sm:$0xf]
  %v223 = vld [vmem:[%s1 + $0x1f8] sm:$0xf]
  %v224 = vld [vmem:[%s1 + $0x1fc] sm:$0xf]
  %v225 = vld [vmem:[%s1 + $0x200] sm:$0xf]
  %v226 = vld [vmem:[%s1 + $0x204] sm:$0xf]
  %v227 = vld [vmem:[%s1 + $0x208] sm:$0xf]
  %v228 = vld [vmem:[%s1 + $0x20c] sm:$0xf]
  %v229 = vld [vmem:[%s1 + $0x210] sm:$0xf]
  %v230 = vld [vmem:[%s1 + $0x214] sm:$0xf]
  %v231 = vld [vmem:[%s1 + $0x218] sm:$0xf]
  %v232 = vld [vmem:[%s1 + $0x21c] sm:$0xf]
  %v233 = vld [vmem:[%s1 + $0x220] sm:$0xf]
  %v234 = vld [vmem:[%s1 + $0x224] sm:$0xf]
  %v235 = vld [vmem:[%s1 + $0x228] sm:$0xf]
  %v236 = vld [vmem:[%s1 + $0x22c] sm:$0xf]
  %v237 = vld [vmem:[%s1 + $0x230] sm:$0xf]
  %v238 = vld [vmem:[%s1 + $0x234] sm:$0xf]
  %v239 = vld [vmem:[%s1 + $0x238] sm:$0xf]
  %v240 = vld [vmem:[%s1 + $0x23c] sm:$0xf]
  %v241 = vld [vmem:[%s1 + $0x240] sm:$0xf]
  %v242 = vld [vmem:[%s1 + $0x244] sm:$0xf]
  %v243 = vld [vmem:[%s1 + $0x248] sm:$0xf]
  %v244 = vld [vmem:[%s1 + $0x24c] sm:$0xf]
  %v245 = vld [vmem:[%s1 + $0x250] sm:$0xf]
  %v246 = vld [vmem:[%s1 + $0x254] sm:$0xf]
  %v247 = vld [vmem:[%s1 + $0x258] sm:$0xf]
  %v248 = vld [vmem:[%s1 + $0x25c] sm:$0xf]
  %v249 = vld [vmem:[%s1 + $0x260] sm:$0xf]
  %v250 = vld [vmem:[%s1 + $0x264] sm:$0xf]
  %v251 = vld [vmem:[%s1 + $0x268] sm:$0xf]
  %v252 = vld [vmem:[%s1 + $0x26c] sm:$0xf]
  %v253 = vld [vmem:[%s1 + $0x270] sm:$0xf]
  %v254 = vld [vmem:[%s1 + $0x274] sm:$0xf]
  %v255 = vld [vmem:[%s1 + $0x278] sm:$0xf]
  %v256 = vld [vmem:[%s1 + $0x27c] sm:$0xf]
  %v257 = vld [vmem:[%s1 + $0x280] sm:$0xf]
  %v258 = vld [vmem:[%s1 + $0x284] sm:$0xf]
  %v259 = vld [vmem:[%s1 + $0x288] sm:$0xf]
  %v260 = vld [vmem:[%s1 + $0x28c] sm:$0xf]
  %v261 = vld [vmem:[%s1 + $0x290] sm:$0xf]
  %v262 = vld [vmem:[%s1 + $0x294] sm:$0xf]
  %v263 = vld [vmem:[%s1 + $0x298] sm:$0xf]
  %v264 = vld [vmem:[%s1 + $0x29c] sm:$0xf]
  %v265 = vld [vmem:[%s1 + $0x2a0] sm:$0xf]
  %v266 = vld [vmem:[%s1 + $0x2a4] sm:$0xf]
  %v267 = vld [vmem:[%s1 + $0x2a8] sm:$0xf]
  %v268 = vld [vmem:[%s1 + $0x2ac] sm:$0xf]
  %v269 = vld [vmem:[%s1 + $0x2b0] sm:$0xf]
  %v270 = vld [vmem:[%s1 + $0x2b4] sm:$0xf]
  %v271 = vld [vmem:[%s1 + $0x2b8] sm:$0xf]
  %v272 = vld [vmem:[%s1 + $0x2bc] sm:$0xf]
  %v273 = vld [vmem:[%s1 + $0x2c0] sm:$0xf]
  %v274 = vld [vmem:[%s1 + $0x2c4] sm:$0xf]
  %v275 = vld [vmem:[%s1 + $0x2c8] sm:$0xf]
  %v276 = vld [vmem:[%s1 + $0x2cc] sm:$0xf]
  %v277 = vld [vmem:[%s1 + $0x2d0] sm:$0xf]
  %v278 = vld [vmem:[%s1 + $0x2d4] sm:$0xf]
  %v279 = vld [vmem:[%s1 + $0x2d8] sm:$0xf]
  %v280 = vld [vmem:[%s1 + $0x2dc] sm:$0xf]
  %v281 = vld [vmem:[%s1 + $0x2e0] sm:$0xf]
  %v282 = vld [vmem:[%s1 + $0x2e4] sm:$0xf]
  %v283 = vld [vmem:[%s1 + $0x2e8] sm:$0xf]
  %v284 = vld [vmem:[%s1 + $0x2ec] sm:$0xf]
  %v285 = vld [vmem:[%s1 + $0x2f0] sm:$0xf]
  %v286 = vld [vmem:[%s1 + $0x2f4] sm:$0xf]
  %v287 = vld [vmem:[%s1 + $0x2f8] sm:$0xf]
  %v288 = vld [vmem:[%s1 + $0x2fc] sm:$0xf]
  %v289 = vld [vmem:[%s1 + $0x300] sm:$0xf]
  %v290 = vld [vmem:[%s1 + $0x304] sm:$0xf]
  %v291 = vld [vmem:[%s1 + $0x308] sm:$0xf]
  %v292 = vld [vmem:[%s1 + $0x30c] sm:$0xf]
  %v293 = vld [vmem:[%s1 + $0x310] sm:$0xf]
  %v294 = vld [vmem:[%s1 + $0x314] sm:$0xf]
  %v295 = vld [vmem:[%s1 + $0x318] sm:$0xf]
  %v296 = vld [vmem:[%s1 + $0x31c] sm:$0xf]
  %v297 = vld [vmem:[%s1 + $0x320] sm:$0xf]
  %v298 = vld [vmem:[%s1 + $0x324] sm:$0xf]
  %v299 = vld [vmem:[%s1 + $0x328] sm:$0xf]
  %v300 = vld [vmem:[%s1 + $0x32c] sm:$0xf]
  %v301 = vld [vmem:[%s1 + $0x330] sm:$0xf]
  %v302 = vld [vmem:[%s1 + $0x334] sm:$0xf]
  %v303 = vld [vmem:[%s1 + $0x338] sm:$0xf]
  %v304 = vld [vmem:[%s1 + $0x33c] sm:$0xf]
  %v305 = vld [vmem:[%s1 + $0x340] sm:$0xf]
  %v306 = vld [vmem:[%s1 + $0x344] sm:$0xf]
  %v307 = vld [vmem:[%s1 + $0x348] sm:$0xf]
  %v308 = vld [vmem:[%s1 + $0x34c] sm:$0xf]
  %v309 = vld [vmem:[%s1 + $0x350] sm:$0xf]
  %v310 = vld [vmem:[%s1 + $0x354] sm:$0xf]
  %v311 = vld [vmem:[%s1 + $0x358] sm:$0xf]
  %v312 = vld [vmem:[%s1 + $0x35c] sm:$0xf]
  %v313 = vld [vmem:[%s1 + $0x360] sm:$0xf]
  %v314 = vld [vmem:[%s1 + $0x364] sm:$0xf]
  %v315 = vld [vmem:[%s1 + $0x368] sm:$0xf]
  %v316 = vld [vmem:[%s1 + $0x36c] sm:$0xf]
  %v317 = vld [vmem:[%s1 + $0x370] sm:$0xf]
  %v318 = vld [vmem:[%s1 + $0x374] sm:$0xf]
  %v319 = vld [vmem:[%s1 + $0x378] sm:$0xf]
  %v320 = vld [vmem:[%s1 + $0x37c] sm:$0xf]
  %v321 = vld [vmem:[%s1 + $0x380] sm:$0xf]
  %v322 = vld [vmem:[%s1 + $0x384] sm:$0xf]
  %v323 = vld [vmem:[%s1 + $0x388] sm:$0xf]
  %v324 = vld [vmem:[%s1 + $0x38c] sm:$0xf]
  %v325 = vld [vmem:[%s1 + $0x390] sm:$0xf]
  %v326 = vld [vmem:[%s1 + $0x394] sm:$0xf]
  %v327 = vld [vmem:[%s1 + $0x398] sm:$0xf]
  %v328 = vld [vmem:[%s1 + $0x39c] sm:$0xf]
  %v329 = vld [vmem:[%s1 + $0x3a0] sm:$0xf]
  %v330 = vld [vmem:[%s1 + $0x3a4] sm:$0xf]
  %v331 = vld [vmem:[%s1 + $0x3a8] sm:$0xf]
  %v332 = vld [vmem:[%s1 + $0x3ac] sm:$0xf]
  %v333 = vld [vmem:[%s1 + $0x3b0] sm:$0xf]
  %v334 = vld [vmem:[%s1 + $0x3b4] sm:$0xf]
  %v335 = vld [vmem:[%s1 + $0x3b8] sm:$0xf]
  %v336 = vld [vmem:[%s1 + $0x3bc] sm:$0xf]
  %v337 = vld [vmem:[%s1 + $0x3c0] sm:$0xf]
  %v338 = vld [vmem:[%s1 + $0x3c4] sm:$0xf]
  %v339 = vld [vmem:[%s1 + $0x3c8] sm:$0xf]
  %v340 = vld [vmem:[%s1 + $0x3cc] sm:$0xf]
  %v341 = vld [vmem:[%s1 + $0x3d0] sm:$0xf]
  %v342 = vld [vmem:[%s1 + $0x3d4] sm:$0xf]
  %v343 = vld [vmem:[%s1 + $0x3d8] sm:$0xf]
  %v344 = vld [vmem:[%s1 + $0x3dc] sm:$0xf]
  %v345 = vld [vmem:[%s1 + $0x3e0] sm:$0xf]
  %v346 = vld [vmem:[%s1 + $0x3e4] sm:$0xf]
  %v347 = vld [vmem:[%s1 + $0x3e8] sm:$0xf]
  %v348 = vld [vmem:[%s1 + $0x3ec] sm:$0xf]
  %v349 = vld [vmem:[%s1 + $0x3f0] sm:$0xf]
  %v350 = vld [vmem:[%s1 + $0x3f4] sm:$0xf]
  %v351 = vld [vmem:[%s1 + $0x3f8] sm:$0xf]
  %v352 = vld [vmem:[%s1 + $0x3fc] sm:$0xf]
  %v353 = vld [vmem:[%s1 + $0x400] sm:$0xf]
  %v354 = vld [vmem:[%s1 + $0x404] sm:$0xf]
  %v355 = vld [vmem:[%s1 + $0x408] sm:$0xf]
  %v356 = vld [vmem:[%s1 + $0x40c] sm:$0xf]
  %v357 = vld [vmem:[%s1 + $0x410] sm:$0xf]
  %v358 = vld [vmem:[%s1 + $0x414] sm:$0xf]
  %v359 = vld [vmem:[%s1 + $0x418] sm:$0xf]
  %v360 = vld [vmem:[%s1 + $0x41c] sm:$0xf]
  %v361 = vld [vmem:[%s1 + $0x420] sm:$0xf]
  %v362 = vld [vmem:[%s1 + $0x424] sm:$0xf]
  %v363 = vld [vmem:[%s1 + $0x428] sm:$0xf]
  %v364 = vld [vmem:[%s1 + $0x42c] sm:$0xf]
  %v365 = vld [vmem:[%s1 + $0x430] sm:$0xf]
  %v366 = vld [vmem:[%s1 + $0x434] sm:$0xf]
  %v367 = vld [vmem:[%s1 + $0x438] sm:$0xf]
  %v368 = vld [vmem:[%s1 + $0x43c] sm:$0xf]
  %v369 = vld [vmem:[%s1 + $0x440] sm:$0xf]
  %v370 = vld [vmem:[%s1 + $0x444] sm:$0xf]
  %v371 = vld [vmem:[%s1 + $0x448] sm:$0xf]
  %v372 = vld [vmem:[%s1 + $0x44c] sm:$0xf]
  %v373 = vld [vmem:[%s1 + $0x450] sm:$0xf]
  %v374 = vld [vmem:[%s1 + $0x454] sm:$0xf]
  %v375 = vld [vmem:[%s1 + $0x458] sm:$0xf]
  %v376 = vld [vmem:[%s1 + $0x45c] sm:$0xf]
  %v377 = vld [vmem:[%s1 + $0x460] sm:$0xf]
  %v378 = vld [vmem:[%s1 + $0x464] sm:$0xf]
  %v379 = vld [vmem:[%s1 + $0x468] sm:$0xf]
  %v380 = vld [vmem:[%s1 + $0x46c] sm:$0xf]
  %v381 = vld [vmem:[%s1 + $0x470] sm:$0xf]
  %v382 = vld [vmem:[%s1 + $0x474] sm:$0xf]
  %v383 = vld [vmem:[%s1 + $0x478] sm:$0xf]
  %v384 = vld [vmem:[%s1 + $0x47c] sm:$0xf]
  %v385 = vld [vmem:[%s1 + $0x480] sm:$0xf]
  %v386 = vld [vmem:[%s1 + $0x484] sm:$0xf]
  %v387 = vld [vmem:[%s1 + $0x488] sm:$0xf]
  %v388 = vld [vmem:[%s1 + $0x48c] sm:$0xf]
  %v389 = vld [vmem:[%s1 + $0x490] sm:$0xf]
  %v390 = vld [vmem:[%s1 + $0x494] sm:$0xf]
  %v391 = vld [vmem:[%s1 + $0x498] sm:$0xf]
  %v392 = vld [vmem:[%s1 + $0x49c] sm:$0xf]
  %v393 = vld [vmem:[%s1 + $0x4a0] sm:$0xf]
  %v394 = vld [vmem:[%s1 + $0x4a4] sm:$0xf]
  %v395 = vld [vmem:[%s1 + $0x4a8] sm:$0xf]
  %v396 = vld [vmem:[%s1 + $0x4ac] sm:$0xf]
  %v397 = vld [vmem:[%s1 + $0x4b0] sm:$0xf]
  %v398 = vld [vmem:[%s1 + $0x4b4] sm:$0xf]
  %v399 = vld [vmem:[%s1 + $0x4b8] sm:$0xf]
  %v400 = vld [vmem:[%s1 + $0x4bc] sm:$0xf]
  %v401 = vld [vmem:[%s1 + $0x4c0] sm:$0xf]
  %v402 = vld [vmem:[%s1 + $0x4c4] sm:$0xf]
  %v403 = vld [vmem:[%s1 + $0x4c8] sm:$0xf]
  %v404 = vld [vmem:[%s1 + $0x4cc] sm:$0xf]
  %v405 = vld [vmem:[%s1 + $0x4d0] sm:$0xf]
  %v406 = vld [vmem:[%s1 + $0x4d4] sm:$0xf]
  %v407 = vld [vmem:[%s1 + $0x4d8] sm:$0xf]
  %v408 = vld [vmem:[%s1 + $0x4dc] sm:$0xf]
  %v409 = vld [vmem:[%s1 + $0x4e0] sm:$0xf]
  %v410 = vld [vmem:[%s1 + $0x4e4] sm:$0xf]
  %v411 = vld [vmem:[%s1 + $0x4e8] sm:$0xf]
  %v412 = vld [vmem:[%s1 + $0x4ec] sm:$0xf]
  %v413 = vld [vmem:[%s1 + $0x4f0] sm:$0xf]
  %v414 = vld [vmem:[%s1 + $0x4f4] sm:$0xf]
  %v415 = vld [vmem:[%s1 + $0x4f8] sm:$0xf]
  %v416 = vld [vmem:[%s1 + $0x4fc] sm:$0xf]
  %v417 = vld [vmem:[%s1 + $0x500] sm:$0xf]
  %v418 = vld [vmem:[%s1 + $0x504] sm:$0xf]
  %v419 = vld [vmem:[%s1 + $0x508] sm:$0xf]
  %v420 = vld [vmem:[%s1 + $0x50c] sm:$0xf]
  %v421 = vld [vmem:[%s1 + $0x510] sm:$0xf]
  %v422 = vld [vmem:[%s1 + $0x514] sm:$0xf]
  %v423 = vld [vmem:[%s1 + $0x518] sm:$0xf]
  %v424 = vld [vmem:[%s1 + $0x51c] sm:$0xf]
  %v425 = vld [vmem:[%s1 + $0x520] sm:$0xf]
  %v426 = vld [vmem:[%s1 + $0x524] sm:$0xf]
  %v427 = vld [vmem:[%s1 + $0x528] sm:$0xf]
  %v428 = vld [vmem:[%s1 + $0x52c] sm:$0xf]
  %v429 = vld [vmem:[%s1 + $0x530] sm:$0xf]
  %v430 = vld [vmem:[%s1 + $0x534] sm:$0xf]
  %v431 = vld [vmem:[%s1 + $0x538] sm:$0xf]
  %v432 = vld [vmem:[%s1 + $0x53c] sm:$0xf]
  %v433 = vld [vmem:[%s1 + $0x540] sm:$0xf]
  %v434 = vld [vmem:[%s1 + $0x544] sm:$0xf]
  %v435 = vld [vmem:[%s1 + $0x548] sm:$0xf]
  %v436 = vld [vmem:[%s1 + $0x54c] sm:$0xf]
  %v437 = vld [vmem:[%s1 + $0x550] sm:$0xf]
  %v438 = vld [vmem:[%s1 + $0x554] sm:$0xf]
  %v439 = vld [vmem:[%s1 + $0x558] sm:$0xf]
  %v440 = vld [vmem:[%s1 + $0x55c] sm:$0xf]
  %v441 = vld [vmem:[%s1 + $0x560] sm:$0xf]
  %v442 = vld [vmem:[%s1 + $0x564] sm:$0xf]
  %v443 = vld [vmem:[%s1 + $0x568] sm:$0xf]
  %v444 = vld [vmem:[%s1 + $0x56c] sm:$0xf]
  %v445 = vld [vmem:[%s1 + $0x570] sm:$0xf]
  %v446 = vld [vmem:[%s1 + $0x574] sm:$0xf]
  %v447 = vld [vmem:[%s1 + $0x578] sm:$0xf]
  %v448 = vld [vmem:[%s1 + $0x57c] sm:$0xf]
  %v449 = vld [vmem:[%s1 + $0x580] sm:$0xf]
  %v450 = vld [vmem:[%s1 + $0x584] sm:$0xf]
  %v451 = vld [vmem:[%s1 + $0x588] sm:$0xf]
  %v452 = vld [vmem:[%s1 + $0x58c] sm:$0xf]
  %v453 = vld [vmem:[%s1 + $0x590] sm:$0xf]
  %v454 = vld [vmem:[%s1 + $0x594] sm:$0xf]
  %v455 = vld [vmem:[%s1 + $0x598] sm:$0xf]
  %v456 = vld [vmem:[%s1 + $0x59c] sm:$0xf]
  %v457 = vld [vmem:[%s1 + $0x5a0] sm:$0xf]
  %v458 = vld [vmem:[%s1 + $0x5a4] sm:$0xf]
  %v459 = vld [vmem:[%s1 + $0x5a8] sm:$0xf]
  %v460 = vld [vmem:[%s1 + $0x5ac] sm:$0xf]
  %v461 = vld [vmem:[%s1 + $0x5b0] sm:$0xf]
  %v462 = vld [vmem:[%s1 + $0x5b4] sm:$0xf]
  %v463 = vld [vmem:[%s1 + $0x5b8] sm:$0xf]
  %v464 = vld [vmem:[%s1 + $0x5bc] sm:$0xf]
  %v465 = vld [vmem:[%s1 + $0x5c0] sm:$0xf]
  %v466 = vld [vmem:[%s1 + $0x5c4] sm:$0xf]
  %v467 = vld [vmem:[%s1 + $0x5c8] sm:$0xf]
  %v468 = vld [vmem:[%s1 + $0x5cc] sm:$0xf]
  %v469 = vld [vmem:[%s1 + $0x5d0] sm:$0xf]
  %v470 = vld [vmem:[%s1 + $0x5d4] sm:$0xf]
  %v471 = vld [vmem:[%s1 + $0x5d8] sm:$0xf]
  %v472 = vld [vmem:[%s1 + $0x5dc] sm:$0xf]
  %v473 = vld [vmem:[%s1 + $0x5e0] sm:$0xf]
  %v474 = vld [vmem:[%s1 + $0x5e4] sm:$0xf]
  %v475 = vld [vmem:[%s1 + $0x5e8] sm:$0xf]
  %v476 = vld [vmem:[%s1 + $0x5ec] sm:$0xf]
  %v477 = vld [vmem:[%s1 + $0x5f0] sm:$0xf]
  %v478 = vld [vmem:[%s1 + $0x5f4] sm:$0xf]
  %v479 = vld [vmem:[%s1 + $0x5f8] sm:$0xf]
  %v480 = vld [vmem:[%s1 + $0x5fc] sm:$0xf]
  %v481 = vld [vmem:[%s1 + $0x600] sm:$0xf]
  %v482 = vld [vmem:[%s1 + $0x604] sm:$0xf]
  %v483 = vld [vmem:[%s1 + $0x608] sm:$0xf]
  %v484 = vld [vmem:[%s1 + $0x60c] sm:$0xf]
  %v485 = vld [vmem:[%s1 + $0x610] sm:$0xf]
  %v486 = vld [vmem:[%s1 + $0x614] sm:$0xf]
  %v487 = vld [vmem:[%s1 + $0x618] sm:$0xf]
  %v488 = vld [vmem:[%s1 + $0x61c] sm:$0xf]
  %v489 = vld [vmem:[%s1 + $0x620] sm:$0xf]
  %v490 = vld [vmem:[%s1 + $0x624] sm:$0xf]
  %v491 = vld [vmem:[%s1 + $0x628] sm:$0xf]
  %v492 = vld [vmem:[%s1 + $0x62c] sm:$0xf]
  %v493 = vld [vmem:[%s1 + $0x630] sm:$0xf]
  %v494 = vld [vmem:[%s1 + $0x634] sm:$0xf]
  %v495 = vld [vmem:[%s1 + $0x638] sm:$0xf]
  %v496 = vld [vmem:[%s1 + $0x63c] sm:$0xf]
  %v497 = vld [vmem:[%s1 + $0x640] sm:$0xf]
  %v498 = vld [vmem:[%s1 + $0x644] sm:$0xf]
  %v499 = vld [vmem:[%s1 + $0x648] sm:$0xf]
  %v500 = vld [vmem:[%s1 + $0x64c] sm:$0xf]
  %v501 = vld [vmem:[%s1 + $0x650] sm:$0xf]
  %v502 = vld [vmem:[%s1 + $0x654] sm:$0xf]
  %v503 = vld [vmem:[%s1 + $0x658] sm:$0xf]
  %v504 = vld [vmem:[%s1 + $0x65c] sm:$0xf]
  %v505 = vld [vmem:[%s1 + $0x660] sm:$0xf]
  %v506 = vld [vmem:[%s1 + $0x664] sm:$0xf]
  %v507 = vld [vmem:[%s1 + $0x668] sm:$0xf]
  %v508 = vld [vmem:[%s1 + $0x66c] sm:$0xf]
  %v509 = vld [vmem:[%s1 + $0x670] sm:$0xf]
  %v510 = vld [vmem:[%s1 + $0x674] sm:$0xf]
  %v511 = vld [vmem:[%s1 + $0x678] sm:$0xf]
  %v512 = vld [vmem:[%s1 + $0x67c] sm:$0xf]
  %v513 = vld [vmem:[%s1 + $0x680] sm:$0xf]
  %v514 = vld [vmem:[%s1 + $0x684] sm:$0xf]
  %v515 = vld [vmem:[%s1 + $0x688] sm:$0xf]
  %v516 = vld [vmem:[%s1 + $0x68c] sm:$0xf]
  %v517 = vld [vmem:[%s1 + $0x690] sm:$0xf]
  %v518 = vld [vmem:[%s1 + $0x694] sm:$0xf]
  %v519 = vld [vmem:[%s1 + $0x698] sm:$0xf]
  %v520 = vld [vmem:[%s1 + $0x69c] sm:$0xf]
  %v521 = vld [vmem:[%s1 + $0x6a0] sm:$0xf]
  %v522 = vld [vmem:[%s1 + $0x6a4] sm:$0xf]
  %v523 = vld [vmem:[%s1 + $0x6a8] sm:$0xf]
  %v524 = vld [vmem:[%s1 + $0x6ac] sm:$0xf]
  %v525 = vld [vmem:[%s1 + $0x6b0] sm:$0xf]
  %v526 = vld [vmem:[%s1 + $0x6b4] sm:$0xf]
  %v527 = vld [vmem:[%s1 + $0x6b8] sm:$0xf]
  %v528 = vld [vmem:[%s1 + $0x6bc] sm:$0xf]
  %v529 = vld [vmem:[%s1 + $0x6c0] sm:$0xf]
  %v530 = vld [vmem:[%s1 + $0x6c4] sm:$0xf]
  %v531 = vld [vmem:[%s1 + $0x6c8] sm:$0xf]
  %v532 = vld [vmem:[%s1 + $0x6cc] sm:$0xf]
  %v533 = vld [vmem:[%s1 + $0x6d0] sm:$0xf]
  %v534 = vld [vmem:[%s1 + $0x6d4] sm:$0xf]
  %v535 = vld [vmem:[%s1 + $0x6d8] sm:$0xf]
  %v536 = vld [vmem:[%s1 + $0x6dc] sm:$0xf]
  %v537 = vld [vmem:[%s1 + $0x6e0] sm:$0xf]
  %v538 = vld [vmem:[%s1 + $0x6e4] sm:$0xf]
  %v539 = vld [vmem:[%s1 + $0x6e8] sm:$0xf]
  %v540 = vld [vmem:[%s1 + $0x6ec] sm:$0xf]
  %v541 = vld [vmem:[%s1 + $0x6f0] sm:$0xf]
  %v542 = vld [vmem:[%s1 + $0x6f4] sm:$0xf]
  %v543 = vld [vmem:[%s1 + $0x6f8] sm:$0xf]
  %v544 = vld [vmem:[%s1 + $0x6fc] sm:$0xf]
  %v545 = vld [vmem:[%s1 + $0x700] sm:$0xf]
  %v546 = vld [vmem:[%s1 + $0x704] sm:$0xf]
  %v547 = vld [vmem:[%s1 + $0x708] sm:$0xf]
  %v548 = vld [vmem:[%s1 + $0x70c] sm:$0xf]
  %v549 = vld [vmem:[%s1 + $0x710] sm:$0xf]
  %v550 = vld [vmem:[%s1 + $0x714] sm:$0xf]
  %v551 = vld [vmem:[%s1 + $0x718] sm:$0xf]
  %v552 = vld [vmem:[%s1 + $0x71c] sm:$0xf]
  %v553 = vld [vmem:[%s1 + $0x720] sm:$0xf]
  %v554 = vld [vmem:[%s1 + $0x724] sm:$0xf]
  %v555 = vld [vmem:[%s1 + $0x728] sm:$0xf]
  %v556 = vld [vmem:[%s1 + $0x72c] sm:$0xf]
  %v557 = vld [vmem:[%s1 + $0x730] sm:$0xf]
  %v558 = vld [vmem:[%s1 + $0x734] sm:$0xf]
  %v559 = vld [vmem:[%s1 + $0x738] sm:$0xf]
  %v560 = vld [vmem:[%s1 + $0x73c] sm:$0xf]
  %v561 = vld [vmem:[%s1 + $0x740] sm:$0xf]
  %v562 = vld [vmem:[%s1 + $0x744] sm:$0xf]
  %v563 = vld [vmem:[%s1 + $0x748] sm:$0xf]
  %v564 = vld [vmem:[%s1 + $0x74c] sm:$0xf]
  %v565 = vld [vmem:[%s1 + $0x750] sm:$0xf]
  %v566 = vld [vmem:[%s1 + $0x754] sm:$0xf]
  %v567 = vld [vmem:[%s1 + $0x758] sm:$0xf]
  %v568 = vld [vmem:[%s1 + $0x75c] sm:$0xf]
  %v569 = vld [vmem:[%s1 + $0x760] sm:$0xf]
  %v570 = vld [vmem:[%s1 + $0x764] sm:$0xf]
  %v571 = vld [vmem:[%s1 + $0x768] sm:$0xf]
  %v572 = vld [vmem:[%s1 + $0x76c] sm:$0xf]
  %v573 = vld [vmem:[%s1 + $0x770] sm:$0xf]
  %v574 = vld [vmem:[%s1 + $0x774] sm:$0xf]
  %v575 = vld [vmem:[%s1 + $0x778] sm:$0xf]
  %v576 = vld [vmem:[%s1 + $0x77c] sm:$0xf]
  %v577 = vld [vmem:[%s1 + $0x780] sm:$0xf]
  %v578 = vld [vmem:[%s1 + $0x784] sm:$0xf]
  %v579 = vld [vmem:[%s1 + $0x788] sm:$0xf]
  %v580 = vld [vmem:[%s1 + $0x78c] sm:$0xf]
  %v581 = vld [vmem:[%s1 + $0x790] sm:$0xf]
  %v582 = vld [vmem:[%s1 + $0x794] sm:$0xf]
  %v583 = vld [vmem:[%s1 + $0x798] sm:$0xf]
  %v584 = vld [vmem:[%s1 + $0x79c] sm:$0xf]
  %v585 = vld [vmem:[%s1 + $0x7a0] sm:$0xf]
  %v586 = vld [vmem:[%s1 + $0x7a4] sm:$0xf]
  %v587 = vld [vmem:[%s1 + $0x7a8] sm:$0xf]
  %v588 = vld [vmem:[%s1 + $0x7ac] sm:$0xf]
  %v589 = vld [vmem:[%s1 + $0x7b0] sm:$0xf]
  %v590 = vld [vmem:[%s1 + $0x7b4] sm:$0xf]
  %v591 = vld [vmem:[%s1 + $0x7b8] sm:$0xf]
  %v592 = vld [vmem:[%s1 + $0x7bc] sm:$0xf]
  %v593 = vld [vmem:[%s1 + $0x7c0] sm:$0xf]
  %v594 = vld [vmem:[%s1 + $0x7c4] sm:$0xf]
  %v595 = vld [vmem:[%s1 + $0x7c8] sm:$0xf]
  %v596 = vld [vmem:[%s1 + $0x7cc] sm:$0xf]
  %v597 = vld [vmem:[%s1 + $0x7d0] sm:$0xf]
  %v598 = vld [vmem:[%s1 + $0x7d4] sm:$0xf]
  %v599 = vld [vmem:[%s1 + $0x7d8] sm:$0xf]
  %v600 = vld [vmem:[%s1 + $0x7dc] sm:$0xf]
  %v601 = vld [vmem:[%s1 + $0x7e0] sm:$0xf]
  %v602 = vld [vmem:[%s1 + $0x7e4] sm:$0xf]
  %v603 = vld [vmem:[%s1 + $0x7e8] sm:$0xf]
  %v604 = vld [vmem:[%s1 + $0x7ec] sm:$0xf]
  %v605 = vld [vmem:[%s1 + $0x7f0] sm:$0xf]
  %v606 = vld [vmem:[%s1 + $0x7f4] sm:$0xf]
  %v607 = vld [vmem:[%s1 + $0x7f8] sm:$0xf]
  %v608 = vld [vmem:[%s1 + $0x7fc] sm:$0xf]
  %v609 = vld [vmem:[%s1 + $0x800] sm:$0xf]
  %v610 = vld [vmem:[%s1 + $0x804] sm:$0xf]
  %v611 = vld [vmem:[%s1 + $0x808] sm:$0xf]
  %v612 = vld [vmem:[%s1 + $0x80c] sm:$0xf]
  %v613 = vld [vmem:[%s1 + $0x810] sm:$0xf]
  %v614 = vld [vmem:[%s1 + $0x814] sm:$0xf]
  %v615 = vld [vmem:[%s1 + $0x818] sm:$0xf]
  %v616 = vld [vmem:[%s1 + $0x81c] sm:$0xf]
  %v617 = vld [vmem:[%s1 + $0x820] sm:$0xf]
  %v618 = vld [vmem:[%s1 + $0x824] sm:$0xf]
  %v619 = vld [vmem:[%s1 + $0x828] sm:$0xf]
  %v620 = vld [vmem:[%s1 + $0x82c] sm:$0xf]
  %v621 = vld [vmem:[%s1 + $0x830] sm:$0xf]
  %v622 = vld [vmem:[%s1 + $0x834] sm:$0xf]
  %v623 = vld [vmem:[%s1 + $0x838] sm:$0xf]
  %v624 = vld [vmem:[%s1 + $0x83c] sm:$0xf]
  %v625 = vld [vmem:[%s1 + $0x840] sm:$0xf]
  %v626 = vld [vmem:[%s1 + $0x844] sm:$0xf]
  %v627 = vld [vmem:[%s1 + $0x848] sm:$0xf]
  %v628 = vld [vmem:[%s1 + $0x84c] sm:$0xf]
  %v629 = vld [vmem:[%s1 + $0x850] sm:$0xf]
  %v630 = vld [vmem:[%s1 + $0x854] sm:$0xf]
  %v631 = vld [vmem:[%s1 + $0x858] sm:$0xf]
  %v632 = vld [vmem:[%s1 + $0x85c] sm:$0xf]
  %v633 = vld [vmem:[%s1 + $0x860] sm:$0xf]
  %v634 = vld [vmem:[%s1 + $0x864] sm:$0xf]
  %v635 = vld [vmem:[%s1 + $0x868] sm:$0xf]
  %v636 = vld [vmem:[%s1 + $0x86c] sm:$0xf]
  %v637 = vld [vmem:[%s1 + $0x870] sm:$0xf]
  %v638 = vld [vmem:[%s1 + $0x874] sm:$0xf]
  %v639 = vld [vmem:[%s1 + $0x878] sm:$0xf]
  %v640 = vld [vmem:[%s1 + $0x87c] sm:$0xf]
  %v641 = vld [vmem:[%s1 + $0x880] sm:$0xf]
  %v642 = vld [vmem:[%s1 + $0x884] sm:$0xf]
  %v643 = vld [vmem:[%s1 + $0x888] sm:$0xf]
  %v644 = vld [vmem:[%s1 + $0x88c] sm:$0xf]
  %v645 = vld [vmem:[%s1 + $0x890] sm:$0xf]
  %v646 = vld [vmem:[%s1 + $0x894] sm:$0xf]
  %v647 = vld [vmem:[%s1 + $0x898] sm:$0xf]
  %v648 = vld [vmem:[%s1 + $0x89c] sm:$0xf]
  %v649 = vld [vmem:[%s1 + $0x8a0] sm:$0xf]
  %v650 = vld [vmem:[%s1 + $0x8a4] sm:$0xf]
  %v651 = vld [vmem:[%s1 + $0x8a8] sm:$0xf]
  %v652 = vld [vmem:[%s1 + $0x8ac] sm:$0xf]
  %v653 = vld [vmem:[%s1 + $0x8b0] sm:$0xf]
  %v654 = vld [vmem:[%s1 + $0x8b4] sm:$0xf]
  %v655 = vld [vmem:[%s1 + $0x8b8] sm:$0xf]
  %v656 = vld [vmem:[%s1 + $0x8bc] sm:$0xf]
  %v657 = vld [vmem:[%s1 + $0x8c0] sm:$0xf]
  %v658 = vld [vmem:[%s1 + $0x8c4] sm:$0xf]
  %v659 = vld [vmem:[%s1 + $0x8c8] sm:$0xf]
  %v660 = vld [vmem:[%s1 + $0x8cc] sm:$0xf]
  %v661 = vld [vmem:[%s1 + $0x8d0] sm:$0xf]
  %v662 = vld [vmem:[%s1 + $0x8d4] sm:$0xf]
  %v663 = vld [vmem:[%s1 + $0x8d8] sm:$0xf]
  %v664 = vld [vmem:[%s1 + $0x8dc] sm:$0xf]
  %v665 = vld [vmem:[%s1 + $0x8e0] sm:$0xf]
  %v666 = vld [vmem:[%s1 + $0x8e4] sm:$0xf]
  %v667 = vld [vmem:[%s1 + $0x8e8] sm:$0xf]
  %v668 = vld [vmem:[%s1 + $0x8ec] sm:$0xf]
  %v669 = vld [vmem:[%s1 + $0x8f0] sm:$0xf]
  %v670 = vld [vmem:[%s1 + $0x8f4] sm:$0xf]
  %v671 = vld [vmem:[%s1 + $0x8f8] sm:$0xf]
  %v672 = vld [vmem:[%s1 + $0x8fc] sm:$0xf]
  %v673 = vld [vmem:[%s1 + $0x900] sm:$0xf]
  %v674 = vld [vmem:[%s1 + $0x904] sm:$0xf]
  %v675 = vld [vmem:[%s1 + $0x908] sm:$0xf]
  %v676 = vld [vmem:[%s1 + $0x90c] sm:$0xf]
  %v677 = vld [vmem:[%s1 + $0x910] sm:$0xf]
  %v678 = vld [vmem:[%s1 + $0x914] sm:$0xf]
  %v679 = vld [vmem:[%s1 + $0x918] sm:$0xf]
  %v680 = vld [vmem:[%s1 + $0x91c] sm:$0xf]
  %v681 = vld [vmem:[%s1 + $0x920] sm:$0xf]
  %v682 = vld [vmem:[%s1 + $0x924] sm:$0xf]
  %v683 = vld [vmem:[%s1 + $0x928] sm:$0xf]
  %v684 = vld [vmem:[%s1 + $0x92c] sm:$0xf]
  %v685 = vld [vmem:[%s1 + $0x930] sm:$0xf]
  %v686 = vld [vmem:[%s1 + $0x934] sm:$0xf]
  %v687 = vld [vmem:[%s1 + $0x938] sm:$0xf]
  %v688 = vld [vmem:[%s1 + $0x93c] sm:$0xf]
  %v689 = vld [vmem:[%s1 + $0x940] sm:$0xf]
  %v690 = vld [vmem:[%s1 + $0x944] sm:$0xf]
  %v691 = vld [vmem:[%s1 + $0x948] sm:$0xf]
  %v692 = vld [vmem:[%s1 + $0x94c] sm:$0xf]
  %v693 = vld [vmem:[%s1 + $0x950] sm:$0xf]
  %v694 = vld [vmem:[%s1 + $0x954] sm:$0xf]
  %v695 = vld [vmem:[%s1 + $0x958] sm:$0xf]
  %v696 = vld [vmem:[%s1 + $0x95c] sm:$0xf]
  %v697 = vld [vmem:[%s2] sm:$0x1]
  %v699 = vlaneseq
  %v700 = vshrl.u32 %v699, 7
  %v701 = vsub.s32 0, %v700
  %v702 = vrot.slane %v697, %v701
  %v1304 = vunpack.c.l.b16 %v97
  %v1305 = vunpack.c.l.b16 %v98
  %v1306 = vunpack.c.l.b16 %v99
  %v1307 = vunpack.c.l.b16 %v100
  %v1308 = vunpack.c.l.b16 %v101
  %v1309 = vunpack.c.l.b16 %v102
  %v1310 = vunpack.c.l.b16 %v103
  %v1311 = vunpack.c.l.b16 %v104
  %v1312 = vunpack.c.l.b16 %v105
  %v1313 = vunpack.c.l.b16 %v106
  %v1314 = vunpack.c.l.b16 %v107
  %v1315 = vunpack.c.l.b16 %v108
  %v1316 = vunpack.c.l.b16 %v109
  %v1317 = vunpack.c.l.b16 %v110
  %v1318 = vunpack.c.l.b16 %v111
  %v1319 = vunpack.c.l.b16 %v112
  %v1320 = vunpack.c.l.b16 %v113
  %v1321 = vunpack.c.l.b16 %v114
  %v1322 = vunpack.c.l.b16 %v115
  %v1323 = vunpack.c.l.b16 %v116
  %v1324 = vunpack.c.l.b16 %v117
  %v1325 = vunpack.c.l.b16 %v118
  %v1326 = vunpack.c.l.b16 %v119
  %v1327 = vunpack.c.l.b16 %v120
  %v1328 = vunpack.c.l.b16 %v121
  %v1329 = vunpack.c.l.b16 %v122
  %v1330 = vunpack.c.l.b16 %v123
  %v1331 = vunpack.c.l.b16 %v124
  %v1332 = vunpack.c.l.b16 %v125
  %v1333 = vunpack.c.l.b16 %v126
  %v1334 = vunpack.c.l.b16 %v127
  %v1335 = vunpack.c.l.b16 %v128
  %v1336 = vunpack.c.l.b16 %v129
  %v1337 = vunpack.c.l.b16 %v130
  %v1338 = vunpack.c.l.b16 %v131
  %v1339 = vunpack.c.l.b16 %v132
  %v1340 = vunpack.c.l.b16 %v133
  %v1341 = vunpack.c.l.b16 %v134
  %v1342 = vunpack.c.l.b16 %v135
  %v1343 = vunpack.c.l.b16 %v136
  %v1344 = vunpack.c.l.b16 %v137
  %v1345 = vunpack.c.l.b16 %v138
  %v1346 = vunpack.c.l.b16 %v139
  %v1347 = vunpack.c.l.b16 %v140
  %v1348 = vunpack.c.l.b16 %v141
  %v1349 = vunpack.c.l.b16 %v142
  %v1350 = vunpack.c.l.b16 %v143
  %v1351 = vunpack.c.l.b16 %v144
  %v1352 = vunpack.c.l.b16 %v145
  %v1353 = vunpack.c.l.b16 %v146
  %v1354 = vunpack.c.l.b16 %v147
  %v1355 = vunpack.c.l.b16 %v148
  %v1356 = vunpack.c.l.b16 %v149
  %v1357 = vunpack.c.l.b16 %v150
  %v1358 = vunpack.c.l.b16 %v151
  %v1359 = vunpack.c.l.b16 %v152
  %v1360 = vunpack.c.l.b16 %v153
  %v1361 = vunpack.c.l.b16 %v154
  %v1362 = vunpack.c.l.b16 %v155
  %v1363 = vunpack.c.l.b16 %v156
  %v1364 = vunpack.c.l.b16 %v157
  %v1365 = vunpack.c.l.b16 %v158
  %v1366 = vunpack.c.l.b16 %v159
  %v1367 = vunpack.c.l.b16 %v160
  %v1368 = vunpack.c.l.b16 %v161
  %v1369 = vunpack.c.l.b16 %v162
  %v1370 = vunpack.c.l.b16 %v163
  %v1371 = vunpack.c.l.b16 %v164
  %v1372 = vunpack.c.l.b16 %v165
  %v1373 = vunpack.c.l.b16 %v166
  %v1374 = vunpack.c.l.b16 %v167
  %v1375 = vunpack.c.l.b16 %v168
  %v1376 = vunpack.c.l.b16 %v169
  %v1377 = vunpack.c.l.b16 %v170
  %v1378 = vunpack.c.l.b16 %v171
  %v1379 = vunpack.c.l.b16 %v172
  %v1380 = vunpack.c.l.b16 %v173
  %v1381 = vunpack.c.l.b16 %v174
  %v1382 = vunpack.c.l.b16 %v175
  %v1383 = vunpack.c.l.b16 %v176
  %v1384 = vunpack.c.l.b16 %v177
  %v1385 = vunpack.c.l.b16 %v178
  %v1386 = vunpack.c.l.b16 %v179
  %v1387 = vunpack.c.l.b16 %v180
  %v1388 = vunpack.c.l.b16 %v181
  %v1389 = vunpack.c.l.b16 %v182
  %v1390 = vunpack.c.l.b16 %v183
  %v1391 = vunpack.c.l.b16 %v184
  %v1392 = vunpack.c.l.b16 %v185
  %v1393 = vunpack.c.l.b16 %v186
  %v1394 = vunpack.c.l.b16 %v187
  %v1395 = vunpack.c.l.b16 %v188
  %v1396 = vunpack.c.l.b16 %v189
  %v1397 = vunpack.c.l.b16 %v190
  %v1398 = vunpack.c.l.b16 %v191
  %v1399 = vunpack.c.l.b16 %v192
  %v1400 = vunpack.c.l.b16 %v193
  %v1401 = vunpack.c.l.b16 %v194
  %v1402 = vunpack.c.l.b16 %v195
  %v1403 = vunpack.c.l.b16 %v196
  %v1404 = vunpack.c.l.b16 %v197
  %v1405 = vunpack.c.l.b16 %v198
  %v1406 = vunpack.c.l.b16 %v199
  %v1407 = vunpack.c.l.b16 %v200
  %v1408 = vunpack.c.l.b16 %v201
  %v1409 = vunpack.c.l.b16 %v202
  %v1410 = vunpack.c.l.b16 %v203
  %v1411 = vunpack.c.l.b16 %v204
  %v1412 = vunpack.c.l.b16 %v205
  %v1413 = vunpack.c.l.b16 %v206
  %v1414 = vunpack.c.l.b16 %v207
  %v1415 = vunpack.c.l.b16 %v208
  %v1416 = vunpack.c.l.b16 %v209
  %v1417 = vunpack.c.l.b16 %v210
  %v1418 = vunpack.c.l.b16 %v211
  %v1419 = vunpack.c.l.b16 %v212
  %v1420 = vunpack.c.l.b16 %v213
  %v1421 = vunpack.c.l.b16 %v214
  %v1422 = vunpack.c.l.b16 %v215
  %v1423 = vunpack.c.l.b16 %v216
  %v1424 = vunpack.c.l.b16 %v217
  %v1425 = vunpack.c.l.b16 %v218
  %v1426 = vunpack.c.l.b16 %v219
  %v1427 = vunpack.c.l.b16 %v220
  %v1428 = vunpack.c.l.b16 %v221
  %v1429 = vunpack.c.l.b16 %v222
  %v1430 = vunpack.c.l.b16 %v223
  %v1431 = vunpack.c.l.b16 %v224
  %v1432 = vunpack.c.l.b16 %v225
  %v1433 = vunpack.c.l.b16 %v226
  %v1434 = vunpack.c.l.b16 %v227
  %v1435 = vunpack.c.l.b16 %v228
  %v1436 = vunpack.c.l.b16 %v229
  %v1437 = vunpack.c.l.b16 %v230
  %v1438 = vunpack.c.l.b16 %v231
  %v1439 = vunpack.c.l.b16 %v232
  %v1440 = vunpack.c.l.b16 %v233
  %v1441 = vunpack.c.l.b16 %v234
  %v1442 = vunpack.c.l.b16 %v235
  %v1443 = vunpack.c.l.b16 %v236
  %v1444 = vunpack.c.l.b16 %v237
  %v1445 = vunpack.c.l.b16 %v238
  %v1446 = vunpack.c.l.b16 %v239
  %v1447 = vunpack.c.l.b16 %v240
  %v1448 = vunpack.c.l.b16 %v241
  %v1449 = vunpack.c.l.b16 %v242
  %v1450 = vunpack.c.l.b16 %v243
  %v1451 = vunpack.c.l.b16 %v244
  %v1452 = vunpack.c.l.b16 %v245
  %v1453 = vunpack.c.l.b16 %v246
  %v1454 = vunpack.c.l.b16 %v247
  %v1455 = vunpack.c.l.b16 %v248
  %v1456 = vunpack.c.l.b16 %v249
  %v1457 = vunpack.c.l.b16 %v250
  %v1458 = vunpack.c.l.b16 %v251
  %v1459 = vunpack.c.l.b16 %v252
  %v1460 = vunpack.c.l.b16 %v253
  %v1461 = vunpack.c.l.b16 %v254
  %v1462 = vunpack.c.l.b16 %v255
  %v1463 = vunpack.c.l.b16 %v256
  %v1464 = vunpack.c.l.b16 %v257
  %v1465 = vunpack.c.l.b16 %v258
  %v1466 = vunpack.c.l.b16 %v259
  %v1467 = vunpack.c.l.b16 %v260
  %v1468 = vunpack.c.l.b16 %v261
  %v1469 = vunpack.c.l.b16 %v262
  %v1470 = vunpack.c.l.b16 %v263
  %v1471 = vunpack.c.l.b16 %v264
  %v1472 = vunpack.c.l.b16 %v265
  %v1473 = vunpack.c.l.b16 %v266
  %v1474 = vunpack.c.l.b16 %v267
  %v1475 = vunpack.c.l.b16 %v268
  %v1476 = vunpack.c.l.b16 %v269
  %v1477 = vunpack.c.l.b16 %v270
  %v1478 = vunpack.c.l.b16 %v271
  %v1479 = vunpack.c.l.b16 %v272
  %v1480 = vunpack.c.l.b16 %v273
  %v1481 = vunpack.c.l.b16 %v274
  %v1482 = vunpack.c.l.b16 %v275
  %v1483 = vunpack.c.l.b16 %v276
  %v1484 = vunpack.c.l.b16 %v277
  %v1485 = vunpack.c.l.b16 %v278
  %v1486 = vunpack.c.l.b16 %v279
  %v1487 = vunpack.c.l.b16 %v280
  %v1488 = vunpack.c.l.b16 %v281
  %v1489 = vunpack.c.l.b16 %v282
  %v1490 = vunpack.c.l.b16 %v283
  %v1491 = vunpack.c.l.b16 %v284
  %v1492 = vunpack.c.l.b16 %v285
  %v1493 = vunpack.c.l.b16 %v286
  %v1494 = vunpack.c.l.b16 %v287
  %v1495 = vunpack.c.l.b16 %v288
  %v1496 = vunpack.c.l.b16 %v289
  %v1497 = vunpack.c.l.b16 %v290
  %v1498 = vunpack.c.l.b16 %v291
  %v1499 = vunpack.c.l.b16 %v292
  %v1500 = vunpack.c.l.b16 %v293
  %v1501 = vunpack.c.l.b16 %v294
  %v1502 = vunpack.c.l.b16 %v295
  %v1503 = vunpack.c.l.b16 %v296
  %v1504 = vunpack.c.l.b16 %v297
  %v1505 = vunpack.c.l.b16 %v298
  %v1506 = vunpack.c.l.b16 %v299
  %v1507 = vunpack.c.l.b16 %v300
  %v1508 = vunpack.c.l.b16 %v301
  %v1509 = vunpack.c.l.b16 %v302
  %v1510 = vunpack.c.l.b16 %v303
  %v1511 = vunpack.c.l.b16 %v304
  %v1512 = vunpack.c.l.b16 %v305
  %v1513 = vunpack.c.l.b16 %v306
  %v1514 = vunpack.c.l.b16 %v307
  %v1515 = vunpack.c.l.b16 %v308
  %v1516 = vunpack.c.l.b16 %v309
  %v1517 = vunpack.c.l.b16 %v310
  %v1518 = vunpack.c.l.b16 %v311
  %v1519 = vunpack.c.l.b16 %v312
  %v1520 = vunpack.c.l.b16 %v313
  %v1521 = vunpack.c.l.b16 %v314
  %v1522 = vunpack.c.l.b16 %v315
  %v1523 = vunpack.c.l.b16 %v316
  %v1524 = vunpack.c.l.b16 %v317
  %v1525 = vunpack.c.l.b16 %v318
  %v1526 = vunpack.c.l.b16 %v319
  %v1527 = vunpack.c.l.b16 %v320
  %v1528 = vunpack.c.l.b16 %v321
  %v1529 = vunpack.c.l.b16 %v322
  %v1530 = vunpack.c.l.b16 %v323
  %v1531 = vunpack.c.l.b16 %v324
  %v1532 = vunpack.c.l.b16 %v325
  %v1533 = vunpack.c.l.b16 %v326
  %v1534 = vunpack.c.l.b16 %v327
  %v1535 = vunpack.c.l.b16 %v328
  %v1536 = vunpack.c.l.b16 %v329
  %v1537 = vunpack.c.l.b16 %v330
  %v1538 = vunpack.c.l.b16 %v331
  %v1539 = vunpack.c.l.b16 %v332
  %v1540 = vunpack.c.l.b16 %v333
  %v1541 = vunpack.c.l.b16 %v334
  %v1542 = vunpack.c.l.b16 %v335
  %v1543 = vunpack.c.l.b16 %v336
  %v1544 = vunpack.c.l.b16 %v337
  %v1545 = vunpack.c.l.b16 %v338
  %v1546 = vunpack.c.l.b16 %v339
  %v1547 = vunpack.c.l.b16 %v340
  %v1548 = vunpack.c.l.b16 %v341
  %v1549 = vunpack.c.l.b16 %v342
  %v1550 = vunpack.c.l.b16 %v343
  %v1551 = vunpack.c.l.b16 %v344
  %v1552 = vunpack.c.l.b16 %v345
  %v1553 = vunpack.c.l.b16 %v346
  %v1554 = vunpack.c.l.b16 %v347
  %v1555 = vunpack.c.l.b16 %v348
  %v1556 = vunpack.c.l.b16 %v349
  %v1557 = vunpack.c.l.b16 %v350
  %v1558 = vunpack.c.l.b16 %v351
  %v1559 = vunpack.c.l.b16 %v352
  %v1560 = vunpack.c.l.b16 %v353
  %v1561 = vunpack.c.l.b16 %v354
  %v1562 = vunpack.c.l.b16 %v355
  %v1563 = vunpack.c.l.b16 %v356
  %v1564 = vunpack.c.l.b16 %v357
  %v1565 = vunpack.c.l.b16 %v358
  %v1566 = vunpack.c.l.b16 %v359
  %v1567 = vunpack.c.l.b16 %v360
  %v1568 = vunpack.c.l.b16 %v361
  %v1569 = vunpack.c.l.b16 %v362
  %v1570 = vunpack.c.l.b16 %v363
  %v1571 = vunpack.c.l.b16 %v364
  %v1572 = vunpack.c.l.b16 %v365
  %v1573 = vunpack.c.l.b16 %v366
  %v1574 = vunpack.c.l.b16 %v367
  %v1575 = vunpack.c.l.b16 %v368
  %v1576 = vunpack.c.l.b16 %v369
  %v1577 = vunpack.c.l.b16 %v370
  %v1578 = vunpack.c.l.b16 %v371
  %v1579 = vunpack.c.l.b16 %v372
  %v1580 = vunpack.c.l.b16 %v373
  %v1581 = vunpack.c.l.b16 %v374
  %v1582 = vunpack.c.l.b16 %v375
  %v1583 = vunpack.c.l.b16 %v376
  %v1584 = vunpack.c.l.b16 %v377
  %v1585 = vunpack.c.l.b16 %v378
  %v1586 = vunpack.c.l.b16 %v379
  %v1587 = vunpack.c.l.b16 %v380
  %v1588 = vunpack.c.l.b16 %v381
  %v1589 = vunpack.c.l.b16 %v382
  %v1590 = vunpack.c.l.b16 %v383
  %v1591 = vunpack.c.l.b16 %v384
  %v1592 = vunpack.c.l.b16 %v385
  %v1593 = vunpack.c.l.b16 %v386
  %v1594 = vunpack.c.l.b16 %v387
  %v1595 = vunpack.c.l.b16 %v388
  %v1596 = vunpack.c.l.b16 %v389
  %v1597 = vunpack.c.l.b16 %v390
  %v1598 = vunpack.c.l.b16 %v391
  %v1599 = vunpack.c.l.b16 %v392
  %v1600 = vunpack.c.l.b16 %v393
  %v1601 = vunpack.c.l.b16 %v394
  %v1602 = vunpack.c.l.b16 %v395
  %v1603 = vunpack.c.l.b16 %v396
  %v1604 = vunpack.c.l.b16 %v397
  %v1605 = vunpack.c.l.b16 %v398
  %v1606 = vunpack.c.l.b16 %v399
  %v1607 = vunpack.c.l.b16 %v400
  %v1608 = vunpack.c.l.b16 %v401
  %v1609 = vunpack.c.l.b16 %v402
  %v1610 = vunpack.c.l.b16 %v403
  %v1611 = vunpack.c.l.b16 %v404
  %v1612 = vunpack.c.l.b16 %v405
  %v1613 = vunpack.c.l.b16 %v406
  %v1614 = vunpack.c.l.b16 %v407
  %v1615 = vunpack.c.l.b16 %v408
  %v1616 = vunpack.c.l.b16 %v409
  %v1617 = vunpack.c.l.b16 %v410
  %v1618 = vunpack.c.l.b16 %v411
  %v1619 = vunpack.c.l.b16 %v412
  %v1620 = vunpack.c.l.b16 %v413
  %v1621 = vunpack.c.l.b16 %v414
  %v1622 = vunpack.c.l.b16 %v415
  %v1623 = vunpack.c.l.b16 %v416
  %v1624 = vunpack.c.l.b16 %v417
  %v1625 = vunpack.c.l.b16 %v418
  %v1626 = vunpack.c.l.b16 %v419
  %v1627 = vunpack.c.l.b16 %v420
  %v1628 = vunpack.c.l.b16 %v421
  %v1629 = vunpack.c.l.b16 %v422
  %v1630 = vunpack.c.l.b16 %v423
  %v1631 = vunpack.c.l.b16 %v424
  %v1632 = vunpack.c.l.b16 %v425
  %v1633 = vunpack.c.l.b16 %v426
  %v1634 = vunpack.c.l.b16 %v427
  %v1635 = vunpack.c.l.b16 %v428
  %v1636 = vunpack.c.l.b16 %v429
  %v1637 = vunpack.c.l.b16 %v430
  %v1638 = vunpack.c.l.b16 %v431
  %v1639 = vunpack.c.l.b16 %v432
  %v1640 = vunpack.c.l.b16 %v433
  %v1641 = vunpack.c.l.b16 %v434
  %v1642 = vunpack.c.l.b16 %v435
  %v1643 = vunpack.c.l.b16 %v436
  %v1644 = vunpack.c.l.b16 %v437
  %v1645 = vunpack.c.l.b16 %v438
  %v1646 = vunpack.c.l.b16 %v439
  %v1647 = vunpack.c.l.b16 %v440
  %v1648 = vunpack.c.l.b16 %v441
  %v1649 = vunpack.c.l.b16 %v442
  %v1650 = vunpack.c.l.b16 %v443
  %v1651 = vunpack.c.l.b16 %v444
  %v1652 = vunpack.c.l.b16 %v445
  %v1653 = vunpack.c.l.b16 %v446
  %v1654 = vunpack.c.l.b16 %v447
  %v1655 = vunpack.c.l.b16 %v448
  %v1656 = vunpack.c.l.b16 %v449
  %v1657 = vunpack.c.l.b16 %v450
  %v1658 = vunpack.c.l.b16 %v451
  %v1659 = vunpack.c.l.b16 %v452
  %v1660 = vunpack.c.l.b16 %v453
  %v1661 = vunpack.c.l.b16 %v454
  %v1662 = vunpack.c.l.b16 %v455
  %v1663 = vunpack.c.l.b16 %v456
  %v1664 = vunpack.c.l.b16 %v457
  %v1665 = vunpack.c.l.b16 %v458
  %v1666 = vunpack.c.l.b16 %v459
  %v1667 = vunpack.c.l.b16 %v460
  %v1668 = vunpack.c.l.b16 %v461
  %v1669 = vunpack.c.l.b16 %v462
  %v1670 = vunpack.c.l.b16 %v463
  %v1671 = vunpack.c.l.b16 %v464
  %v1672 = vunpack.c.l.b16 %v465
  %v1673 = vunpack.c.l.b16 %v466
  %v1674 = vunpack.c.l.b16 %v467
  %v1675 = vunpack.c.l.b16 %v468
  %v1676 = vunpack.c.l.b16 %v469
  %v1677 = vunpack.c.l.b16 %v470
  %v1678 = vunpack.c.l.b16 %v471
  %v1679 = vunpack.c.l.b16 %v472
  %v1680 = vunpack.c.l.b16 %v473
  %v1681 = vunpack.c.l.b16 %v474
  %v1682 = vunpack.c.l.b16 %v475
  %v1683 = vunpack.c.l.b16 %v476
  %v1684 = vunpack.c.l.b16 %v477
  %v1685 = vunpack.c.l.b16 %v478
  %v1686 = vunpack.c.l.b16 %v479
  %v1687 = vunpack.c.l.b16 %v480
  %v1688 = vunpack.c.l.b16 %v481
  %v1689 = vunpack.c.l.b16 %v482
  %v1690 = vunpack.c.l.b16 %v483
  %v1691 = vunpack.c.l.b16 %v484
  %v1692 = vunpack.c.l.b16 %v485
  %v1693 = vunpack.c.l.b16 %v486
  %v1694 = vunpack.c.l.b16 %v487
  %v1695 = vunpack.c.l.b16 %v488
  %v1696 = vunpack.c.l.b16 %v489
  %v1697 = vunpack.c.l.b16 %v490
  %v1698 = vunpack.c.l.b16 %v491
  %v1699 = vunpack.c.l.b16 %v492
  %v1700 = vunpack.c.l.b16 %v493
  %v1701 = vunpack.c.l.b16 %v494
  %v1702 = vunpack.c.l.b16 %v495
  %v1703 = vunpack.c.l.b16 %v496
  %v1704 = vunpack.c.l.b16 %v497
  %v1705 = vunpack.c.l.b16 %v498
  %v1706 = vunpack.c.l.b16 %v499
  %v1707 = vunpack.c.l.b16 %v500
  %v1708 = vunpack.c.l.b16 %v501
  %v1709 = vunpack.c.l.b16 %v502
  %v1710 = vunpack.c.l.b16 %v503
  %v1711 = vunpack.c.l.b16 %v504
  %v1712 = vunpack.c.l.b16 %v505
  %v1713 = vunpack.c.l.b16 %v506
  %v1714 = vunpack.c.l.b16 %v507
  %v1715 = vunpack.c.l.b16 %v508
  %v1716 = vunpack.c.l.b16 %v509
  %v1717 = vunpack.c.l.b16 %v510
  %v1718 = vunpack.c.l.b16 %v511
  %v1719 = vunpack.c.l.b16 %v512
  %v1720 = vunpack.c.l.b16 %v513
  %v1721 = vunpack.c.l.b16 %v514
  %v1722 = vunpack.c.l.b16 %v515
  %v1723 = vunpack.c.l.b16 %v516
  %v1724 = vunpack.c.l.b16 %v517
  %v1725 = vunpack.c.l.b16 %v518
  %v1726 = vunpack.c.l.b16 %v519
  %v1727 = vunpack.c.l.b16 %v520
  %v1728 = vunpack.c.l.b16 %v521
  %v1729 = vunpack.c.l.b16 %v522
  %v1730 = vunpack.c.l.b16 %v523
  %v1731 = vunpack.c.l.b16 %v524
  %v1732 = vunpack.c.l.b16 %v525
  %v1733 = vunpack.c.l.b16 %v526
  %v1734 = vunpack.c.l.b16 %v527
  %v1735 = vunpack.c.l.b16 %v528
  %v1736 = vunpack.c.l.b16 %v529
  %v1737 = vunpack.c.l.b16 %v530
  %v1738 = vunpack.c.l.b16 %v531
  %v1739 = vunpack.c.l.b16 %v532
  %v1740 = vunpack.c.l.b16 %v533
  %v1741 = vunpack.c.l.b16 %v534
  %v1742 = vunpack.c.l.b16 %v535
  %v1743 = vunpack.c.l.b16 %v536
  %v1744 = vunpack.c.l.b16 %v537
  %v1745 = vunpack.c.l.b16 %v538
  %v1746 = vunpack.c.l.b16 %v539
  %v1747 = vunpack.c.l.b16 %v540
  %v1748 = vunpack.c.l.b16 %v541
  %v1749 = vunpack.c.l.b16 %v542
  %v1750 = vunpack.c.l.b16 %v543
  %v1751 = vunpack.c.l.b16 %v544
  %v1752 = vunpack.c.l.b16 %v545
  %v1753 = vunpack.c.l.b16 %v546
  %v1754 = vunpack.c.l.b16 %v547
  %v1755 = vunpack.c.l.b16 %v548
  %v1756 = vunpack.c.l.b16 %v549
  %v1757 = vunpack.c.l.b16 %v550
  %v1758 = vunpack.c.l.b16 %v551
  %v1759 = vunpack.c.l.b16 %v552
  %v1760 = vunpack.c.l.b16 %v553
  %v1761 = vunpack.c.l.b16 %v554
  %v1762 = vunpack.c.l.b16 %v555
  %v1763 = vunpack.c.l.b16 %v556
  %v1764 = vunpack.c.l.b16 %v557
  %v1765 = vunpack.c.l.b16 %v558
  %v1766 = vunpack.c.l.b16 %v559
  %v1767 = vunpack.c.l.b16 %v560
  %v1768 = vunpack.c.l.b16 %v561
  %v1769 = vunpack.c.l.b16 %v562
  %v1770 = vunpack.c.l.b16 %v563
  %v1771 = vunpack.c.l.b16 %v564
  %v1772 = vunpack.c.l.b16 %v565
  %v1773 = vunpack.c.l.b16 %v566
  %v1774 = vunpack.c.l.b16 %v567
  %v1775 = vunpack.c.l.b16 %v568
  %v1776 = vunpack.c.l.b16 %v569
  %v1777 = vunpack.c.l.b16 %v570
  %v1778 = vunpack.c.l.b16 %v571
  %v1779 = vunpack.c.l.b16 %v572
  %v1780 = vunpack.c.l.b16 %v573
  %v1781 = vunpack.c.l.b16 %v574
  %v1782 = vunpack.c.l.b16 %v575
  %v1783 = vunpack.c.l.b16 %v576
  %v1784 = vunpack.c.l.b16 %v577
  %v1785 = vunpack.c.l.b16 %v578
  %v1786 = vunpack.c.l.b16 %v579
  %v1787 = vunpack.c.l.b16 %v580
  %v1788 = vunpack.c.l.b16 %v581
  %v1789 = vunpack.c.l.b16 %v582
  %v1790 = vunpack.c.l.b16 %v583
  %v1791 = vunpack.c.l.b16 %v584
  %v1792 = vunpack.c.l.b16 %v585
  %v1793 = vunpack.c.l.b16 %v586
  %v1794 = vunpack.c.l.b16 %v587
  %v1795 = vunpack.c.l.b16 %v588
  %v1796 = vunpack.c.l.b16 %v589
  %v1797 = vunpack.c.l.b16 %v590
  %v1798 = vunpack.c.l.b16 %v591
  %v1799 = vunpack.c.l.b16 %v592
  %v1800 = vunpack.c.l.b16 %v593
  %v1801 = vunpack.c.l.b16 %v594
  %v1802 = vunpack.c.l.b16 %v595
  %v1803 = vunpack.c.l.b16 %v596
  %v1804 = vunpack.c.l.b16 %v597
  %v1805 = vunpack.c.l.b16 %v598
  %v1806 = vunpack.c.l.b16 %v599
  %v1807 = vunpack.c.l.b16 %v600
  %v1808 = vunpack.c.l.b16 %v601
  %v1809 = vunpack.c.l.b16 %v602
  %v1810 = vunpack.c.l.b16 %v603
  %v1811 = vunpack.c.l.b16 %v604
  %v1812 = vunpack.c.l.b16 %v605
  %v1813 = vunpack.c.l.b16 %v606
  %v1814 = vunpack.c.l.b16 %v607
  %v1815 = vunpack.c.l.b16 %v608
  %v1816 = vunpack.c.l.b16 %v609
  %v1817 = vunpack.c.l.b16 %v610
  %v1818 = vunpack.c.l.b16 %v611
  %v1819 = vunpack.c.l.b16 %v612
  %v1820 = vunpack.c.l.b16 %v613
  %v1821 = vunpack.c.l.b16 %v614
  %v1822 = vunpack.c.l.b16 %v615
  %v1823 = vunpack.c.l.b16 %v616
  %v1824 = vunpack.c.l.b16 %v617
  %v1825 = vunpack.c.l.b16 %v618
  %v1826 = vunpack.c.l.b16 %v619
  %v1827 = vunpack.c.l.b16 %v620
  %v1828 = vunpack.c.l.b16 %v621
  %v1829 = vunpack.c.l.b16 %v622
  %v1830 = vunpack.c.l.b16 %v623
  %v1831 = vunpack.c.l.b16 %v624
  %v1832 = vunpack.c.l.b16 %v625
  %v1833 = vunpack.c.l.b16 %v626
  %v1834 = vunpack.c.l.b16 %v627
  %v1835 = vunpack.c.l.b16 %v628
  %v1836 = vunpack.c.l.b16 %v629
  %v1837 = vunpack.c.l.b16 %v630
  %v1838 = vunpack.c.l.b16 %v631
  %v1839 = vunpack.c.l.b16 %v632
  %v1840 = vunpack.c.l.b16 %v633
  %v1841 = vunpack.c.l.b16 %v634
  %v1842 = vunpack.c.l.b16 %v635
  %v1843 = vunpack.c.l.b16 %v636
  %v1844 = vunpack.c.l.b16 %v637
  %v1845 = vunpack.c.l.b16 %v638
  %v1846 = vunpack.c.l.b16 %v639
  %v1847 = vunpack.c.l.b16 %v640
  %v1848 = vunpack.c.l.b16 %v641
  %v1849 = vunpack.c.l.b16 %v642
  %v1850 = vunpack.c.l.b16 %v643
  %v1851 = vunpack.c.l.b16 %v644
  %v1852 = vunpack.c.l.b16 %v645
  %v1853 = vunpack.c.l.b16 %v646
  %v1854 = vunpack.c.l.b16 %v647
  %v1855 = vunpack.c.l.b16 %v648
  %v1856 = vunpack.c.l.b16 %v649
  %v1857 = vunpack.c.l.b16 %v650
  %v1858 = vunpack.c.l.b16 %v651
  %v1859 = vunpack.c.l.b16 %v652
  %v1860 = vunpack.c.l.b16 %v653
  %v1861 = vunpack.c.l.b16 %v654
  %v1862 = vunpack.c.l.b16 %v655
  %v1863 = vunpack.c.l.b16 %v656
  %v1864 = vunpack.c.l.b16 %v657
  %v1865 = vunpack.c.l.b16 %v658
  %v1866 = vunpack.c.l.b16 %v659
  %v1867 = vunpack.c.l.b16 %v660
  %v1868 = vunpack.c.l.b16 %v661
  %v1869 = vunpack.c.l.b16 %v662
  %v1870 = vunpack.c.l.b16 %v663
  %v1871 = vunpack.c.l.b16 %v664
  %v1872 = vunpack.c.l.b16 %v665
  %v1873 = vunpack.c.l.b16 %v666
  %v1874 = vunpack.c.l.b16 %v667
  %v1875 = vunpack.c.l.b16 %v668
  %v1876 = vunpack.c.l.b16 %v669
  %v1877 = vunpack.c.l.b16 %v670
  %v1878 = vunpack.c.l.b16 %v671
  %v1879 = vunpack.c.l.b16 %v672
  %v1880 = vunpack.c.l.b16 %v673
  %v1881 = vunpack.c.l.b16 %v674
  %v1882 = vunpack.c.l.b16 %v675
  %v1883 = vunpack.c.l.b16 %v676
  %v1884 = vunpack.c.l.b16 %v677
  %v1885 = vunpack.c.l.b16 %v678
  %v1886 = vunpack.c.l.b16 %v679
  %v1887 = vunpack.c.l.b16 %v680
  %v1888 = vunpack.c.l.b16 %v681
  %v1889 = vunpack.c.l.b16 %v682
  %v1890 = vunpack.c.l.b16 %v683
  %v1891 = vunpack.c.l.b16 %v684
  %v1892 = vunpack.c.l.b16 %v685
  %v1893 = vunpack.c.l.b16 %v686
  %v1894 = vunpack.c.l.b16 %v687
  %v1895 = vunpack.c.l.b16 %v688
  %v1896 = vunpack.c.l.b16 %v689
  %v1897 = vunpack.c.l.b16 %v690
  %v1898 = vunpack.c.l.b16 %v691
  %v1899 = vunpack.c.l.b16 %v692
  %v1900 = vunpack.c.l.b16 %v693
  %v1901 = vunpack.c.l.b16 %v694
  %v1902 = vunpack.c.l.b16 %v695
  %v1903 = vunpack.c.l.b16 %v696
  %v1904 = vpack.c.b16 %v1305, %v1304
  %v1905 = vpack.c.b16 %v1307, %v1306
  %v1906 = vpack.c.b16 %v1309, %v1308
  %v1907 = vpack.c.b16 %v1311, %v1310
  %v1908 = vpack.c.b16 %v1313, %v1312
  %v1909 = vpack.c.b16 %v1315, %v1314
  %v1910 = vpack.c.b16 %v1317, %v1316
  %v1911 = vpack.c.b16 %v1319, %v1318
  %v1912 = vpack.c.b16 %v1321, %v1320
  %v1913 = vpack.c.b16 %v1323, %v1322
  %v1914 = vpack.c.b16 %v1325, %v1324
  %v1915 = vpack.c.b16 %v1327, %v1326
  %v1916 = vpack.c.b16 %v1329, %v1328
  %v1917 = vpack.c.b16 %v1331, %v1330
  %v1918 = vpack.c.b16 %v1333, %v1332
  %v1919 = vpack.c.b16 %v1335, %v1334
  %v1920 = vpack.c.b16 %v1337, %v1336
  %v1921 = vpack.c.b16 %v1339, %v1338
  %v1922 = vpack.c.b16 %v1341, %v1340
  %v1923 = vpack.c.b16 %v1343, %v1342
  %v1924 = vpack.c.b16 %v1345, %v1344
  %v1925 = vpack.c.b16 %v1347, %v1346
  %v1926 = vpack.c.b16 %v1349, %v1348
  %v1927 = vpack.c.b16 %v1351, %v1350
  %v1928 = vpack.c.b16 %v1353, %v1352
  %v1929 = vpack.c.b16 %v1355, %v1354
  %v1930 = vpack.c.b16 %v1357, %v1356
  %v1931 = vpack.c.b16 %v1359, %v1358
  %v1932 = vpack.c.b16 %v1361, %v1360
  %v1933 = vpack.c.b16 %v1363, %v1362
  %v1934 = vpack.c.b16 %v1365, %v1364
  %v1935 = vpack.c.b16 %v1367, %v1366
  %v1936 = vpack.c.b16 %v1369, %v1368
  %v1937 = vpack.c.b16 %v1371, %v1370
  %v1938 = vpack.c.b16 %v1373, %v1372
  %v1939 = vpack.c.b16 %v1375, %v1374
  %v1940 = vpack.c.b16 %v1377, %v1376
  %v1941 = vpack.c.b16 %v1379, %v1378
  %v1942 = vpack.c.b16 %v1381, %v1380
  %v1943 = vpack.c.b16 %v1383, %v1382
  %v1944 = vpack.c.b16 %v1385, %v1384
  %v1945 = vpack.c.b16 %v1387, %v1386
  %v1946 = vpack.c.b16 %v1389, %v1388
  %v1947 = vpack.c.b16 %v1391, %v1390
  %v1948 = vpack.c.b16 %v1393, %v1392
  %v1949 = vpack.c.b16 %v1395, %v1394
  %v1950 = vpack.c.b16 %v1397, %v1396
  %v1951 = vpack.c.b16 %v1399, %v1398
  %v1952 = vpack.c.b16 %v1401, %v1400
  %v1953 = vpack.c.b16 %v1403, %v1402
  %v1954 = vpack.c.b16 %v1405, %v1404
  %v1955 = vpack.c.b16 %v1407, %v1406
  %v1956 = vpack.c.b16 %v1409, %v1408
  %v1957 = vpack.c.b16 %v1411, %v1410
  %v1958 = vpack.c.b16 %v1413, %v1412
  %v1959 = vpack.c.b16 %v1415, %v1414
  %v1960 = vpack.c.b16 %v1417, %v1416
  %v1961 = vpack.c.b16 %v1419, %v1418
  %v1962 = vpack.c.b16 %v1421, %v1420
  %v1963 = vpack.c.b16 %v1423, %v1422
  %v1964 = vpack.c.b16 %v1425, %v1424
  %v1965 = vpack.c.b16 %v1427, %v1426
  %v1966 = vpack.c.b16 %v1429, %v1428
  %v1967 = vpack.c.b16 %v1431, %v1430
  %v1968 = vpack.c.b16 %v1433, %v1432
  %v1969 = vpack.c.b16 %v1435, %v1434
  %v1970 = vpack.c.b16 %v1437, %v1436
  %v1971 = vpack.c.b16 %v1439, %v1438
  %v1972 = vpack.c.b16 %v1441, %v1440
  %v1973 = vpack.c.b16 %v1443, %v1442
  %v1974 = vpack.c.b16 %v1445, %v1444
  %v1975 = vpack.c.b16 %v1447, %v1446
  %v1976 = vpack.c.b16 %v1449, %v1448
  %v1977 = vpack.c.b16 %v1451, %v1450
  %v1978 = vpack.c.b16 %v1453, %v1452
  %v1979 = vpack.c.b16 %v1455, %v1454
  %v1980 = vpack.c.b16 %v1457, %v1456
  %v1981 = vpack.c.b16 %v1459, %v1458
  %v1982 = vpack.c.b16 %v1461, %v1460
  %v1983 = vpack.c.b16 %v1463, %v1462
  %v1984 = vpack.c.b16 %v1465, %v1464
  %v1985 = vpack.c.b16 %v1467, %v1466
  %v1986 = vpack.c.b16 %v1469, %v1468
  %v1987 = vpack.c.b16 %v1471, %v1470
  %v1988 = vpack.c.b16 %v1473, %v1472
  %v1989 = vpack.c.b16 %v1475, %v1474
  %v1990 = vpack.c.b16 %v1477, %v1476
  %v1991 = vpack.c.b16 %v1479, %v1478
  %v1992 = vpack.c.b16 %v1481, %v1480
  %v1993 = vpack.c.b16 %v1483, %v1482
  %v1994 = vpack.c.b16 %v1485, %v1484
  %v1995 = vpack.c.b16 %v1487, %v1486
  %v1996 = vpack.c.b16 %v1489, %v1488
  %v1997 = vpack.c.b16 %v1491, %v1490
  %v1998 = vpack.c.b16 %v1493, %v1492
  %v1999 = vpack.c.b16 %v1495, %v1494
  %v2000 = vpack.c.b16 %v1497, %v1496
  %v2001 = vpack.c.b16 %v1499, %v1498
  %v2002 = vpack.c.b16 %v1501, %v1500
  %v2003 = vpack.c.b16 %v1503, %v1502
  %v2004 = vpack.c.b16 %v1505, %v1504
  %v2005 = vpack.c.b16 %v1507, %v1506
  %v2006 = vpack.c.b16 %v1509, %v1508
  %v2007 = vpack.c.b16 %v1511, %v1510
  %v2008 = vpack.c.b16 %v1513, %v1512
  %v2009 = vpack.c.b16 %v1515, %v1514
  %v2010 = vpack.c.b16 %v1517, %v1516
  %v2011 = vpack.c.b16 %v1519, %v1518
  %v2012 = vpack.c.b16 %v1521, %v1520
  %v2013 = vpack.c.b16 %v1523, %v1522
  %v2014 = vpack.c.b16 %v1525, %v1524
  %v2015 = vpack.c.b16 %v1527, %v1526
  %v2016 = vpack.c.b16 %v1529, %v1528
  %v2017 = vpack.c.b16 %v1531, %v1530
  %v2018 = vpack.c.b16 %v1533, %v1532
  %v2019 = vpack.c.b16 %v1535, %v1534
  %v2020 = vpack.c.b16 %v1537, %v1536
  %v2021 = vpack.c.b16 %v1539, %v1538
  %v2022 = vpack.c.b16 %v1541, %v1540
  %v2023 = vpack.c.b16 %v1543, %v1542
  %v2024 = vpack.c.b16 %v1545, %v1544
  %v2025 = vpack.c.b16 %v1547, %v1546
  %v2026 = vpack.c.b16 %v1549, %v1548
  %v2027 = vpack.c.b16 %v1551, %v1550
  %v2028 = vpack.c.b16 %v1553, %v1552
  %v2029 = vpack.c.b16 %v1555, %v1554
  %v2030 = vpack.c.b16 %v1557, %v1556
  %v2031 = vpack.c.b16 %v1559, %v1558
  %v2032 = vpack.c.b16 %v1561, %v1560
  %v2033 = vpack.c.b16 %v1563, %v1562
  %v2034 = vpack.c.b16 %v1565, %v1564
  %v2035 = vpack.c.b16 %v1567, %v1566
  %v2036 = vpack.c.b16 %v1569, %v1568
  %v2037 = vpack.c.b16 %v1571, %v1570
  %v2038 = vpack.c.b16 %v1573, %v1572
  %v2039 = vpack.c.b16 %v1575, %v1574
  %v2040 = vpack.c.b16 %v1577, %v1576
  %v2041 = vpack.c.b16 %v1579, %v1578
  %v2042 = vpack.c.b16 %v1581, %v1580
  %v2043 = vpack.c.b16 %v1583, %v1582
  %v2044 = vpack.c.b16 %v1585, %v1584
  %v2045 = vpack.c.b16 %v1587, %v1586
  %v2046 = vpack.c.b16 %v1589, %v1588
  %v2047 = vpack.c.b16 %v1591, %v1590
  %v2048 = vpack.c.b16 %v1593, %v1592
  %v2049 = vpack.c.b16 %v1595, %v1594
  %v2050 = vpack.c.b16 %v1597, %v1596
  %v2051 = vpack.c.b16 %v1599, %v1598
  %v2052 = vpack.c.b16 %v1601, %v1600
  %v2053 = vpack.c.b16 %v1603, %v1602
  %v2054 = vpack.c.b16 %v1605, %v1604
  %v2055 = vpack.c.b16 %v1607, %v1606
  %v2056 = vpack.c.b16 %v1609, %v1608
  %v2057 = vpack.c.b16 %v1611, %v1610
  %v2058 = vpack.c.b16 %v1613, %v1612
  %v2059 = vpack.c.b16 %v1615, %v1614
  %v2060 = vpack.c.b16 %v1617, %v1616
  %v2061 = vpack.c.b16 %v1619, %v1618
  %v2062 = vpack.c.b16 %v1621, %v1620
  %v2063 = vpack.c.b16 %v1623, %v1622
  %v2064 = vpack.c.b16 %v1625, %v1624
  %v2065 = vpack.c.b16 %v1627, %v1626
  %v2066 = vpack.c.b16 %v1629, %v1628
  %v2067 = vpack.c.b16 %v1631, %v1630
  %v2068 = vpack.c.b16 %v1633, %v1632
  %v2069 = vpack.c.b16 %v1635, %v1634
  %v2070 = vpack.c.b16 %v1637, %v1636
  %v2071 = vpack.c.b16 %v1639, %v1638
  %v2072 = vpack.c.b16 %v1641, %v1640
  %v2073 = vpack.c.b16 %v1643, %v1642
  %v2074 = vpack.c.b16 %v1645, %v1644
  %v2075 = vpack.c.b16 %v1647, %v1646
  %v2076 = vpack.c.b16 %v1649, %v1648
  %v2077 = vpack.c.b16 %v1651, %v1650
  %v2078 = vpack.c.b16 %v1653, %v1652
  %v2079 = vpack.c.b16 %v1655, %v1654
  %v2080 = vpack.c.b16 %v1657, %v1656
  %v2081 = vpack.c.b16 %v1659, %v1658
  %v2082 = vpack.c.b16 %v1661, %v1660
  %v2083 = vpack.c.b16 %v1663, %v1662
  %v2084 = vpack.c.b16 %v1665, %v1664
  %v2085 = vpack.c.b16 %v1667, %v1666
  %v2086 = vpack.c.b16 %v1669, %v1668
  %v2087 = vpack.c.b16 %v1671, %v1670
  %v2088 = vpack.c.b16 %v1673, %v1672
  %v2089 = vpack.c.b16 %v1675, %v1674
  %v2090 = vpack.c.b16 %v1677, %v1676
  %v2091 = vpack.c.b16 %v1679, %v1678
  %v2092 = vpack.c.b16 %v1681, %v1680
  %v2093 = vpack.c.b16 %v1683, %v1682
  %v2094 = vpack.c.b16 %v1685, %v1684
  %v2095 = vpack.c.b16 %v1687, %v1686
  %v2096 = vpack.c.b16 %v1689, %v1688
  %v2097 = vpack.c.b16 %v1691, %v1690
  %v2098 = vpack.c.b16 %v1693, %v1692
  %v2099 = vpack.c.b16 %v1695, %v1694
  %v2100 = vpack.c.b16 %v1697, %v1696
  %v2101 = vpack.c.b16 %v1699, %v1698
  %v2102 = vpack.c.b16 %v1701, %v1700
  %v2103 = vpack.c.b16 %v1703, %v1702
  %v2104 = vpack.c.b16 %v1705, %v1704
  %v2105 = vpack.c.b16 %v1707, %v1706
  %v2106 = vpack.c.b16 %v1709, %v1708
  %v2107 = vpack.c.b16 %v1711, %v1710
  %v2108 = vpack.c.b16 %v1713, %v1712
  %v2109 = vpack.c.b16 %v1715, %v1714
  %v2110 = vpack.c.b16 %v1717, %v1716
  %v2111 = vpack.c.b16 %v1719, %v1718
  %v2112 = vpack.c.b16 %v1721, %v1720
  %v2113 = vpack.c.b16 %v1723, %v1722
  %v2114 = vpack.c.b16 %v1725, %v1724
  %v2115 = vpack.c.b16 %v1727, %v1726
  %v2116 = vpack.c.b16 %v1729, %v1728
  %v2117 = vpack.c.b16 %v1731, %v1730
  %v2118 = vpack.c.b16 %v1733, %v1732
  %v2119 = vpack.c.b16 %v1735, %v1734
  %v2120 = vpack.c.b16 %v1737, %v1736
  %v2121 = vpack.c.b16 %v1739, %v1738
  %v2122 = vpack.c.b16 %v1741, %v1740
  %v2123 = vpack.c.b16 %v1743, %v1742
  %v2124 = vpack.c.b16 %v1745, %v1744
  %v2125 = vpack.c.b16 %v1747, %v1746
  %v2126 = vpack.c.b16 %v1749, %v1748
  %v2127 = vpack.c.b16 %v1751, %v1750
  %v2128 = vpack.c.b16 %v1753, %v1752
  %v2129 = vpack.c.b16 %v1755, %v1754
  %v2130 = vpack.c.b16 %v1757, %v1756
  %v2131 = vpack.c.b16 %v1759, %v1758
  %v2132 = vpack.c.b16 %v1761, %v1760
  %v2133 = vpack.c.b16 %v1763, %v1762
  %v2134 = vpack.c.b16 %v1765, %v1764
  %v2135 = vpack.c.b16 %v1767, %v1766
  %v2136 = vpack.c.b16 %v1769, %v1768
  %v2137 = vpack.c.b16 %v1771, %v1770
  %v2138 = vpack.c.b16 %v1773, %v1772
  %v2139 = vpack.c.b16 %v1775, %v1774
  %v2140 = vpack.c.b16 %v1777, %v1776
  %v2141 = vpack.c.b16 %v1779, %v1778
  %v2142 = vpack.c.b16 %v1781, %v1780
  %v2143 = vpack.c.b16 %v1783, %v1782
  %v2144 = vpack.c.b16 %v1785, %v1784
  %v2145 = vpack.c.b16 %v1787, %v1786
  %v2146 = vpack.c.b16 %v1789, %v1788
  %v2147 = vpack.c.b16 %v1791, %v1790
  %v2148 = vpack.c.b16 %v1793, %v1792
  %v2149 = vpack.c.b16 %v1795, %v1794
  %v2150 = vpack.c.b16 %v1797, %v1796
  %v2151 = vpack.c.b16 %v1799, %v1798
  %v2152 = vpack.c.b16 %v1801, %v1800
  %v2153 = vpack.c.b16 %v1803, %v1802
  %v2154 = vpack.c.b16 %v1805, %v1804
  %v2155 = vpack.c.b16 %v1807, %v1806
  %v2156 = vpack.c.b16 %v1809, %v1808
  %v2157 = vpack.c.b16 %v1811, %v1810
  %v2158 = vpack.c.b16 %v1813, %v1812
  %v2159 = vpack.c.b16 %v1815, %v1814
  %v2160 = vpack.c.b16 %v1817, %v1816
  %v2161 = vpack.c.b16 %v1819, %v1818
  %v2162 = vpack.c.b16 %v1821, %v1820
  %v2163 = vpack.c.b16 %v1823, %v1822
  %v2164 = vpack.c.b16 %v1825, %v1824
  %v2165 = vpack.c.b16 %v1827, %v1826
  %v2166 = vpack.c.b16 %v1829, %v1828
  %v2167 = vpack.c.b16 %v1831, %v1830
  %v2168 = vpack.c.b16 %v1833, %v1832
  %v2169 = vpack.c.b16 %v1835, %v1834
  %v2170 = vpack.c.b16 %v1837, %v1836
  %v2171 = vpack.c.b16 %v1839, %v1838
  %v2172 = vpack.c.b16 %v1841, %v1840
  %v2173 = vpack.c.b16 %v1843, %v1842
  %v2174 = vpack.c.b16 %v1845, %v1844
  %v2175 = vpack.c.b16 %v1847, %v1846
  %v2176 = vpack.c.b16 %v1849, %v1848
  %v2177 = vpack.c.b16 %v1851, %v1850
  %v2178 = vpack.c.b16 %v1853, %v1852
  %v2179 = vpack.c.b16 %v1855, %v1854
  %v2180 = vpack.c.b16 %v1857, %v1856
  %v2181 = vpack.c.b16 %v1859, %v1858
  %v2182 = vpack.c.b16 %v1861, %v1860
  %v2183 = vpack.c.b16 %v1863, %v1862
  %v2184 = vpack.c.b16 %v1865, %v1864
  %v2185 = vpack.c.b16 %v1867, %v1866
  %v2186 = vpack.c.b16 %v1869, %v1868
  %v2187 = vpack.c.b16 %v1871, %v1870
  %v2188 = vpack.c.b16 %v1873, %v1872
  %v2189 = vpack.c.b16 %v1875, %v1874
  %v2190 = vpack.c.b16 %v1877, %v1876
  %v2191 = vpack.c.b16 %v1879, %v1878
  %v2192 = vpack.c.b16 %v1881, %v1880
  %v2193 = vpack.c.b16 %v1883, %v1882
  %v2194 = vpack.c.b16 %v1885, %v1884
  %v2195 = vpack.c.b16 %v1887, %v1886
  %v2196 = vpack.c.b16 %v1889, %v1888
  %v2197 = vpack.c.b16 %v1891, %v1890
  %v2198 = vpack.c.b16 %v1893, %v1892
  %v2199 = vpack.c.b16 %v1895, %v1894
  %v2200 = vpack.c.b16 %v1897, %v1896
  %v2201 = vpack.c.b16 %v1899, %v1898
  %v2202 = vpack.c.b16 %v1901, %v1900
  %v2203 = vpack.c.b16 %v1903, %v1902
  %vm2504 = vcmask 523264
  %v2506 = vsel %vm2504, %v96, 0
  %2508 = vmatprep.subr.bf16.mxu0 0
  %2509 = vmatpush1.bf16.msra.mxu0 %v1904
  %2510 = vmatprep.subr.bf16.mxu0 0
  %2511 = vmatpush1.bf16.msra.mxu0 %v1905
  %2512 = vmatprep.subr.bf16.mxu0 0
  %2513 = vmatpush1.bf16.msra.mxu0 %v1906
  %2514 = vmatprep.subr.bf16.mxu0 0
  %2515 = vmatpush1.bf16.msra.mxu0 %v1907
  %2516 = vmatprep.subr.bf16.mxu0 0
  %2517 = vmatpush1.bf16.msra.mxu0 %v1908
  %2518 = vmatprep.subr.bf16.mxu0 0
  %2519 = vmatpush1.bf16.msra.mxu0 %v1909
  %2520 = vmatprep.subr.bf16.mxu0 0
  %2521 = vmatpush1.bf16.msra.mxu0 %v1910
  %2522 = vmatprep.subr.bf16.mxu0 0
  %2523 = vmatpush1.bf16.msra.mxu0 %v1911
  %2524 = vmatprep.subr.bf16.mxu0 0
  %2525 = vmatpush1.bf16.msra.mxu0 %v1912
  %2526 = vmatprep.subr.bf16.mxu0 0
  %2527 = vmatpush1.bf16.msra.mxu0 %v1913
  %2528 = vmatprep.subr.bf16.mxu0 0
  %2529 = vmatpush1.bf16.msra.mxu0 %v1914
  %2530 = vmatprep.subr.bf16.mxu0 0
  %2531 = vmatpush1.bf16.msra.mxu0 %v1915
  %2532 = vmatprep.subr.bf16.mxu0 0
  %2533 = vmatpush1.bf16.msra.mxu0 %v1916
  %2534 = vmatprep.subr.bf16.mxu0 0
  %2535 = vmatpush1.bf16.msra.mxu0 %v1917
  %2536 = vmatprep.subr.bf16.mxu0 0
  %2537 = vmatpush1.bf16.msra.mxu0 %v1918
  %2538 = vmatprep.subr.bf16.mxu0 0
  %2539 = vmatpush1.bf16.msra.mxu0 %v1919
  %2540 = vmatprep.mubr.bf16.mxu0 %v60
  %2541 = vmatmul.mubr.bf16.gmra.mrb[0].mxu0 %v59
  %v2542 = vpop.f32.mrb[0].mxu0
  %v2543 = vadd.f32 %v702, %v2542
  %v2544 = vpop.f32.mrb[0].mxu0
  %v2545 = vpop.f32.mrb[0].mxu0
  %v2546 = vpop.f32.mrb[0].mxu0
  %2547 = vdwg.mxu0
  %2548 = vmatprep.subr.bf16.mxu0 0
  %2549 = vmatpush1.bf16.msra.mxu0 %v1920
  %2550 = vmatprep.subr.bf16.mxu0 0
  %2551 = vmatpush1.bf16.msra.mxu0 %v1921
  %2552 = vmatprep.subr.bf16.mxu0 0
  %2553 = vmatpush1.bf16.msra.mxu0 %v1922
  %2554 = vmatprep.subr.bf16.mxu0 0
  %2555 = vmatpush1.bf16.msra.mxu0 %v1923
  %2556 = vmatprep.subr.bf16.mxu0 0
  %2557 = vmatpush1.bf16.msra.mxu0 %v1924
  %2558 = vmatprep.subr.bf16.mxu0 0
  %2559 = vmatpush1.bf16.msra.mxu0 %v1925
  %2560 = vmatprep.subr.bf16.mxu0 0
  %2561 = vmatpush1.bf16.msra.mxu0 %v1926
  %2562 = vmatprep.subr.bf16.mxu0 0
  %2563 = vmatpush1.bf16.msra.mxu0 %v1927
  %2564 = vmatprep.subr.bf16.mxu0 0
  %2565 = vmatpush1.bf16.msra.mxu0 %v1928
  %2566 = vmatprep.subr.bf16.mxu0 0
  %2567 = vmatpush1.bf16.msra.mxu0 %v1929
  %2568 = vmatprep.subr.bf16.mxu0 0
  %2569 = vmatpush1.bf16.msra.mxu0 %v1930
  %2570 = vmatprep.subr.bf16.mxu0 0
  %2571 = vmatpush1.bf16.msra.mxu0 %v1931
  %2572 = vmatprep.subr.bf16.mxu0 0
  %2573 = vmatpush1.bf16.msra.mxu0 %v1932
  %2574 = vmatprep.subr.bf16.mxu0 0
  %2575 = vmatpush1.bf16.msra.mxu0 %v1933
  %2576 = vmatprep.subr.bf16.mxu0 0
  %2577 = vmatpush1.bf16.msra.mxu0 %v1934
  %2578 = vmatprep.subr.bf16.mxu0 0
  %2579 = vmatpush1.bf16.msra.mxu0 %v1935
  %2580 = vmatprep.mubr.bf16.mxu0 %v62
  %2581 = vmatmul.mubr.bf16.gmra.mrb[0].mxu0 %v61
  %v2582 = vpop.f32.mrb[0].mxu0
  %v2583 = vadd.f32 %v2543, %v2582
  %v2584 = vpop.f32.mrb[0].mxu0
  %v2585 = vpop.f32.mrb[0].mxu0
  %v2586 = vpop.f32.mrb[0].mxu0
  %2587 = vdwg.mxu0
  %2588 = vmatprep.subr.bf16.mxu0 0
  %2589 = vmatpush1.bf16.msra.mxu0 %v1936
  %2590 = vmatprep.subr.bf16.mxu0 0
  %2591 = vmatpush1.bf16.msra.mxu0 %v1937
  %2592 = vmatprep.subr.bf16.mxu0 0
  %2593 = vmatpush1.bf16.msra.mxu0 %v1938
  %2594 = vmatprep.subr.bf16.mxu0 0
  %2595 = vmatpush1.bf16.msra.mxu0 %v1939
  %2596 = vmatprep.subr.bf16.mxu0 0
  %2597 = vmatpush1.bf16.msra.mxu0 %v1940
  %2598 = vmatprep.subr.bf16.mxu0 0
  %2599 = vmatpush1.bf16.msra.mxu0 %v1941
  %2600 = vmatprep.subr.bf16.mxu0 0
  %2601 = vmatpush1.bf16.msra.mxu0 %v1942
  %2602 = vmatprep.subr.bf16.mxu0 0
  %2603 = vmatpush1.bf16.msra.mxu0 %v1943
  %2604 = vmatprep.subr.bf16.mxu0 0
  %2605 = vmatpush1.bf16.msra.mxu0 %v1944
  %2606 = vmatprep.subr.bf16.mxu0 0
  %2607 = vmatpush1.bf16.msra.mxu0 %v1945
  %2608 = vmatprep.subr.bf16.mxu0 0
  %2609 = vmatpush1.bf16.msra.mxu0 %v1946
  %2610 = vmatprep.subr.bf16.mxu0 0
  %2611 = vmatpush1.bf16.msra.mxu0 %v1947
  %2612 = vmatprep.subr.bf16.mxu0 0
  %2613 = vmatpush1.bf16.msra.mxu0 %v1948
  %2614 = vmatprep.subr.bf16.mxu0 0
  %2615 = vmatpush1.bf16.msra.mxu0 %v1949
  %2616 = vmatprep.subr.bf16.mxu0 0
  %2617 = vmatpush1.bf16.msra.mxu0 %v1950
  %2618 = vmatprep.subr.bf16.mxu0 0
  %2619 = vmatpush1.bf16.msra.mxu0 %v1951
  %2620 = vmatprep.mubr.bf16.mxu0 %v64
  %2621 = vmatmul.mubr.bf16.gmra.mrb[0].mxu0 %v63
  %v2622 = vpop.f32.mrb[0].mxu0
  %v2623 = vadd.f32 %v2583, %v2622
  %v2624 = vpop.f32.mrb[0].mxu0
  %v2625 = vpop.f32.mrb[0].mxu0
  %v2626 = vpop.f32.mrb[0].mxu0
  %2627 = vdwg.mxu0
  %2628 = vmatprep.subr.bf16.mxu0 0
  %2629 = vmatpush1.bf16.msra.mxu0 %v1952
  %2630 = vmatprep.subr.bf16.mxu0 0
  %2631 = vmatpush1.bf16.msra.mxu0 %v1953
  %2632 = vmatprep.subr.bf16.mxu0 0
  %2633 = vmatpush1.bf16.msra.mxu0 %v1954
  %2634 = vmatprep.subr.bf16.mxu0 0
  %2635 = vmatpush1.bf16.msra.mxu0 %v1955
  %2636 = vmatprep.subr.bf16.mxu0 0
  %2637 = vmatpush1.bf16.msra.mxu0 %v1956
  %2638 = vmatprep.subr.bf16.mxu0 0
  %2639 = vmatpush1.bf16.msra.mxu0 %v1957
  %2640 = vmatprep.subr.bf16.mxu0 0
  %2641 = vmatpush1.bf16.msra.mxu0 %v1958
  %2642 = vmatprep.subr.bf16.mxu0 0
  %2643 = vmatpush1.bf16.msra.mxu0 %v1959
  %2644 = vmatprep.subr.bf16.mxu0 0
  %2645 = vmatpush1.bf16.msra.mxu0 %v1960
  %2646 = vmatprep.subr.bf16.mxu0 0
  %2647 = vmatpush1.bf16.msra.mxu0 %v1961
  %2648 = vmatprep.subr.bf16.mxu0 0
  %2649 = vmatpush1.bf16.msra.mxu0 %v1962
  %2650 = vmatprep.subr.bf16.mxu0 0
  %2651 = vmatpush1.bf16.msra.mxu0 %v1963
  %2652 = vmatprep.subr.bf16.mxu0 0
  %2653 = vmatpush1.bf16.msra.mxu0 %v1964
  %2654 = vmatprep.subr.bf16.mxu0 0
  %2655 = vmatpush1.bf16.msra.mxu0 %v1965
  %2656 = vmatprep.subr.bf16.mxu0 0
  %2657 = vmatpush1.bf16.msra.mxu0 %v1966
  %2658 = vmatprep.subr.bf16.mxu0 0
  %2659 = vmatpush1.bf16.msra.mxu0 %v1967
  %2660 = vmatprep.mubr.bf16.mxu0 %v66
  %2661 = vmatmul.mubr.bf16.gmra.mrb[0].mxu0 %v65
  %v2662 = vpop.f32.mrb[0].mxu0
  %v2663 = vadd.f32 %v2623, %v2662
  %v2664 = vpop.f32.mrb[0].mxu0
  %v2665 = vpop.f32.mrb[0].mxu0
  %v2666 = vpop.f32.mrb[0].mxu0
  %2667 = vdwg.mxu0
  %2668 = vmatprep.subr.bf16.mxu0 0
  %2669 = vmatpush1.bf16.msra.mxu0 %v1968
  %2670 = vmatprep.subr.bf16.mxu0 0
  %2671 = vmatpush1.bf16.msra.mxu0 %v1969
  %2672 = vmatprep.subr.bf16.mxu0 0
  %2673 = vmatpush1.bf16.msra.mxu0 %v1970
  %2674 = vmatprep.subr.bf16.mxu0 0
  %2675 = vmatpush1.bf16.msra.mxu0 %v1971
  %2676 = vmatprep.subr.bf16.mxu0 0
  %2677 = vmatpush1.bf16.msra.mxu0 %v1972
  %2678 = vmatprep.subr.bf16.mxu0 0
  %2679 = vmatpush1.bf16.msra.mxu0 %v1973
  %2680 = vmatprep.subr.bf16.mxu0 0
  %2681 = vmatpush1.bf16.msra.mxu0 %v1974
  %2682 = vmatprep.subr.bf16.mxu0 0
  %2683 = vmatpush1.bf16.msra.mxu0 %v1975
  %2684 = vmatprep.subr.bf16.mxu0 0
  %2685 = vmatpush1.bf16.msra.mxu0 %v1976
  %2686 = vmatprep.subr.bf16.mxu0 0
  %2687 = vmatpush1.bf16.msra.mxu0 %v1977
  %2688 = vmatprep.subr.bf16.mxu0 0
  %2689 = vmatpush1.bf16.msra.mxu0 %v1978
  %2690 = vmatprep.subr.bf16.mxu0 0
  %2691 = vmatpush1.bf16.msra.mxu0 %v1979
  %2692 = vmatprep.subr.bf16.mxu0 0
  %2693 = vmatpush1.bf16.msra.mxu0 %v1980
  %2694 = vmatprep.subr.bf16.mxu0 0
  %2695 = vmatpush1.bf16.msra.mxu0 %v1981
  %2696 = vmatprep.subr.bf16.mxu0 0
  %2697 = vmatpush1.bf16.msra.mxu0 %v1982
  %2698 = vmatprep.subr.bf16.mxu0 0
  %2699 = vmatpush1.bf16.msra.mxu0 %v1983
  %2700 = vmatprep.mubr.bf16.mxu0 %v68
  %2701 = vmatmul.mubr.bf16.gmra.mrb[0].mxu0 %v67
  %v2702 = vpop.f32.mrb[0].mxu0
  %v2703 = vadd.f32 %v2663, %v2702
  %v2704 = vpop.f32.mrb[0].mxu0
  %v2705 = vpop.f32.mrb[0].mxu0
  %v2706 = vpop.f32.mrb[0].mxu0
  %2707 = vdwg.mxu0
  %2708 = vmatprep.subr.bf16.mxu0 0
  %2709 = vmatpush1.bf16.msra.mxu0 %v1984
  %2710 = vmatprep.subr.bf16.mxu0 0
  %2711 = vmatpush1.bf16.msra.mxu0 %v1985
  %2712 = vmatprep.subr.bf16.mxu0 0
  %2713 = vmatpush1.bf16.msra.mxu0 %v1986
  %2714 = vmatprep.subr.bf16.mxu0 0
  %2715 = vmatpush1.bf16.msra.mxu0 %v1987
  %2716 = vmatprep.subr.bf16.mxu0 0
  %2717 = vmatpush1.bf16.msra.mxu0 %v1988
  %2718 = vmatprep.subr.bf16.mxu0 0
  %2719 = vmatpush1.bf16.msra.mxu0 %v1989
  %2720 = vmatprep.subr.bf16.mxu0 0
  %2721 = vmatpush1.bf16.msra.mxu0 %v1990
  %2722 = vmatprep.subr.bf16.mxu0 0
  %2723 = vmatpush1.bf16.msra.mxu0 %v1991
  %2724 = vmatprep.subr.bf16.mxu0 0
  %2725 = vmatpush1.bf16.msra.mxu0 %v1992
  %2726 = vmatprep.subr.bf16.mxu0 0
  %2727 = vmatpush1.bf16.msra.mxu0 %v1993
  %2728 = vmatprep.subr.bf16.mxu0 0
  %2729 = vmatpush1.bf16.msra.mxu0 %v1994
  %2730 = vmatprep.subr.bf16.mxu0 0
  %2731 = vmatpush1.bf16.msra.mxu0 %v1995
  %2732 = vmatprep.subr.bf16.mxu0 0
  %2733 = vmatpush1.bf16.msra.mxu0 %v1996
  %2734 = vmatprep.subr.bf16.mxu0 0
  %2735 = vmatpush1.bf16.msra.mxu0 %v1997
  %2736 = vmatprep.subr.bf16.mxu0 0
  %2737 = vmatpush1.bf16.msra.mxu0 %v1998
  %2738 = vmatprep.subr.bf16.mxu0 0
  %2739 = vmatpush1.bf16.msra.mxu0 %v1999
  %2740 = vmatprep.mubr.bf16.mxu0 %v70
  %2741 = vmatmul.mubr.bf16.gmra.mrb[0].mxu0 %v69
  %v2742 = vpop.f32.mrb[0].mxu0
  %v2743 = vadd.f32 %v2703, %v2742
  %v2744 = vpop.f32.mrb[0].mxu0
  %v2745 = vpop.f32.mrb[0].mxu0
  %v2746 = vpop.f32.mrb[0].mxu0
  %2747 = vdwg.mxu0
  %2748 = vmatprep.subr.bf16.mxu0 0
  %2749 = vmatpush1.bf16.msra.mxu0 %v2000
  %2750 = vmatprep.subr.bf16.mxu0 0
  %2751 = vmatpush1.bf16.msra.mxu0 %v2001
  %2752 = vmatprep.subr.bf16.mxu0 0
  %2753 = vmatpush1.bf16.msra.mxu0 %v2002
  %2754 = vmatprep.subr.bf16.mxu0 0
  %2755 = vmatpush1.bf16.msra.mxu0 %v2003
  %2756 = vmatprep.subr.bf16.mxu0 0
  %2757 = vmatpush1.bf16.msra.mxu0 %v2004
  %2758 = vmatprep.subr.bf16.mxu0 0
  %2759 = vmatpush1.bf16.msra.mxu0 %v2005
  %2760 = vmatprep.subr.bf16.mxu0 0
  %2761 = vmatpush1.bf16.msra.mxu0 %v2006
  %2762 = vmatprep.subr.bf16.mxu0 0
  %2763 = vmatpush1.bf16.msra.mxu0 %v2007
  %2764 = vmatprep.subr.bf16.mxu0 0
  %2765 = vmatpush1.bf16.msra.mxu0 %v2008
  %2766 = vmatprep.subr.bf16.mxu0 0
  %2767 = vmatpush1.bf16.msra.mxu0 %v2009
  %2768 = vmatprep.subr.bf16.mxu0 0
  %2769 = vmatpush1.bf16.msra.mxu0 %v2010
  %2770 = vmatprep.subr.bf16.mxu0 0
  %2771 = vmatpush1.bf16.msra.mxu0 %v2011
  %2772 = vmatprep.subr.bf16.mxu0 0
  %2773 = vmatpush1.bf16.msra.mxu0 %v2012
  %2774 = vmatprep.subr.bf16.mxu0 0
  %2775 = vmatpush1.bf16.msra.mxu0 %v2013
  %2776 = vmatprep.subr.bf16.mxu0 0
  %2777 = vmatpush1.bf16.msra.mxu0 %v2014
  %2778 = vmatprep.subr.bf16.mxu0 0
  %2779 = vmatpush1.bf16.msra.mxu0 %v2015
  %2780 = vmatprep.mubr.bf16.mxu0 %v72
  %2781 = vmatmul.mubr.bf16.gmra.mrb[0].mxu0 %v71
  %v2782 = vpop.f32.mrb[0].mxu0
  %v2783 = vadd.f32 %v2743, %v2782
  %v2784 = vpop.f32.mrb[0].mxu0
  %v2785 = vpop.f32.mrb[0].mxu0
  %v2786 = vpop.f32.mrb[0].mxu0
  %2787 = vdwg.mxu0
  %2788 = vmatprep.subr.bf16.mxu0 0
  %2789 = vmatpush1.bf16.msra.mxu0 %v2016
  %2790 = vmatprep.subr.bf16.mxu0 0
  %2791 = vmatpush1.bf16.msra.mxu0 %v2017
  %2792 = vmatprep.subr.bf16.mxu0 0
  %2793 = vmatpush1.bf16.msra.mxu0 %v2018
  %2794 = vmatprep.subr.bf16.mxu0 0
  %2795 = vmatpush1.bf16.msra.mxu0 %v2019
  %2796 = vmatprep.subr.bf16.mxu0 0
  %2797 = vmatpush1.bf16.msra.mxu0 %v2020
  %2798 = vmatprep.subr.bf16.mxu0 0
  %2799 = vmatpush1.bf16.msra.mxu0 %v2021
  %2800 = vmatprep.subr.bf16.mxu0 0
  %2801 = vmatpush1.bf16.msra.mxu0 %v2022
  %2802 = vmatprep.subr.bf16.mxu0 0
  %2803 = vmatpush1.bf16.msra.mxu0 %v2023
  %2804 = vmatprep.subr.bf16.mxu0 0
  %2805 = vmatpush1.bf16.msra.mxu0 %v2024
  %2806 = vmatprep.subr.bf16.mxu0 0
  %2807 = vmatpush1.bf16.msra.mxu0 %v2025
  %2808 = vmatprep.subr.bf16.mxu0 0
  %2809 = vmatpush1.bf16.msra.mxu0 %v2026
  %2810 = vmatprep.subr.bf16.mxu0 0
  %2811 = vmatpush1.bf16.msra.mxu0 %v2027
  %2812 = vmatprep.subr.bf16.mxu0 0
  %2813 = vmatpush1.bf16.msra.mxu0 %v2028
  %2814 = vmatprep.subr.bf16.mxu0 0
  %2815 = vmatpush1.bf16.msra.mxu0 %v2029
  %2816 = vmatprep.subr.bf16.mxu0 0
  %2817 = vmatpush1.bf16.msra.mxu0 %v2030
  %2818 = vmatprep.subr.bf16.mxu0 0
  %2819 = vmatpush1.bf16.msra.mxu0 %v2031
  %2820 = vmatprep.mubr.bf16.mxu0 %v74
  %2821 = vmatmul.mubr.bf16.gmra.mrb[0].mxu0 %v73
  %v2822 = vpop.f32.mrb[0].mxu0
  %v2823 = vadd.f32 %v2783, %v2822
  %v2824 = vpop.f32.mrb[0].mxu0
  %v2825 = vpop.f32.mrb[0].mxu0
  %v2826 = vpop.f32.mrb[0].mxu0
  %2827 = vdwg.mxu0
  %2828 = vmatprep.subr.bf16.mxu0 0
  %2829 = vmatpush1.bf16.msra.mxu0 %v2032
  %2830 = vmatprep.subr.bf16.mxu0 0
  %2831 = vmatpush1.bf16.msra.mxu0 %v2033
  %2832 = vmatprep.subr.bf16.mxu0 0
  %2833 = vmatpush1.bf16.msra.mxu0 %v2034
  %2834 = vmatprep.subr.bf16.mxu0 0
  %2835 = vmatpush1.bf16.msra.mxu0 %v2035
  %2836 = vmatprep.subr.bf16.mxu0 0
  %2837 = vmatpush1.bf16.msra.mxu0 %v2036
  %2838 = vmatprep.subr.bf16.mxu0 0
  %2839 = vmatpush1.bf16.msra.mxu0 %v2037
  %2840 = vmatprep.subr.bf16.mxu0 0
  %2841 = vmatpush1.bf16.msra.mxu0 %v2038
  %2842 = vmatprep.subr.bf16.mxu0 0
  %2843 = vmatpush1.bf16.msra.mxu0 %v2039
  %2844 = vmatprep.subr.bf16.mxu0 0
  %2845 = vmatpush1.bf16.msra.mxu0 %v2040
  %2846 = vmatprep.subr.bf16.mxu0 0
  %2847 = vmatpush1.bf16.msra.mxu0 %v2041
  %2848 = vmatprep.subr.bf16.mxu0 0
  %2849 = vmatpush1.bf16.msra.mxu0 %v2042
  %2850 = vmatprep.subr.bf16.mxu0 0
  %2851 = vmatpush1.bf16.msra.mxu0 %v2043
  %2852 = vmatprep.subr.bf16.mxu0 0
  %2853 = vmatpush1.bf16.msra.mxu0 %v2044
  %2854 = vmatprep.subr.bf16.mxu0 0
  %2855 = vmatpush1.bf16.msra.mxu0 %v2045
  %2856 = vmatprep.subr.bf16.mxu0 0
  %2857 = vmatpush1.bf16.msra.mxu0 %v2046
  %2858 = vmatprep.subr.bf16.mxu0 0
  %2859 = vmatpush1.bf16.msra.mxu0 %v2047
  %2860 = vmatprep.mubr.bf16.mxu0 %v76
  %2861 = vmatmul.mubr.bf16.gmra.mrb[0].mxu0 %v75
  %v2862 = vpop.f32.mrb[0].mxu0
  %v2863 = vadd.f32 %v2823, %v2862
  %v2864 = vpop.f32.mrb[0].mxu0
  %v2865 = vpop.f32.mrb[0].mxu0
  %v2866 = vpop.f32.mrb[0].mxu0
  %2867 = vdwg.mxu0
  %2868 = vmatprep.subr.bf16.mxu0 0
  %2869 = vmatpush1.bf16.msra.mxu0 %v2048
  %2870 = vmatprep.subr.bf16.mxu0 0
  %2871 = vmatpush1.bf16.msra.mxu0 %v2049
  %2872 = vmatprep.subr.bf16.mxu0 0
  %2873 = vmatpush1.bf16.msra.mxu0 %v2050
  %2874 = vmatprep.subr.bf16.mxu0 0
  %2875 = vmatpush1.bf16.msra.mxu0 %v2051
  %2876 = vmatprep.subr.bf16.mxu0 0
  %2877 = vmatpush1.bf16.msra.mxu0 %v2052
  %2878 = vmatprep.subr.bf16.mxu0 0
  %2879 = vmatpush1.bf16.msra.mxu0 %v2053
  %2880 = vmatprep.subr.bf16.mxu0 0
  %2881 = vmatpush1.bf16.msra.mxu0 %v2054
  %2882 = vmatprep.subr.bf16.mxu0 0
  %2883 = vmatpush1.bf16.msra.mxu0 %v2055
  %2884 = vmatprep.subr.bf16.mxu0 0
  %2885 = vmatpush1.bf16.msra.mxu0 %v2056
  %2886 = vmatprep.subr.bf16.mxu0 0
  %2887 = vmatpush1.bf16.msra.mxu0 %v2057
  %2888 = vmatprep.subr.bf16.mxu0 0
  %2889 = vmatpush1.bf16.msra.mxu0 %v2058
  %2890 = vmatprep.subr.bf16.mxu0 0
  %2891 = vmatpush1.bf16.msra.mxu0 %v2059
  %2892 = vmatprep.subr.bf16.mxu0 0
  %2893 = vmatpush1.bf16.msra.mxu0 %v2060
  %2894 = vmatprep.subr.bf16.mxu0 0
  %2895 = vmatpush1.bf16.msra.mxu0 %v2061
  %2896 = vmatprep.subr.bf16.mxu0 0
  %2897 = vmatpush1.bf16.msra.mxu0 %v2062
  %2898 = vmatprep.subr.bf16.mxu0 0
  %2899 = vmatpush1.bf16.msra.mxu0 %v2063
  %2900 = vmatprep.mubr.bf16.mxu0 %v78
  %2901 = vmatmul.mubr.bf16.gmra.mrb[0].mxu0 %v77
  %v2902 = vpop.f32.mrb[0].mxu0
  %v2903 = vadd.f32 %v2863, %v2902
  %v2904 = vpop.f32.mrb[0].mxu0
  %v2905 = vpop.f32.mrb[0].mxu0
  %v2906 = vpop.f32.mrb[0].mxu0
  %2907 = vdwg.mxu0
  %2908 = vmatprep.subr.bf16.mxu0 0
  %2909 = vmatpush1.bf16.msra.mxu0 %v2064
  %2910 = vmatprep.subr.bf16.mxu0 0
  %2911 = vmatpush1.bf16.msra.mxu0 %v2065
  %2912 = vmatprep.subr.bf16.mxu0 0
  %2913 = vmatpush1.bf16.msra.mxu0 %v2066
  %2914 = vmatprep.subr.bf16.mxu0 0
  %2915 = vmatpush1.bf16.msra.mxu0 %v2067
  %2916 = vmatprep.subr.bf16.mxu0 0
  %2917 = vmatpush1.bf16.msra.mxu0 %v2068
  %2918 = vmatprep.subr.bf16.mxu0 0
  %2919 = vmatpush1.bf16.msra.mxu0 %v2069
  %2920 = vmatprep.subr.bf16.mxu0 0
  %2921 = vmatpush1.bf16.msra.mxu0 %v2070
  %2922 = vmatprep.subr.bf16.mxu0 0
  %2923 = vmatpush1.bf16.msra.mxu0 %v2071
  %2924 = vmatprep.subr.bf16.mxu0 0
  %2925 = vmatpush1.bf16.msra.mxu0 %v2072
  %2926 = vmatprep.subr.bf16.mxu0 0
  %2927 = vmatpush1.bf16.msra.mxu0 %v2073
  %2928 = vmatprep.subr.bf16.mxu0 0
  %2929 = vmatpush1.bf16.msra.mxu0 %v2074
  %2930 = vmatprep.subr.bf16.mxu0 0
  %2931 = vmatpush1.bf16.msra.mxu0 %v2075
  %2932 = vmatprep.subr.bf16.mxu0 0
  %2933 = vmatpush1.bf16.msra.mxu0 %v2076
  %2934 = vmatprep.subr.bf16.mxu0 0
  %2935 = vmatpush1.bf16.msra.mxu0 %v2077
  %2936 = vmatprep.subr.bf16.mxu0 0
  %2937 = vmatpush1.bf16.msra.mxu0 %v2078
  %2938 = vmatprep.subr.bf16.mxu0 0
  %2939 = vmatpush1.bf16.msra.mxu0 %v2079
  %2940 = vmatprep.mubr.bf16.mxu0 %v80
  %2941 = vmatmul.mubr.bf16.gmra.mrb[0].mxu0 %v79
  %v2942 = vpop.f32.mrb[0].mxu0
  %v2943 = vadd.f32 %v2903, %v2942
  %v2944 = vpop.f32.mrb[0].mxu0
  %v2945 = vpop.f32.mrb[0].mxu0
  %v2946 = vpop.f32.mrb[0].mxu0
  %2947 = vdwg.mxu0
  %2948 = vmatprep.subr.bf16.mxu0 0
  %2949 = vmatpush1.bf16.msra.mxu0 %v2080
  %2950 = vmatprep.subr.bf16.mxu0 0
  %2951 = vmatpush1.bf16.msra.mxu0 %v2081
  %2952 = vmatprep.subr.bf16.mxu0 0
  %2953 = vmatpush1.bf16.msra.mxu0 %v2082
  %2954 = vmatprep.subr.bf16.mxu0 0
  %2955 = vmatpush1.bf16.msra.mxu0 %v2083
  %2956 = vmatprep.subr.bf16.mxu0 0
  %2957 = vmatpush1.bf16.msra.mxu0 %v2084
  %2958 = vmatprep.subr.bf16.mxu0 0
  %2959 = vmatpush1.bf16.msra.mxu0 %v2085
  %2960 = vmatprep.subr.bf16.mxu0 0
  %2961 = vmatpush1.bf16.msra.mxu0 %v2086
  %2962 = vmatprep.subr.bf16.mxu0 0
  %2963 = vmatpush1.bf16.msra.mxu0 %v2087
  %2964 = vmatprep.subr.bf16.mxu0 0
  %2965 = vmatpush1.bf16.msra.mxu0 %v2088
  %2966 = vmatprep.subr.bf16.mxu0 0
  %2967 = vmatpush1.bf16.msra.mxu0 %v2089
  %2968 = vmatprep.subr.bf16.mxu0 0
  %2969 = vmatpush1.bf16.msra.mxu0 %v2090
  %2970 = vmatprep.subr.bf16.mxu0 0
  %2971 = vmatpush1.bf16.msra.mxu0 %v2091
  %2972 = vmatprep.subr.bf16.mxu0 0
  %2973 = vmatpush1.bf16.msra.mxu0 %v2092
  %2974 = vmatprep.subr.bf16.mxu0 0
  %2975 = vmatpush1.bf16.msra.mxu0 %v2093
  %2976 = vmatprep.subr.bf16.mxu0 0
  %2977 = vmatpush1.bf16.msra.mxu0 %v2094
  %2978 = vmatprep.subr.bf16.mxu0 0
  %2979 = vmatpush1.bf16.msra.mxu0 %v2095
  %2980 = vmatprep.mubr.bf16.mxu0 %v82
  %2981 = vmatmul.mubr.bf16.gmra.mrb[0].mxu0 %v81
  %v2982 = vpop.f32.mrb[0].mxu0
  %v2983 = vadd.f32 %v2943, %v2982
  %v2984 = vpop.f32.mrb[0].mxu0
  %v2985 = vpop.f32.mrb[0].mxu0
  %v2986 = vpop.f32.mrb[0].mxu0
  %2987 = vdwg.mxu0
  %2988 = vmatprep.subr.bf16.mxu0 0
  %2989 = vmatpush1.bf16.msra.mxu0 %v2096
  %2990 = vmatprep.subr.bf16.mxu0 0
  %2991 = vmatpush1.bf16.msra.mxu0 %v2097
  %2992 = vmatprep.subr.bf16.mxu0 0
  %2993 = vmatpush1.bf16.msra.mxu0 %v2098
  %2994 = vmatprep.subr.bf16.mxu0 0
  %2995 = vmatpush1.bf16.msra.mxu0 %v2099
  %2996 = vmatprep.subr.bf16.mxu0 0
  %2997 = vmatpush1.bf16.msra.mxu0 %v2100
  %2998 = vmatprep.subr.bf16.mxu0 0
  %2999 = vmatpush1.bf16.msra.mxu0 %v2101
  %3000 = vmatprep.subr.bf16.mxu0 0
  %3001 = vmatpush1.bf16.msra.mxu0 %v2102
  %3002 = vmatprep.subr.bf16.mxu0 0
  %3003 = vmatpush1.bf16.msra.mxu0 %v2103
  %3004 = vmatprep.subr.bf16.mxu0 0
  %3005 = vmatpush1.bf16.msra.mxu0 %v2104
  %3006 = vmatprep.subr.bf16.mxu0 0
  %3007 = vmatpush1.bf16.msra.mxu0 %v2105
  %3008 = vmatprep.subr.bf16.mxu0 0
  %3009 = vmatpush1.bf16.msra.mxu0 %v2106
  %3010 = vmatprep.subr.bf16.mxu0 0
  %3011 = vmatpush1.bf16.msra.mxu0 %v2107
  %3012 = vmatprep.subr.bf16.mxu0 0
  %3013 = vmatpush1.bf16.msra.mxu0 %v2108
  %3014 = vmatprep.subr.bf16.mxu0 0
  %3015 = vmatpush1.bf16.msra.mxu0 %v2109
  %3016 = vmatprep.subr.bf16.mxu0 0
  %3017 = vmatpush1.bf16.msra.mxu0 %v2110
  %3018 = vmatprep.subr.bf16.mxu0 0
  %3019 = vmatpush1.bf16.msra.mxu0 %v2111
  %3020 = vmatprep.mubr.bf16.mxu0 %v84
  %3021 = vmatmul.mubr.bf16.gmra.mrb[0].mxu0 %v83
  %v3022 = vpop.f32.mrb[0].mxu0
  %v3023 = vadd.f32 %v2983, %v3022
  %v3024 = vpop.f32.mrb[0].mxu0
  %v3025 = vpop.f32.mrb[0].mxu0
  %v3026 = vpop.f32.mrb[0].mxu0
  %3027 = vdwg.mxu0
  %3028 = vmatprep.subr.bf16.mxu0 0
  %3029 = vmatpush1.bf16.msra.mxu0 %v2112
  %3030 = vmatprep.subr.bf16.mxu0 0
  %3031 = vmatpush1.bf16.msra.mxu0 %v2113
  %3032 = vmatprep.subr.bf16.mxu0 0
  %3033 = vmatpush1.bf16.msra.mxu0 %v2114
  %3034 = vmatprep.subr.bf16.mxu0 0
  %3035 = vmatpush1.bf16.msra.mxu0 %v2115
  %3036 = vmatprep.subr.bf16.mxu0 0
  %3037 = vmatpush1.bf16.msra.mxu0 %v2116
  %3038 = vmatprep.subr.bf16.mxu0 0
  %3039 = vmatpush1.bf16.msra.mxu0 %v2117
  %3040 = vmatprep.subr.bf16.mxu0 0
  %3041 = vmatpush1.bf16.msra.mxu0 %v2118
  %3042 = vmatprep.subr.bf16.mxu0 0
  %3043 = vmatpush1.bf16.msra.mxu0 %v2119
  %3044 = vmatprep.subr.bf16.mxu0 0
  %3045 = vmatpush1.bf16.msra.mxu0 %v2120
  %3046 = vmatprep.subr.bf16.mxu0 0
  %3047 = vmatpush1.bf16.msra.mxu0 %v2121
  %3048 = vmatprep.subr.bf16.mxu0 0
  %3049 = vmatpush1.bf16.msra.mxu0 %v2122
  %3050 = vmatprep.subr.bf16.mxu0 0
  %3051 = vmatpush1.bf16.msra.mxu0 %v2123
  %3052 = vmatprep.subr.bf16.mxu0 0
  %3053 = vmatpush1.bf16.msra.mxu0 %v2124
  %3054 = vmatprep.subr.bf16.mxu0 0
  %3055 = vmatpush1.bf16.msra.mxu0 %v2125
  %3056 = vmatprep.subr.bf16.mxu0 0
  %3057 = vmatpush1.bf16.msra.mxu0 %v2126
  %3058 = vmatprep.subr.bf16.mxu0 0
  %3059 = vmatpush1.bf16.msra.mxu0 %v2127
  %3060 = vmatprep.mubr.bf16.mxu0 %v86
  %3061 = vmatmul.mubr.bf16.gmra.mrb[0].mxu0 %v85
  %v3062 = vpop.f32.mrb[0].mxu0
  %v3063 = vadd.f32 %v3023, %v3062
  %v3064 = vpop.f32.mrb[0].mxu0
  %v3065 = vpop.f32.mrb[0].mxu0
  %v3066 = vpop.f32.mrb[0].mxu0
  %3067 = vdwg.mxu0
  %3068 = vmatprep.subr.bf16.mxu0 0
  %3069 = vmatpush1.bf16.msra.mxu0 %v2128
  %3070 = vmatprep.subr.bf16.mxu0 0
  %3071 = vmatpush1.bf16.msra.mxu0 %v2129
  %3072 = vmatprep.subr.bf16.mxu0 0
  %3073 = vmatpush1.bf16.msra.mxu0 %v2130
  %3074 = vmatprep.subr.bf16.mxu0 0
  %3075 = vmatpush1.bf16.msra.mxu0 %v2131
  %3076 = vmatprep.subr.bf16.mxu0 0
  %3077 = vmatpush1.bf16.msra.mxu0 %v2132
  %3078 = vmatprep.subr.bf16.mxu0 0
  %3079 = vmatpush1.bf16.msra.mxu0 %v2133
  %3080 = vmatprep.subr.bf16.mxu0 0
  %3081 = vmatpush1.bf16.msra.mxu0 %v2134
  %3082 = vmatprep.subr.bf16.mxu0 0
  %3083 = vmatpush1.bf16.msra.mxu0 %v2135
  %3084 = vmatprep.subr.bf16.mxu0 0
  %3085 = vmatpush1.bf16.msra.mxu0 %v2136
  %3086 = vmatprep.subr.bf16.mxu0 0
  %3087 = vmatpush1.bf16.msra.mxu0 %v2137
  %3088 = vmatprep.subr.bf16.mxu0 0
  %3089 = vmatpush1.bf16.msra.mxu0 %v2138
  %3090 = vmatprep.subr.bf16.mxu0 0
  %3091 = vmatpush1.bf16.msra.mxu0 %v2139
  %3092 = vmatprep.subr.bf16.mxu0 0
  %3093 = vmatpush1.bf16.msra.mxu0 %v2140
  %3094 = vmatprep.subr.bf16.mxu0 0
  %3095 = vmatpush1.bf16.msra.mxu0 %v2141
  %3096 = vmatprep.subr.bf16.mxu0 0
  %3097 = vmatpush1.bf16.msra.mxu0 %v2142
  %3098 = vmatprep.subr.bf16.mxu0 0
  %3099 = vmatpush1.bf16.msra.mxu0 %v2143
  %3100 = vmatprep.mubr.bf16.mxu0 %v88
  %3101 = vmatmul.mubr.bf16.gmra.mrb[0].mxu0 %v87
  %v3102 = vpop.f32.mrb[0].mxu0
  %v3103 = vadd.f32 %v3063, %v3102
  %v3104 = vpop.f32.mrb[0].mxu0
  %v3105 = vpop.f32.mrb[0].mxu0
  %v3106 = vpop.f32.mrb[0].mxu0
  %3107 = vdwg.mxu0
  %3108 = vmatprep.subr.bf16.mxu0 0
  %3109 = vmatpush1.bf16.msra.mxu0 %v2144
  %3110 = vmatprep.subr.bf16.mxu0 0
  %3111 = vmatpush1.bf16.msra.mxu0 %v2145
  %3112 = vmatprep.subr.bf16.mxu0 0
  %3113 = vmatpush1.bf16.msra.mxu0 %v2146
  %3114 = vmatprep.subr.bf16.mxu0 0
  %3115 = vmatpush1.bf16.msra.mxu0 %v2147
  %3116 = vmatprep.subr.bf16.mxu0 0
  %3117 = vmatpush1.bf16.msra.mxu0 %v2148
  %3118 = vmatprep.subr.bf16.mxu0 0
  %3119 = vmatpush1.bf16.msra.mxu0 %v2149
  %3120 = vmatprep.subr.bf16.mxu0 0
  %3121 = vmatpush1.bf16.msra.mxu0 %v2150
  %3122 = vmatprep.subr.bf16.mxu0 0
  %3123 = vmatpush1.bf16.msra.mxu0 %v2151
  %3124 = vmatprep.subr.bf16.mxu0 0
  %3125 = vmatpush1.bf16.msra.mxu0 %v2152
  %3126 = vmatprep.subr.bf16.mxu0 0
  %3127 = vmatpush1.bf16.msra.mxu0 %v2153
  %3128 = vmatprep.subr.bf16.mxu0 0
  %3129 = vmatpush1.bf16.msra.mxu0 %v2154
  %3130 = vmatprep.subr.bf16.mxu0 0
  %3131 = vmatpush1.bf16.msra.mxu0 %v2155
  %3132 = vmatprep.subr.bf16.mxu0 0
  %3133 = vmatpush1.bf16.msra.mxu0 %v2156
  %3134 = vmatprep.subr.bf16.mxu0 0
  %3135 = vmatpush1.bf16.msra.mxu0 %v2157
  %3136 = vmatprep.subr.bf16.mxu0 0
  %3137 = vmatpush1.bf16.msra.mxu0 %v2158
  %3138 = vmatprep.subr.bf16.mxu0 0
  %3139 = vmatpush1.bf16.msra.mxu0 %v2159
  %3140 = vmatprep.mubr.bf16.mxu0 %v90
  %3141 = vmatmul.mubr.bf16.gmra.mrb[0].mxu0 %v89
  %v3142 = vpop.f32.mrb[0].mxu0
  %v3143 = vadd.f32 %v3103, %v3142
  %v3144 = vpop.f32.mrb[0].mxu0
  %v3145 = vpop.f32.mrb[0].mxu0
  %v3146 = vpop.f32.mrb[0].mxu0
  %3147 = vdwg.mxu0
  %3148 = vmatprep.subr.bf16.mxu0 0
  %3149 = vmatpush1.bf16.msra.mxu0 %v2160
  %3150 = vmatprep.subr.bf16.mxu0 0
  %3151 = vmatpush1.bf16.msra.mxu0 %v2161
  %3152 = vmatprep.subr.bf16.mxu0 0
  %3153 = vmatpush1.bf16.msra.mxu0 %v2162
  %3154 = vmatprep.subr.bf16.mxu0 0
  %3155 = vmatpush1.bf16.msra.mxu0 %v2163
  %3156 = vmatprep.subr.bf16.mxu0 0
  %3157 = vmatpush1.bf16.msra.mxu0 %v2164
  %3158 = vmatprep.subr.bf16.mxu0 0
  %3159 = vmatpush1.bf16.msra.mxu0 %v2165
  %3160 = vmatprep.subr.bf16.mxu0 0
  %3161 = vmatpush1.bf16.msra.mxu0 %v2166
  %3162 = vmatprep.subr.bf16.mxu0 0
  %3163 = vmatpush1.bf16.msra.mxu0 %v2167
  %3164 = vmatprep.subr.bf16.mxu0 0
  %3165 = vmatpush1.bf16.msra.mxu0 %v2168
  %3166 = vmatprep.subr.bf16.mxu0 0
  %3167 = vmatpush1.bf16.msra.mxu0 %v2169
  %3168 = vmatprep.subr.bf16.mxu0 0
  %3169 = vmatpush1.bf16.msra.mxu0 %v2170
  %3170 = vmatprep.subr.bf16.mxu0 0
  %3171 = vmatpush1.bf16.msra.mxu0 %v2171
  %3172 = vmatprep.subr.bf16.mxu0 0
  %3173 = vmatpush1.bf16.msra.mxu0 %v2172
  %3174 = vmatprep.subr.bf16.mxu0 0
  %3175 = vmatpush1.bf16.msra.mxu0 %v2173
  %3176 = vmatprep.subr.bf16.mxu0 0
  %3177 = vmatpush1.bf16.msra.mxu0 %v2174
  %3178 = vmatprep.subr.bf16.mxu0 0
  %3179 = vmatpush1.bf16.msra.mxu0 %v2175
  %3180 = vmatprep.mubr.bf16.mxu0 %v92
  %3181 = vmatmul.mubr.bf16.gmra.mrb[0].mxu0 %v91
  %v3182 = vpop.f32.mrb[0].mxu0
  %v3183 = vadd.f32 %v3143, %v3182
  %v3184 = vpop.f32.mrb[0].mxu0
  %v3185 = vpop.f32.mrb[0].mxu0
  %v3186 = vpop.f32.mrb[0].mxu0
  %3187 = vdwg.mxu0
  %3188 = vmatprep.subr.bf16.mxu0 0
  %3189 = vmatpush1.bf16.msra.mxu0 %v2176
  %3190 = vmatprep.subr.bf16.mxu0 0
  %3191 = vmatpush1.bf16.msra.mxu0 %v2177
  %3192 = vmatprep.subr.bf16.mxu0 0
  %3193 = vmatpush1.bf16.msra.mxu0 %v2178
  %3194 = vmatprep.subr.bf16.mxu0 0
  %3195 = vmatpush1.bf16.msra.mxu0 %v2179
  %3196 = vmatprep.subr.bf16.mxu0 0
  %3197 = vmatpush1.bf16.msra.mxu0 %v2180
  %3198 = vmatprep.subr.bf16.mxu0 0
  %3199 = vmatpush1.bf16.msra.mxu0 %v2181
  %3200 = vmatprep.subr.bf16.mxu0 0
  %3201 = vmatpush1.bf16.msra.mxu0 %v2182
  %3202 = vmatprep.subr.bf16.mxu0 0
  %3203 = vmatpush1.bf16.msra.mxu0 %v2183
  %3204 = vmatprep.subr.bf16.mxu0 0
  %3205 = vmatpush1.bf16.msra.mxu0 %v2184
  %3206 = vmatprep.subr.bf16.mxu0 0
  %3207 = vmatpush1.bf16.msra.mxu0 %v2185
  %3208 = vmatprep.subr.bf16.mxu0 0
  %3209 = vmatpush1.bf16.msra.mxu0 %v2186
  %3210 = vmatprep.subr.bf16.mxu0 0
  %3211 = vmatpush1.bf16.msra.mxu0 %v2187
  %3212 = vmatprep.subr.bf16.mxu0 0
  %3213 = vmatpush1.bf16.msra.mxu0 %v2188
  %3214 = vmatprep.subr.bf16.mxu0 0
  %3215 = vmatpush1.bf16.msra.mxu0 %v2189
  %3216 = vmatprep.subr.bf16.mxu0 0
  %3217 = vmatpush1.bf16.msra.mxu0 %v2190
  %3218 = vmatprep.subr.bf16.mxu0 0
  %3219 = vmatpush1.bf16.msra.mxu0 %v2191
  %3220 = vmatprep.mubr.bf16.mxu0 %v94
  %3221 = vmatmul.mubr.bf16.gmra.mrb[0].mxu0 %v93
  %v3222 = vpop.f32.mrb[0].mxu0
  %v3223 = vadd.f32 %v3183, %v3222
  %v3224 = vpop.f32.mrb[0].mxu0
  %v3225 = vpop.f32.mrb[0].mxu0
  %v3226 = vpop.f32.mrb[0].mxu0
  %3227 = vdwg.mxu0
  %3228 = vmatprep.subr.bf16.mxu0 0
  %3229 = vmatpush1.bf16.msra.mxu0 %v2192
  %3230 = vmatprep.subr.bf16.mxu0 0
  %3231 = vmatpush1.bf16.msra.mxu0 %v2193
  %3232 = vmatprep.subr.bf16.mxu0 0
  %3233 = vmatpush1.bf16.msra.mxu0 %v2194
  %3234 = vmatprep.subr.bf16.mxu0 0
  %3235 = vmatpush1.bf16.msra.mxu0 %v2195
  %3236 = vmatprep.subr.bf16.mxu0 0
  %3237 = vmatpush1.bf16.msra.mxu0 %v2196
  %3238 = vmatprep.subr.bf16.mxu0 0
  %3239 = vmatpush1.bf16.msra.mxu0 %v2197
  %3240 = vmatprep.subr.bf16.mxu0 0
  %3241 = vmatpush1.bf16.msra.mxu0 %v2198
  %3242 = vmatprep.subr.bf16.mxu0 0
  %3243 = vmatpush1.bf16.msra.mxu0 %v2199
  %3244 = vmatprep.subr.bf16.mxu0 0
  %3245 = vmatpush1.bf16.msra.mxu0 %v2200
  %3246 = vmatprep.subr.bf16.mxu0 0
  %3247 = vmatpush1.bf16.msra.mxu0 %v2201
  %3248 = vmatprep.subr.bf16.mxu0 0
  %3249 = vmatpush1.bf16.msra.mxu0 %v2202
  %3250 = vmatprep.subr.bf16.mxu0 0
  %3251 = vmatpush1.bf16.msra.mxu0 %v2203
  %3252 = vmatprep.subr.bf16.mxu0 0
  %3253 = vmatpush1.bf16.msra.mxu0 0
  %3254 = vmatprep.subr.bf16.mxu0 0
  %3255 = vmatpush1.bf16.msra.mxu0 0
  %3256 = vmatprep.subr.bf16.mxu0 0
  %3257 = vmatpush1.bf16.msra.mxu0 0
  %3258 = vmatprep.subr.bf16.mxu0 0
  %3259 = vmatpush1.bf16.msra.mxu0 0
  %3260 = vmatprep.mubr.bf16.mxu0 %v2506
  %3261 = vmatmul.mubr.bf16.gmra.mrb[0].mxu0 %v95
  %v3262 = vpop.f32.mrb[0].mxu0
  %v3263 = vadd.f32 %v3223, %v3262
  %v3264 = vpop.f32.mrb[0].mxu0
  %v3265 = vpop.f32.mrb[0].mxu0
  %v3266 = vpop.f32.mrb[0].mxu0
  %3267 = vdwg.mxu0
  %v3268 = vmax.f32 %v3263, 0.0
  %v3269 = vld [vmem:[%s3] sm:$0xff]
  %v3270 = vld [vmem:[%s3 + $0x8] sm:$0xff]
  %v3271 = vld [vmem:[%s3 + $0x10] sm:$0xff]
  %v3272 = vld [vmem:[%s3 + $0x18] sm:$0xff]
  %v3273 = vld [vmem:[%s3 + $0x20] sm:$0xff]
  %v3274 = vld [vmem:[%s3 + $0x28] sm:$0xff]
  %v3275 = vld [vmem:[%s3 + $0x30] sm:$0xff]
  %v3276 = vld [vmem:[%s3 + $0x38] sm:$0xff]
  %v3277 = vld [vmem:[%s3 + $0x40] sm:$0xff]
  %v3278 = vld [vmem:[%s3 + $0x48] sm:$0xff]
  %v3279 = vld [vmem:[%s3 + $0x50] sm:$0xff]
  %v3280 = vld [vmem:[%s3 + $0x58] sm:$0xff]
  %v3281 = vld [vmem:[%s3 + $0x60] sm:$0xf]
  %v3282 = vld [vmem:[%s4] sm:$0x1]
  %v3284 = vlaneseq
  %v3285 = vshrl.u32 %v3284, 7
  %v3286 = vsub.s32 0, %v3285
  %v3287 = vrot.slane %v3282, %v3286
  %vm3289 = vcmask 818176
  %v3291 = vsel %vm3289, %v3268, 0
  %vm3293 = vcmask 1043456
  %v3295 = vsel %vm3293, %v3281, 0
  %3297 = vmatprep.subr.mxu0 0.0
  %3298 = vmatpush1.msra.mxu0 %v3269
  %3299 = vmatprep.subr.mxu0 0.0
  %3300 = vmatpush1.msra.mxu0 %v3270
  %3301 = vmatprep.subr.mxu0 0.0
  %3302 = vmatpush1.msra.mxu0 %v3271
  %3303 = vmatprep.subr.mxu0 0.0
  %3304 = vmatpush1.msra.mxu0 %v3272
  %3305 = vmatprep.subr.mxu0 0.0
  %3306 = vmatpush1.msra.mxu0 %v3273
  %3307 = vmatprep.subr.mxu0 0.0
  %3308 = vmatpush1.msra.mxu0 %v3274
  %3309 = vmatprep.subr.mxu0 0.0
  %3310 = vmatpush1.msra.mxu0 %v3275
  %3311 = vmatprep.subr.mxu0 0.0
  %3312 = vmatpush1.msra.mxu0 %v3276
  %3313 = vmatprep.subr.mxu0 0.0
  %3314 = vmatpush1.msra.mxu0 %v3277
  %3315 = vmatprep.subr.mxu0 0.0
  %3316 = vmatpush1.msra.mxu0 %v3278
  %3317 = vmatprep.subr.mxu0 0.0
  %3318 = vmatpush1.msra.mxu0 %v3279
  %3319 = vmatprep.subr.mxu0 0.0
  %3320 = vmatpush1.msra.mxu0 %v3280
  %3321 = vmatprep.subr.mxu0 0.0
  %3322 = vmatpush1.msra.mxu0 %v3295
  %3323 = vmatprep.subr.mxu0 0.0
  %3324 = vmatpush1.msra.mxu0 0.0
  %3325 = vmatprep.subr.mxu0 0.0
  %3326 = vmatpush1.msra.mxu0 0.0
  %3327 = vmatprep.subr.mxu0 0.0
  %3328 = vmatpush1.msra.mxu0 0.0
  %3329 = vmatprep.subr.mxu0 0.0
  %3330 = vmatpush1.msra.mxu0 0.0
  %3331 = vmatprep.subr.mxu0 0.0
  %3332 = vmatpush1.msra.mxu0 0.0
  %3333 = vmatprep.subr.mxu0 0.0
  %3334 = vmatpush1.msra.mxu0 0.0
  %3335 = vmatprep.subr.mxu0 0.0
  %3336 = vmatpush1.msra.mxu0 0.0
  %3337 = vmatprep.subr.mxu0 0.0
  %3338 = vmatpush1.msra.mxu0 0.0
  %3339 = vmatprep.subr.mxu0 0.0
  %3340 = vmatpush1.msra.mxu0 0.0
  %3341 = vmatprep.subr.mxu0 0.0
  %3342 = vmatpush1.msra.mxu0 0.0
  %3343 = vmatprep.subr.mxu0 0.0
  %3344 = vmatpush1.msra.mxu0 0.0
  %3345 = vmatprep.subr.mxu0 0.0
  %3346 = vmatpush1.msra.mxu0 0.0
  %3347 = vmatprep.subr.mxu0 0.0
  %3348 = vmatpush1.msra.mxu0 0.0
  %3349 = vmatprep.subr.mxu0 0.0
  %3350 = vmatpush1.msra.mxu0 0.0
  %3351 = vmatprep.subr.mxu0 0.0
  %3352 = vmatpush1.msra.mxu0 0.0
  %3353 = vmatprep.subr.mxu0 0.0
  %3354 = vmatpush1.msra.mxu0 0.0
  %3355 = vmatprep.subr.mxu0 0.0
  %3356 = vmatpush1.msra.mxu0 0.0
  %3357 = vmatprep.subr.mxu0 0.0
  %3358 = vmatpush1.msra.mxu0 0.0
  %3359 = vmatprep.subr.mxu0 0.0
  %3360 = vmatpush1.msra.mxu0 0.0
  %3361 = vmatprep.mubr.f32.mxu0 0.0
  %3362 = vmatmul.mubr.f32.gmra.mrb[0].mxu0 %v3291
  %v3363 = vpop.f32.mrb[0].mxu0
  %v3364 = vadd.f32 %v3287, %v3363
  %v3365 = vpop.f32.mrb[0].mxu0
  %3366 = vdwg.mxu0
  %3367 = vst [vmem:[%s5] sm:$0xff] %v3364
  // Predicated region
  $region22: #{osu_model_forward.1} parent=0 // pred_check
    _
  $region23: #{osu_model_forward.1} parent=0 // pred_check_branch
    %3369 = sbr.rel (0) target = $region25
  $region24: #{osu_model_forward.1} parent=0 // pred_region
    _
  $region25: #{osu_model_forward.1} parent=0 // pred_fallthru
    _
  // Predicated region
  $region26: #{osu_model_forward.1} parent=0 // pred_check
    _
  $region27: #{osu_model_forward.1} parent=0 // pred_check_branch
    %3371 = sbr.rel (0) target = $region29
  $region28: #{osu_model_forward.1} parent=0 // pred_region
    _
  $region29: #{osu_model_forward.1} parent=0 // pred_fallthru
    _

</llo_original>
